<compile_context>
chip_gen: v7x
topology: tpu7x:2x2x1
jax: 0.10.0
libtpu: 0.0.40
codegen_flags: <defaults>
</compile_context>

<pallas_src>
import jax
import jax.numpy as jnp
from jax.experimental import pallas as pl
from jax.experimental.pallas import tpu as pltpu

_LANES = 128


def _round_up(x, m):
    return (x + m - 1) // m * m


# -----------------------------------------------------------------------------
# Fused kernel: one batch element per grid step.
# -----------------------------------------------------------------------------
def _basic_block_kernel(xpad_ref, w1_ref, w2_ref, bias_ref, out_ref, mid_ref):
    """Refs:
      xpad_ref : (1, Hp, Wp, Cp) bf16  spatially padded, channel-padded input
      w1_ref   : (3, 3*Cp, Cp)   bf16  conv1 weights * bn1 scale, [ky, kx*Cp+ci, co]
      w2_ref   : (3, 3*Cp, Cp)   bf16  conv2 weights * bn2 scale
      bias_ref : (2, Cp)         f32   rows: bias1, bias2 (folded BN biases)
      out_ref  : (1, H, W, Cp)   f32   lane-dense output
      mid_ref  : (Hp, Wp, Cp)    bf16  VMEM scratch: padded intermediate activation
    """
    _, Hp, Wp, Cp = xpad_ref.shape
    H, W = Hp - 2, Wp - 2
    K = 3 * Cp

    def shift_cat(xp):
        # (Hp, Wp, Cp) bf16 -> (Hp, W, 3*Cp) bf16: three kx-shifted windows on lanes.
        return jnp.concatenate(
            [xp[:, 0:W, :], xp[:, 1:W + 1, :], xp[:, 2:W + 2, :]], axis=-1)

    def conv3x3(xcat_bf16, w_ref):
        # 3 fat MXU matmuls (K = 3*Cp); ky slices are free leading-dim slices and
        # the reshape is layout-preserving (W % 8 == 0, Cp % 128 == 0).
        acc = jnp.dot(xcat_bf16[0:H].reshape(H * W, K), w_ref[0],
                      preferred_element_type=jnp.float32)
        for ky in (1, 2):
            acc = acc + jnp.dot(xcat_bf16[ky:ky + H].reshape(H * W, K), w_ref[ky],
                                preferred_element_type=jnp.float32)
        return acc

    # Zero only the 1-pixel halo of the scratch (interior is fully overwritten
    # below).  Done every step so it is correct no matter how the parallel batch
    # axis is split across TensorCores.
    zrow = jnp.zeros((1, Wp, Cp), mid_ref.dtype)
    zcol = jnp.zeros((Hp, 1, Cp), mid_ref.dtype)
    mid_ref[pl.ds(0, 1), :, :] = zrow
    mid_ref[pl.ds(Hp - 1, 1), :, :] = zrow
    mid_ref[:, pl.ds(0, 1), :] = zcol
    mid_ref[:, pl.ds(Wp - 1, 1), :] = zcol

    xcat = shift_cat(xpad_ref[0])                                  # (Hp, W, 3Cp) bf16
    # Residual = interior of x (kx=1 window, rows 1..H) — bf16 slice of xcat.
    residual = xcat[1:H + 1, :, Cp:2 * Cp].reshape(H * W, Cp)

    # ---- conv1 (* bn1 scale folded into w1) + bn1 bias + relu ---------------
    acc1 = conv3x3(xcat, w1_ref)                                   # (H*W, Cp) f32
    out1 = jnp.maximum(acc1 + bias_ref[0:1, :], 0.0)
    mid_ref[pl.ds(1, H), pl.ds(1, W), :] = out1.reshape(H, W, Cp).astype(mid_ref.dtype)

    # ---- conv2 (* bn2 scale folded into w2) + bn2 bias + residual + relu ----
    acc2 = conv3x3(shift_cat(mid_ref[...]), w2_ref)
    out = jnp.maximum(acc2 + bias_ref[1:2, :] + residual.astype(jnp.float32), 0.0)
    out_ref[0] = out.reshape(H, W, Cp).astype(out_ref.dtype)


# -----------------------------------------------------------------------------
# Wrapper: parameter packing + pallas_call.
# -----------------------------------------------------------------------------
def _fold_bn(gamma, beta, mean, var, eps=1e-5):
    scale = gamma / jnp.sqrt(var + eps)
    bias = beta - mean * scale
    return scale, bias


def _pack_conv_weights(w, scale, cp):
    # (3, 3, Cin, Cout) * scale[co] -> (3, 3*cp, cp) bf16, zero-padded channels,
    # layout [ky, kx*cp + ci, co] matching the lane-stacked patch matrix.
    kh, kw, cin, cout = w.shape
    wf = w.astype(jnp.float32) * scale.reshape(1, 1, 1, cout)     # fold BN scale (f32)
    wp = jnp.zeros((kh, kw, cp, cp), jnp.float32).at[:, :, :cin, :cout].set(wf)
    return wp.reshape(kh, kw * cp, cp).astype(jnp.bfloat16)


def basic_block_forward(x_nchw, params):
    """BasicBlock forward (stride=1, downsample=None), eval-mode BatchNorm."""
    N, C, H, W = x_nchw.shape
    cout1 = params["w1"].shape[-1]
    cout2 = params["w2"].shape[-1]
    assert cout2 == C, "residual path (downsample=None) requires inplanes == planes"
    assert W % 8 == 0, "W must be a multiple of 8 (layout-preserving reshape)"
    # TODO(synk): pad W to a multiple of 8 for arbitrary widths instead of asserting.
    cp = _round_up(max(C, cout1, cout2), _LANES)
    Hp, Wp = H + 2, W + 2

    # NCHW -> NHWC, 1-pixel spatial halo, channel pad to 128 lanes, bf16 for HBM/MXU.
    x_nhwc = jnp.transpose(x_nchw, (0, 2, 3, 1))
    xpad = jnp.pad(x_nhwc, ((0, 0), (1, 1), (1, 1), (0, cp - C))).astype(jnp.bfloat16)

    s1, b1 = _fold_bn(*params["bn1"])
    s2, b2 = _fold_bn(*params["bn2"])
    w1 = _pack_conv_weights(params["w1"], s1, cp)
    w2 = _pack_conv_weights(params["w2"], s2, cp)
    bias = jnp.zeros((2, cp), jnp.float32)
    bias = bias.at[0, :cout1].set(b1).at[1, :cout2].set(b2)

    # Padded (MXU-actual) work, so the scheduler hint isn't off by ~Cp/C.
    flops = int(2 * N * H * W * 9 * cp * cp * 2)
    bytes_accessed = int(xpad.size * 2 + w1.size * 2 + w2.size * 2
                         + bias.size * 4 + N * H * W * cp * 4)

    # VMEM working set (double-buffered IO + scratch + main temporaries) + headroom.
    working = (2 * (Hp * Wp * cp * 2            # input block (bf16)
                    + 2 * 3 * 3 * cp * cp * 2   # w1 + w2 (bf16)
                    + 2 * cp * 4                # bias
                    + H * W * cp * 4)           # output block (f32)
               + Hp * Wp * cp * 2               # mid scratch (bf16)
               + 2 * Hp * W * 3 * cp * 2        # xcat temporaries (bf16)
               + 4 * H * W * cp * 4)            # acc / epilogue temporaries (f32)
    vmem_limit = int(min(max(2 * working, 32 << 20), 100 << 20))

    out_pad = pl.pallas_call(
        _basic_block_kernel,
        out_shape=jax.ShapeDtypeStruct((N, H, W, cp), jnp.float32),
        grid_spec=pltpu.PrefetchScalarGridSpec(
            num_scalar_prefetch=0,
            grid=(N,),
            in_specs=[
                pl.BlockSpec((1, Hp, Wp, cp), lambda n: (n, 0, 0, 0)),
                pl.BlockSpec((3, 3 * cp, cp), lambda n: (0, 0, 0)),
                pl.BlockSpec((3, 3 * cp, cp), lambda n: (0, 0, 0)),
                pl.BlockSpec((2, cp), lambda n: (0, 0)),
            ],
            out_specs=pl.BlockSpec((1, H, W, cp), lambda n: (n, 0, 0, 0)),
            scratch_shapes=[pltpu.VMEM((Hp, Wp, cp), jnp.bfloat16)],
        ),
        compiler_params=pltpu.CompilerParams(
            dimension_semantics=("parallel",),
            vmem_limit_bytes=vmem_limit),
        cost_estimate=pl.CostEstimate(
            flops=flops, transcendentals=0, bytes_accessed=bytes_accessed),
    )(xpad, w1, w2, bias)

    out = out_pad[..., :cout2]               # drop channel padding
    return jnp.transpose(out, (0, 3, 1, 2))  # NHWC -> NCHW
    # TODO(synk): stride>1 / downsample path not implemented (example config uses
    # stride=1, downsample=None); for large images on v7x add a halo'd row-tile
    # grid axis (and a bf16 output for v5e HBM-bound cases).


# -----------------------------------------------------------------------------
# Pure-JAX references for correctness checks.
# -----------------------------------------------------------------------------
def _reference(x_nchw, params, matmul_dtype=jnp.float32):
    def conv(x, w):  # x NCHW, w (3,3,Cin,Cout)
        w_oihw = jnp.transpose(w, (3, 2, 0, 1)).astype(matmul_dtype)
        return jax.lax.conv_general_dilated(
            x.astype(matmul_dtype), w_oihw, window_strides=(1, 1),
            padding=((1, 1), (1, 1)),
            dimension_numbers=("NCHW", "OIHW", "NCHW"),
            preferred_element_type=jnp.float32)

    def bn(x, gamma, beta, mean, var, eps=1e-5):
        sc = gamma / jnp.sqrt(var + eps)
        bi = beta - mean * sc
        return x * sc.reshape(1, -1, 1, 1) + bi.reshape(1, -1, 1, 1)

    out = jax.nn.relu(bn(conv(x_nchw, params["w1"]), *params["bn1"]))
    out = bn(conv(out, params["w2"]), *params["bn2"])
    out = out + x_nchw.astype(matmul_dtype).astype(jnp.float32)
    return jax.nn.relu(out)


if __name__ == "__main__":
    # batch=2, inplanes=planes=4, spatial 16x16 (stride=1 -> no downsample).
    N, C, H, W = 2, 4, 16, 16
    planes = 4

    key = jax.random.PRNGKey(0)
    k_x, k_w1, k_w2, k_m1, k_m2 = jax.random.split(key, 5)

    x = jax.random.normal(k_x, (N, C, H, W), jnp.float32)

    params = {
        # conv weights stored as (kh, kw, Cin, Cout)
        "w1": 0.1 * jax.random.normal(k_w1, (3, 3, C, planes), jnp.float32),
        "w2": 0.1 * jax.random.normal(k_w2, (3, 3, planes, planes), jnp.float32),
        # bn params: (gamma, beta, running_mean, running_var)
        "bn1": (
            1.0 + 0.1 * jnp.arange(planes, dtype=jnp.float32),
            0.05 * jnp.arange(planes, dtype=jnp.float32),
            0.1 * jax.random.normal(k_m1, (planes,), jnp.float32),
            1.0 + 0.2 * jnp.arange(planes, dtype=jnp.float32),
        ),
        "bn2": (
            0.9 + 0.05 * jnp.arange(planes, dtype=jnp.float32),
            -0.02 * jnp.arange(planes, dtype=jnp.float32),
            0.1 * jax.random.normal(k_m2, (planes,), jnp.float32),
            1.0 + 0.1 * jnp.arange(planes, dtype=jnp.float32),
        ),
    }

    out = jax.block_until_ready(basic_block_forward(x, params))
    assert out.shape == (N, planes, H, W)

    # Tight-ish check: reference with bf16 matmul inputs.  Kernel additionally folds
    # the BN scale into bf16 weights, so allow a slightly larger tolerance here.
    ref_bf16 = jax.block_until_ready(_reference(x, params, matmul_dtype=jnp.bfloat16))
    err_bf16 = float(jnp.max(jnp.abs(out - ref_bf16)))
    assert jnp.allclose(out, ref_bf16, atol=2e-2, rtol=2e-2), err_bf16

    # Loose check: full-f32 PyTorch-equivalent reference.
    ref_f32 = jax.block_until_ready(_reference(x, params))
    err_f32 = float(jnp.max(jnp.abs(out - ref_f32)))
    assert jnp.allclose(out, ref_f32, atol=5e-2, rtol=5e-2), err_f32

    print("KERNEL_OK")
</pallas_src>

<mosaic_0001>
module attributes {stable_mosaic.version = 11 : i64} {
  func.func @_basic_block_kernel(%arg0: i32, %arg1: memref<1x18x18x128xbf16, #tpu.memory_space<vmem>>, %arg2: memref<3x384x128xbf16, #tpu.memory_space<vmem>>, %arg3: memref<3x384x128xbf16, #tpu.memory_space<vmem>>, %arg4: memref<2x128xf32, #tpu.memory_space<vmem>>, %arg5: memref<1x16x16x128xf32, #tpu.memory_space<vmem>>, %arg6: memref<18x18x128xbf16, #tpu.memory_space<vmem>>) attributes {dimension_semantics = [#tpu.dimension_semantics<parallel>], iteration_bounds = array<i64: 2>, scalar_prefetch = 0 : i64, scratch_operands = 1 : i64, tpu.core_type = #tpu.core_type<tc>, window_params = [{transform_indices = @transform_0, window_bounds = array<i64: 1, 18, 18, 128>}, {pipeline_mode = #tpu.pipeline_mode<synchronous>, transform_indices = @transform_1, window_bounds = array<i64: 3, 384, 128>}, {pipeline_mode = #tpu.pipeline_mode<synchronous>, transform_indices = @transform_2, window_bounds = array<i64: 3, 384, 128>}, {pipeline_mode = #tpu.pipeline_mode<synchronous>, transform_indices = @transform_3, window_bounds = array<i64: 2, 128>}, {transform_indices = @transform_4, window_bounds = array<i64: 1, 16, 16, 128>}]} {
    %cst = arith.constant 0.000000e+00 : bf16
    %0 = vector.broadcast %cst : bf16 to vector<1x18x128xbf16>
    %cst_0 = arith.constant 0.000000e+00 : bf16
    %1 = vector.broadcast %cst_0 : bf16 to vector<18x1x128xbf16>
    %c0 = arith.constant 0 : index
    %c0_1 = arith.constant 0 : index
    %c0_2 = arith.constant 0 : index
    %2 = vector.load %arg6[%c0, %c0_1, %c0_2] : memref<18x18x128xbf16, #tpu.memory_space<vmem>>, vector<1x18x128xbf16>
    tpu.vector_store %arg6[%c0, %c0_1, %c0_2], %0 {strides = array<i32>} : memref<18x18x128xbf16, #tpu.memory_space<vmem>>, vector<1x18x128xbf16>,
    %c17 = arith.constant 17 : index
    %c0_3 = arith.constant 0 : index
    %c0_4 = arith.constant 0 : index
    %3 = vector.load %arg6[%c17, %c0_3, %c0_4] : memref<18x18x128xbf16, #tpu.memory_space<vmem>>, vector<1x18x128xbf16>
    tpu.vector_store %arg6[%c17, %c0_3, %c0_4], %0 {strides = array<i32>} : memref<18x18x128xbf16, #tpu.memory_space<vmem>>, vector<1x18x128xbf16>,
    %c0_5 = arith.constant 0 : index
    %c0_6 = arith.constant 0 : index
    %c0_7 = arith.constant 0 : index
    %4 = vector.load %arg6[%c0_5, %c0_6, %c0_7] : memref<18x18x128xbf16, #tpu.memory_space<vmem>>, vector<18x1x128xbf16>
    tpu.vector_store %arg6[%c0_5, %c0_6, %c0_7], %1 {strides = array<i32>} : memref<18x18x128xbf16, #tpu.memory_space<vmem>>, vector<18x1x128xbf16>,
    %c0_8 = arith.constant 0 : index
    %c17_9 = arith.constant 17 : index
    %c0_10 = arith.constant 0 : index
    %5 = vector.load %arg6[%c0_8, %c17_9, %c0_10] : memref<18x18x128xbf16, #tpu.memory_space<vmem>>, vector<18x1x128xbf16>
    tpu.vector_store %arg6[%c0_8, %c17_9, %c0_10], %1 {strides = array<i32>} : memref<18x18x128xbf16, #tpu.memory_space<vmem>>, vector<18x1x128xbf16>,
    %c0_11 = arith.constant 0 : index
    %c0_12 = arith.constant 0 : index
    %c0_13 = arith.constant 0 : index
    %c0_14 = arith.constant 0 : index
    %6 = vector.load %arg1[%c0_11, %c0_12, %c0_13, %c0_14] : memref<1x18x18x128xbf16, #tpu.memory_space<vmem>>, vector<1x18x18x128xbf16>
    %7 = vector.shape_cast %6 : vector<1x18x18x128xbf16> to vector<18x18x128xbf16>
    %8 = vector.extract_strided_slice %7 {offsets = [0, 0, 0], sizes = [18, 16, 128], strides = [1, 1, 1]} : vector<18x18x128xbf16> to vector<18x16x128xbf16>
    %9 = vector.extract_strided_slice %7 {offsets = [0, 1, 0], sizes = [18, 16, 128], strides = [1, 1, 1]} : vector<18x18x128xbf16> to vector<18x16x128xbf16>
    %10 = vector.extract_strided_slice %7 {offsets = [0, 2, 0], sizes = [18, 16, 128], strides = [1, 1, 1]} : vector<18x18x128xbf16> to vector<18x16x128xbf16>
    %11 = tpu.concatenate %8, %9, %10 in 2 : vector<18x16x128xbf16>, vector<18x16x128xbf16>, vector<18x16x128xbf16> -> vector<18x16x384xbf16>
    %12 = vector.extract_strided_slice %11 {offsets = [1, 0, 128], sizes = [16, 16, 128], strides = [1, 1, 1]} : vector<18x16x384xbf16> to vector<16x16x128xbf16>
    %13 = vector.shape_cast %12 : vector<16x16x128xbf16> to vector<256x128xbf16>
    %14 = vector.extract_strided_slice %11 {offsets = [0, 0, 0], sizes = [16, 16, 384], strides = [1, 1, 1]} : vector<18x16x384xbf16> to vector<16x16x384xbf16>
    %15 = vector.shape_cast %14 : vector<16x16x384xbf16> to vector<256x384xbf16>
    %c0_15 = arith.constant 0 : index
    %c0_16 = arith.constant 0 : index
    %c0_17 = arith.constant 0 : index
    %16 = vector.load %arg2[%c0_15, %c0_16, %c0_17] : memref<3x384x128xbf16, #tpu.memory_space<vmem>>, vector<1x384x128xbf16>
    %17 = vector.shape_cast %16 : vector<1x384x128xbf16> to vector<384x128xbf16>
    %cst_18 = arith.constant dense<0.000000e+00> : vector<256x128xf32>
    %18 = tpu.matmul %15, %17, %cst_18 {dimension_numbers = #tpu.dot_dimension_numbers<[1], [0], [0], [1], [0, 0, 1, 1], [], []>} : vector<256x384xbf16>, vector<384x128xbf16>, vector<256x128xf32> -> vector<256x128xf32>
    %19 = vector.extract_strided_slice %11 {offsets = [1, 0, 0], sizes = [16, 16, 384], strides = [1, 1, 1]} : vector<18x16x384xbf16> to vector<16x16x384xbf16>
    %20 = vector.shape_cast %19 : vector<16x16x384xbf16> to vector<256x384xbf16>
    %c1 = arith.constant 1 : index
    %c0_19 = arith.constant 0 : index
    %c0_20 = arith.constant 0 : index
    %21 = vector.load %arg2[%c1, %c0_19, %c0_20] : memref<3x384x128xbf16, #tpu.memory_space<vmem>>, vector<1x384x128xbf16>
    %22 = vector.shape_cast %21 : vector<1x384x128xbf16> to vector<384x128xbf16>
    %cst_21 = arith.constant dense<0.000000e+00> : vector<256x128xf32>
    %23 = tpu.matmul %20, %22, %cst_21 {dimension_numbers = #tpu.dot_dimension_numbers<[1], [0], [0], [1], [0, 0, 1, 1], [], []>} : vector<256x384xbf16>, vector<384x128xbf16>, vector<256x128xf32> -> vector<256x128xf32>
    %24 = arith.addf %18, %23 : vector<256x128xf32>
    %25 = vector.extract_strided_slice %11 {offsets = [2, 0, 0], sizes = [16, 16, 384], strides = [1, 1, 1]} : vector<18x16x384xbf16> to vector<16x16x384xbf16>
    %26 = vector.shape_cast %25 : vector<16x16x384xbf16> to vector<256x384xbf16>
    %c2 = arith.constant 2 : index
    %c0_22 = arith.constant 0 : index
    %c0_23 = arith.constant 0 : index
    %27 = vector.load %arg2[%c2, %c0_22, %c0_23] : memref<3x384x128xbf16, #tpu.memory_space<vmem>>, vector<1x384x128xbf16>
    %28 = vector.shape_cast %27 : vector<1x384x128xbf16> to vector<384x128xbf16>
    %cst_24 = arith.constant dense<0.000000e+00> : vector<256x128xf32>
    %29 = tpu.matmul %26, %28, %cst_24 {dimension_numbers = #tpu.dot_dimension_numbers<[1], [0], [0], [1], [0, 0, 1, 1], [], []>} : vector<256x384xbf16>, vector<384x128xbf16>, vector<256x128xf32> -> vector<256x128xf32>
    %30 = arith.addf %24, %29 : vector<256x128xf32>
    %c0_25 = arith.constant 0 : index
    %c0_26 = arith.constant 0 : index
    %31 = vector.load %arg4[%c0_25, %c0_26] : memref<2x128xf32, #tpu.memory_space<vmem>>, vector<1x128xf32>
    %32 = vector.broadcast %31 : vector<1x128xf32> to vector<256x128xf32>
    %33 = arith.addf %30, %32 : vector<256x128xf32>
    %cst_27 = arith.constant 0.000000e+00 : f32
    %34 = vector.broadcast %cst_27 : f32 to vector<256x128xf32>
    %35 = arith.maximumf %33, %34 : vector<256x128xf32>
    %36 = vector.shape_cast %35 : vector<256x128xf32> to vector<16x16x128xf32>
    %37 = arith.truncf %36 : vector<16x16x128xf32> to vector<16x16x128xbf16>
    %c1_28 = arith.constant 1 : index
    %c1_29 = arith.constant 1 : index
    %c0_30 = arith.constant 0 : index
    %38 = vector.load %arg6[%c1_28, %c1_29, %c0_30] : memref<18x18x128xbf16, #tpu.memory_space<vmem>>, vector<16x16x128xbf16>
    tpu.vector_store %arg6[%c1_28, %c1_29, %c0_30], %37 {strides = array<i32>} : memref<18x18x128xbf16, #tpu.memory_space<vmem>>, vector<16x16x128xbf16>,
    %c0_31 = arith.constant 0 : index
    %c0_32 = arith.constant 0 : index
    %c0_33 = arith.constant 0 : index
    %39 = vector.load %arg6[%c0_31, %c0_32, %c0_33] : memref<18x18x128xbf16, #tpu.memory_space<vmem>>, vector<18x18x128xbf16>
    %40 = vector.extract_strided_slice %39 {offsets = [0, 0, 0], sizes = [18, 16, 128], strides = [1, 1, 1]} : vector<18x18x128xbf16> to vector<18x16x128xbf16>
    %41 = vector.extract_strided_slice %39 {offsets = [0, 1, 0], sizes = [18, 16, 128], strides = [1, 1, 1]} : vector<18x18x128xbf16> to vector<18x16x128xbf16>
    %42 = vector.extract_strided_slice %39 {offsets = [0, 2, 0], sizes = [18, 16, 128], strides = [1, 1, 1]} : vector<18x18x128xbf16> to vector<18x16x128xbf16>
    %43 = tpu.concatenate %40, %41, %42 in 2 : vector<18x16x128xbf16>, vector<18x16x128xbf16>, vector<18x16x128xbf16> -> vector<18x16x384xbf16>
    %44 = vector.extract_strided_slice %43 {offsets = [0, 0, 0], sizes = [16, 16, 384], strides = [1, 1, 1]} : vector<18x16x384xbf16> to vector<16x16x384xbf16>
    %45 = vector.shape_cast %44 : vector<16x16x384xbf16> to vector<256x384xbf16>
    %c0_34 = arith.constant 0 : index
    %c0_35 = arith.constant 0 : index
    %c0_36 = arith.constant 0 : index
    %46 = vector.load %arg3[%c0_34, %c0_35, %c0_36] : memref<3x384x128xbf16, #tpu.memory_space<vmem>>, vector<1x384x128xbf16>
    %47 = vector.shape_cast %46 : vector<1x384x128xbf16> to vector<384x128xbf16>
    %cst_37 = arith.constant dense<0.000000e+00> : vector<256x128xf32>
    %48 = tpu.matmul %45, %47, %cst_37 {dimension_numbers = #tpu.dot_dimension_numbers<[1], [0], [0], [1], [0, 0, 1, 1], [], []>} : vector<256x384xbf16>, vector<384x128xbf16>, vector<256x128xf32> -> vector<256x128xf32>
    %49 = vector.extract_strided_slice %43 {offsets = [1, 0, 0], sizes = [16, 16, 384], strides = [1, 1, 1]} : vector<18x16x384xbf16> to vector<16x16x384xbf16>
    %50 = vector.shape_cast %49 : vector<16x16x384xbf16> to vector<256x384xbf16>
    %c1_38 = arith.constant 1 : index
    %c0_39 = arith.constant 0 : index
    %c0_40 = arith.constant 0 : index
    %51 = vector.load %arg3[%c1_38, %c0_39, %c0_40] : memref<3x384x128xbf16, #tpu.memory_space<vmem>>, vector<1x384x128xbf16>
    %52 = vector.shape_cast %51 : vector<1x384x128xbf16> to vector<384x128xbf16>
    %cst_41 = arith.constant dense<0.000000e+00> : vector<256x128xf32>
    %53 = tpu.matmul %50, %52, %cst_41 {dimension_numbers = #tpu.dot_dimension_numbers<[1], [0], [0], [1], [0, 0, 1, 1], [], []>} : vector<256x384xbf16>, vector<384x128xbf16>, vector<256x128xf32> -> vector<256x128xf32>
    %54 = arith.addf %48, %53 : vector<256x128xf32>
    %55 = vector.extract_strided_slice %43 {offsets = [2, 0, 0], sizes = [16, 16, 384], strides = [1, 1, 1]} : vector<18x16x384xbf16> to vector<16x16x384xbf16>
    %56 = vector.shape_cast %55 : vector<16x16x384xbf16> to vector<256x384xbf16>
    %c2_42 = arith.constant 2 : index
    %c0_43 = arith.constant 0 : index
    %c0_44 = arith.constant 0 : index
    %57 = vector.load %arg3[%c2_42, %c0_43, %c0_44] : memref<3x384x128xbf16, #tpu.memory_space<vmem>>, vector<1x384x128xbf16>
    %58 = vector.shape_cast %57 : vector<1x384x128xbf16> to vector<384x128xbf16>
    %cst_45 = arith.constant dense<0.000000e+00> : vector<256x128xf32>
    %59 = tpu.matmul %56, %58, %cst_45 {dimension_numbers = #tpu.dot_dimension_numbers<[1], [0], [0], [1], [0, 0, 1, 1], [], []>} : vector<256x384xbf16>, vector<384x128xbf16>, vector<256x128xf32> -> vector<256x128xf32>
    %60 = arith.addf %54, %59 : vector<256x128xf32>
    %c1_46 = arith.constant 1 : index
    %c0_47 = arith.constant 0 : index
    %61 = vector.load %arg4[%c1_46, %c0_47] : memref<2x128xf32, #tpu.memory_space<vmem>>, vector<1x128xf32>
    %62 = vector.broadcast %61 : vector<1x128xf32> to vector<256x128xf32>
    %63 = arith.addf %60, %62 : vector<256x128xf32>
    %64 = arith.extf %13 : vector<256x128xbf16> to vector<256x128xf32>
    %65 = arith.addf %63, %64 : vector<256x128xf32>
    %cst_48 = arith.constant 0.000000e+00 : f32
    %66 = vector.broadcast %cst_48 : f32 to vector<256x128xf32>
    %67 = arith.maximumf %65, %66 : vector<256x128xf32>
    %68 = vector.shape_cast %67 : vector<256x128xf32> to vector<16x16x128xf32>
    %c0_49 = arith.constant 0 : index
    %c0_50 = arith.constant 0 : index
    %c0_51 = arith.constant 0 : index
    %c0_52 = arith.constant 0 : index
    %69 = vector.load %arg5[%c0_49, %c0_50, %c0_51, %c0_52] : memref<1x16x16x128xf32, #tpu.memory_space<vmem>>, vector<1x16x16x128xf32>
    %70 = vector.shape_cast %69 : vector<1x16x16x128xf32> to vector<16x16x128xf32>
    %71 = vector.shape_cast %68 : vector<16x16x128xf32> to vector<1x16x16x128xf32>
    tpu.vector_store %arg5[%c0_49, %c0_50, %c0_51, %c0_52], %71 {strides = array<i32>} : memref<1x16x16x128xf32, #tpu.memory_space<vmem>>, vector<1x16x16x128xf32>,
    return
  }
  func.func @transform_0(%arg0: i32) -> (i32, i32, i32, i32) {
    %c0_i32 = arith.constant 0 : i32
    %c0_i32_0 = arith.constant 0 : i32
    %c0_i32_1 = arith.constant 0 : i32
    %c0_i32_2 = arith.constant 0 : i32
    return %arg0, %c0_i32, %c0_i32_0, %c0_i32_1 : i32, i32, i32, i32
  }
  func.func @transform_1(%arg0: i32) -> (i32, i32, i32) {
    %c0_i32 = arith.constant 0 : i32
    %c0_i32_0 = arith.constant 0 : i32
    %c0_i32_1 = arith.constant 0 : i32
    %c0_i32_2 = arith.constant 0 : i32
    return %c0_i32, %c0_i32_0, %c0_i32_1 : i32, i32, i32
  }
  func.func @transform_2(%arg0: i32) -> (i32, i32, i32) {
    %c0_i32 = arith.constant 0 : i32
    %c0_i32_0 = arith.constant 0 : i32
    %c0_i32_1 = arith.constant 0 : i32
    %c0_i32_2 = arith.constant 0 : i32
    return %c0_i32, %c0_i32_0, %c0_i32_1 : i32, i32, i32
  }
  func.func @transform_3(%arg0: i32) -> (i32, i32) {
    %c0_i32 = arith.constant 0 : i32
    %c0_i32_0 = arith.constant 0 : i32
    %c0_i32_1 = arith.constant 0 : i32
    return %c0_i32, %c0_i32_0 : i32, i32
  }
  func.func @transform_4(%arg0: i32) -> (i32, i32, i32, i32) {
    %c0_i32 = arith.constant 0 : i32
    %c0_i32_0 = arith.constant 0 : i32
    %c0_i32_1 = arith.constant 0 : i32
    %c0_i32_2 = arith.constant 0 : i32
    return %arg0, %c0_i32, %c0_i32_0, %c0_i32_1 : i32, i32, i32, i32
  }
}

</mosaic_0001>

<llo_original>
// kernel: tpu_custom_call.1
$region0: #{tpu_custom_call.1}
  #allocation0 [shape = 'u32[]', space=smem, size = 0x4, offset = 0x4, fixed_abs, tag = 'smem constant byte address 0x4 - core index']
  #allocation1 [shape = 'u32[144,128]{1,0:T(1,128)}', space=vmem, size = 0x12000, scoped, tag = 'internal scratch']
  #allocation2 [shape = 'bf16[18,18,128]{2,1,0:T(8,128)(2,1)}', space=vmem, size = 0x1b000, scoped, tag = 'scratch operand']
  %s0 = inlined_call_operand.vmem [shape: bf16[2,18,18,128], index: 0, kind: input, shape index: {}]
  %s1 = inlined_call_operand.vmem [shape: bf16[3,384,128], index: 1, kind: input, shape index: {}]
  %s2 = inlined_call_operand.hbm [shape: bf16[3,384,128], index: 2, kind: input, shape index: {}]
  %s3 = inlined_call_operand.vmem [shape: f32[2,128], index: 3, kind: input, shape index: {}]
  %s4 = inlined_call_operand.hbm [shape: f32[2,16,16,128], index: 4, kind: output, shape index: {}]
  %s5 = sld [smem:[#allocation0]]
  $region53: #{tpu_custom_call.1} parent=0
    _
  %s7 = ssub.s32 1, %s5
  %s8 = scalar_select 0, %s7, %s5
  $region1: #{tpu_custom_call.1} parent=0
    #allocation3 [shape = 'u8[294912]{0}', space=vmem, size = 0x48000, scoped, tag = 'input window, operand 2, single buffered']
    #allocation4 [shape = 's32[2]{0}', space=sflag, size = 0x8, scoped, tag = 'scoped memory for tpu_custom_call.1']
    #allocation5 [shape = 's32[2]{0}', space=sflag, size = 0x8, scoped, tag = 'scoped memory for tpu_custom_call.1']
    #allocation6 [shape = 'u8[262144]{0}', space=vmem, size = 0x40000, scoped, tag = 'output window, operand 0']
    %9 = vsyncpa [#allocation4], 0
    %10 = vsyncpa [#allocation5], 0
    %s11 = scalar_lea.sflag [#allocation5], 1
    %12 = vsyncpa %s11, 0
    loop: start=0, step=1, limit=4
    $region2: #{tpu_custom_call.1} parent=1 // loop_pre_header
      _
    $region3: #{tpu_custom_call.1} parent=1 // loop_header
      %s14 = sphi 0, %s18
      %p15 = scmp.ge.s32.totalorder %s14, 4
      %s24 = sphi 0, %s26
      %s27 = sphi 0, %s24
      %s28 = sphi 0, %s27
      %s44 = sphi 0, %s28
      %s48 = sphi 0, %s48
      %s50 = sphi 0, %s48
      %s51 = sphi 0, %s50
      %s65 = sphi 0, %s51
      %s69 = sphi 0, %s69
      %s71 = sphi 0, %s69
      %s72 = sphi 0, %s71
      %s86 = sphi 0, %s72
      %s90 = sphi 0, %s90
      %s92 = sphi 0, %s90
      %s93 = sphi 0, %s92
      %s107 = sphi 0, %s93
      %s113 = sphi 0, %s115
      %s116 = sphi 0, %s113
      %s117 = sphi 0, %s116
      %s133 = sphi 0, %s117
    $region4: #{tpu_custom_call.1} parent=1 // loop_header_branch
      %17 = sbr.rel (%p15) target = $region8
    $region5: #{tpu_custom_call.1} parent=1 // loop_body
      %s19 = ssub.s32 %s14, 1
      %s20 = ssub.s32 %s14, 2
      %s21 = sadd.s32 %s14, 1
      %s22 = ssub.s32 %s14, %s21
      %p23 = scmp.eq.s32.totalorder %s22, 0
      %s25 = sadd.s32 %s24, 1
      %s26 = scalar_select %p23, %s24, %s25
      %p29 = pneg %p23
      %p30 = scmp.eq.s32.totalorder %s14, 1
      %p31 = por %p29, %p30
      %p32 = scmp.ne.s32.totalorder %s24, %s27
      %p33 = scmp.eq.s32.totalorder %s14, 0
      %p34 = por %p32, %p33
      %p35 = scmp.ne.s32.totalorder %s24, %s27
      %p36 = scmp.eq.s32.totalorder %s19, 1
      %p37 = por %p35, %p36
      %p38 = scmp.ne.s32.totalorder %s27, %s28
      %p39 = scmp.eq.s32.totalorder %s19, 0
      %p40 = por %p38, %p39
      %p41 = scmp.ne.s32.totalorder %s27, %s28
      %p42 = scmp.eq.s32.totalorder %s20, 1
      %p43 = por %p41, %p42
      %p45 = scmp.ne.s32.totalorder %s28, %s44
      %p46 = scmp.eq.s32.totalorder %s20, 0
      %p47 = por %p45, %p46
      %s49 = sadd.s32 %s48, 1
      %p52 = scmp.eq.s32.totalorder %s14, 1
      %p53 = scmp.ne.s32.totalorder %s48, %s50
      %p54 = scmp.eq.s32.totalorder %s14, 0
      %p55 = por %p53, %p54
      %p56 = scmp.ne.s32.totalorder %s48, %s50
      %p57 = scmp.eq.s32.totalorder %s19, 1
      %p58 = por %p56, %p57
      %p59 = scmp.ne.s32.totalorder %s50, %s51
      %p60 = scmp.eq.s32.totalorder %s19, 0
      %p61 = por %p59, %p60
      %p62 = scmp.ne.s32.totalorder %s50, %s51
      %p63 = scmp.eq.s32.totalorder %s20, 1
      %p64 = por %p62, %p63
      %p66 = scmp.ne.s32.totalorder %s51, %s65
      %p67 = scmp.eq.s32.totalorder %s20, 0
      %p68 = por %p66, %p67
      %s70 = sadd.s32 %s69, 1
      %p73 = scmp.eq.s32.totalorder %s14, 1
      %p74 = scmp.ne.s32.totalorder %s69, %s71
      %p75 = scmp.eq.s32.totalorder %s14, 0
      %p76 = por %p74, %p75
      %p77 = scmp.ne.s32.totalorder %s69, %s71
      %p78 = scmp.eq.s32.totalorder %s19, 1
      %p79 = por %p77, %p78
      %p80 = scmp.ne.s32.totalorder %s71, %s72
      %p81 = scmp.eq.s32.totalorder %s19, 0
      %p82 = por %p80, %p81
      %p83 = scmp.ne.s32.totalorder %s71, %s72
      %p84 = scmp.eq.s32.totalorder %s20, 1
      %p85 = por %p83, %p84
      %p87 = scmp.ne.s32.totalorder %s72, %s86
      %p88 = scmp.eq.s32.totalorder %s20, 0
      %p89 = por %p87, %p88
      %s91 = sadd.s32 %s90, 1
      %p94 = scmp.eq.s32.totalorder %s14, 1
      %p95 = scmp.ne.s32.totalorder %s90, %s92
      %p96 = scmp.eq.s32.totalorder %s14, 0
      %p97 = por %p95, %p96
      %p98 = scmp.ne.s32.totalorder %s90, %s92
      %p99 = scmp.eq.s32.totalorder %s19, 1
      %p100 = por %p98, %p99
      %p101 = scmp.ne.s32.totalorder %s92, %s93
      %p102 = scmp.eq.s32.totalorder %s19, 0
      %p103 = por %p101, %p102
      %p104 = scmp.ne.s32.totalorder %s92, %s93
      %p105 = scmp.eq.s32.totalorder %s20, 1
      %p106 = por %p104, %p105
      %p108 = scmp.ne.s32.totalorder %s93, %s107
      %p109 = scmp.eq.s32.totalorder %s20, 0
      %p110 = por %p108, %p109
      %s111 = ssub.s32 %s14, %s21
      %p112 = scmp.eq.s32.totalorder %s111, 0
      %s114 = sadd.s32 %s113, 1
      %s115 = scalar_select %p112, %s113, %s114
      %p118 = pneg %p112
      %p119 = scmp.eq.s32.totalorder %s14, 1
      %p120 = por %p118, %p119
      %p121 = scmp.ne.s32.totalorder %s113, %s116
      %p122 = scmp.eq.s32.totalorder %s14, 0
      %p123 = por %p121, %p122
      %p124 = scmp.ne.s32.totalorder %s113, %s116
      %p125 = scmp.eq.s32.totalorder %s19, 1
      %p126 = por %p124, %p125
      %p127 = scmp.ne.s32.totalorder %s116, %s117
      %p128 = scmp.eq.s32.totalorder %s19, 0
      %p129 = por %p127, %p128
      %p130 = scmp.ne.s32.totalorder %s116, %s117
      %p131 = scmp.eq.s32.totalorder %s20, 1
      %p132 = por %p130, %p131
      %p134 = scmp.ne.s32.totalorder %s117, %s133
      %p135 = scmp.eq.s32.totalorder %s20, 0
      %p136 = por %p134, %p135
      %p137 = scmp.le.s32.totalorder 1, %s14
      %p138 = scmp.lt.s32.totalorder %s14, 3
      %p139 = pnand %p137, %p138
      %p140 = pneg %p139
      // Predicated region
      $region9: #{tpu_custom_call.1} parent=5 // pred_check
        _
      $region10: #{tpu_custom_call.1} parent=5 // pred_check_branch
        %142 = sbr.rel (%p139) target = $region12
      $region11: #{tpu_custom_call.1} parent=5 // pred_region
        %s143 = ssub.s32 %s14, 1
        // Predicated region
        $region13: #{tpu_custom_call.1} parent=11 // pred_check
          %p144 = pneg %p61
        $region14: #{tpu_custom_call.1} parent=11 // pred_check_branch
          %146 = sbr.rel (%p144) target = $region16
        $region15: #{tpu_custom_call.1} parent=11 // pred_region
          _
        $region16: #{tpu_custom_call.1} parent=11 // pred_fallthru
          _
        // Predicated region
        $region17: #{tpu_custom_call.1} parent=11 // pred_check
          %p147 = pneg %p82
        $region18: #{tpu_custom_call.1} parent=11 // pred_check_branch
          %149 = sbr.rel (%p147) target = $region20
        $region19: #{tpu_custom_call.1} parent=11 // pred_region
          %s151 = ssub.s32 9216, 9216
          %152 = vsyncadd [#allocation4], %s151
          %s153 = sshll.u32 [#allocation3], 4
          %s154 = int_to_ptr.vmem [resolvable:$true] %s153
          %159 = dma.hbm_to_vmem [thread:$0]  %s2, 9216, %s154, [#allocation4], 64, 64, 4
        $region20: #{tpu_custom_call.1} parent=11 // pred_fallthru
          _
        // Predicated region
        $region21: #{tpu_custom_call.1} parent=11 // pred_check
          %p160 = pneg %p103
        $region22: #{tpu_custom_call.1} parent=11 // pred_check_branch
          %162 = sbr.rel (%p160) target = $region24
        $region23: #{tpu_custom_call.1} parent=11 // pred_region
          _
        $region24: #{tpu_custom_call.1} parent=11 // pred_fallthru
          _
      $region12: #{tpu_custom_call.1} parent=5 // pred_fallthru
        _
      %p163 = scmp.lt.s32.totalorder %s14, 2
      // Predicated region
      $region25: #{tpu_custom_call.1} parent=5 // pred_check
        %p164 = pneg %p163
      $region26: #{tpu_custom_call.1} parent=5 // pred_check_branch
        %166 = sbr.rel (%p164) target = $region28
      $region27: #{tpu_custom_call.1} parent=5 // pred_region
        // Predicated region
        $region29: #{tpu_custom_call.1} parent=27 // pred_check
          %p167 = pneg %p34
        $region30: #{tpu_custom_call.1} parent=27 // pred_check_branch
          %169 = sbr.rel (%p167) target = $region32
        $region31: #{tpu_custom_call.1} parent=27 // pred_region
          %p170 = scmp.lt.s32.totalorder %s14, 1
          %s171 = scalar_select %p170, %s14, 1
          %s172 = smul.addr %s171, 54
          %s173 = smul.addr %s172, 4
          %s174 = scalar_lea.vmem %s0, %s173
        $region32: #{tpu_custom_call.1} parent=27 // pred_fallthru
          _
      $region28: #{tpu_custom_call.1} parent=5 // pred_fallthru
        _
      %p175 = scmp.le.s32.totalorder 1, %s14
      %p176 = scmp.lt.s32.totalorder %s14, 3
      %p177 = pnand %p175, %p176
      %p178 = pneg %p177
      // Predicated region
      $region33: #{tpu_custom_call.1} parent=5 // pred_check
        _
      $region34: #{tpu_custom_call.1} parent=5 // pred_check_branch
        %180 = sbr.rel (%p177) target = $region36
      $region35: #{tpu_custom_call.1} parent=5 // pred_region
        %s181 = ssub.s32 %s14, 1
        // Predicated region
        $region37: #{tpu_custom_call.1} parent=35 // pred_check
          %p182 = pneg %p82
        $region38: #{tpu_custom_call.1} parent=35 // pred_check_branch
          %184 = sbr.rel (%p182) target = $region40
        $region39: #{tpu_custom_call.1} parent=35 // pred_region
          %185 = dma.done [#allocation4], 9216
        $region40: #{tpu_custom_call.1} parent=35 // pred_fallthru
          _
        %p186 = scmp.lt.s32.totalorder %s19, 1
        %s187 = scalar_select %p186, %s19, 1
        %s188 = smul.addr %s187, 54
        %s189 = smul.addr %s188, 4
        %s190 = scalar_lea.vmem %s0, %s189
        %p191 = pneg %p40
        %p192 = pneg %p37
        %p193 = pneg %p61
        %p194 = pneg %p58
        %p195 = pneg %p82
        %p196 = pneg %p79
        %p197 = pneg %p103
        %p198 = pneg %p100
        %p199 = pneg %p129
        %p200 = pneg %p126
        %s201 = sand.u32 %s116, 1
        %s202 = scalar_lea.sflag [#allocation5], %s201
        %s203 = sand.u32 %s116, 1
        %s204 = smul.addr %s203, 256
        %s205 = scalar_lea.vmem [#allocation6], %s204
        %p206 = scmp.lt.s32.totalorder %s19, 1
        %s207 = scalar_select %p206, %s19, 1
        %s208 = smul.addr %s207, 54
        %s209 = smul.addr %s208, 4
        %s210 = scalar_lea.vmem %s0, %s209
        %212 = vst [vmem:[#allocation2] sm:$0xf] 0
        %213 = vst [vmem:[#allocation2 + $0x4] sm:$0xf] 0
        %214 = vst [vmem:[#allocation2 + $0x8] sm:$0x1] 0
        %s215 = scalar_lea.vmem [#allocation2], 204
        %216 = vst [vmem:[%s215] sm:$0xf] 0
        %217 = vst [vmem:[%s215 + $0x4] sm:$0xf] 0
        %218 = vst [vmem:[%s215 + $0x8] sm:$0x1] 0
        %vm219 = vcmask 1040384
        %vm220 = vsmask.f32 256
        %vm221 = vmand %vm219, %vm220
        %v222 = vld [vmem:[#allocation2] sm:$0x1]
        %v223 = vsel %vm221, 0, %v222
        %224 = vst [vmem:[#allocation2] sm:$0x1] %v223
        %v225 = vld [vmem:[#allocation2 + $0xc] sm:$0x1]
        %v226 = vsel %vm221, 0, %v225
        %227 = vst [vmem:[#allocation2 + $0xc] sm:$0x1] %v226
        %v228 = vld [vmem:[#allocation2 + $0x18] sm:$0x1]
        %v229 = vsel %vm221, 0, %v228
        %230 = vst [vmem:[#allocation2 + $0x18] sm:$0x1] %v229
        %v231 = vld [vmem:[#allocation2 + $0x24] sm:$0x1]
        %v232 = vsel %vm221, 0, %v231
        %233 = vst [vmem:[#allocation2 + $0x24] sm:$0x1] %v232
        %v234 = vld [vmem:[#allocation2 + $0x30] sm:$0x1]
        %v235 = vsel %vm221, 0, %v234
        %236 = vst [vmem:[#allocation2 + $0x30] sm:$0x1] %v235
        %v237 = vld [vmem:[#allocation2 + $0x3c] sm:$0x1]
        %v238 = vsel %vm221, 0, %v237
        %239 = vst [vmem:[#allocation2 + $0x3c] sm:$0x1] %v238
        %v240 = vld [vmem:[#allocation2 + $0x48] sm:$0x1]
        %v241 = vsel %vm221, 0, %v240
        %242 = vst [vmem:[#allocation2 + $0x48] sm:$0x1] %v241
        %v243 = vld [vmem:[#allocation2 + $0x54] sm:$0x1]
        %v244 = vsel %vm221, 0, %v243
        %245 = vst [vmem:[#allocation2 + $0x54] sm:$0x1] %v244
        %v246 = vld [vmem:[#allocation2 + $0x60] sm:$0x1]
        %v247 = vsel %vm221, 0, %v246
        %248 = vst [vmem:[#allocation2 + $0x60] sm:$0x1] %v247
        %v249 = vld [vmem:[#allocation2 + $0x6c] sm:$0x1]
        %v250 = vsel %vm221, 0, %v249
        %251 = vst [vmem:[#allocation2 + $0x6c] sm:$0x1] %v250
        %v252 = vld [vmem:[#allocation2 + $0x78] sm:$0x1]
        %v253 = vsel %vm221, 0, %v252
        %254 = vst [vmem:[#allocation2 + $0x78] sm:$0x1] %v253
        %v255 = vld [vmem:[#allocation2 + $0x84] sm:$0x1]
        %v256 = vsel %vm221, 0, %v255
        %257 = vst [vmem:[#allocation2 + $0x84] sm:$0x1] %v256
        %v258 = vld [vmem:[#allocation2 + $0x90] sm:$0x1]
        %v259 = vsel %vm221, 0, %v258
        %260 = vst [vmem:[#allocation2 + $0x90] sm:$0x1] %v259
        %v261 = vld [vmem:[#allocation2 + $0x9c] sm:$0x1]
        %v262 = vsel %vm221, 0, %v261
        %263 = vst [vmem:[#allocation2 + $0x9c] sm:$0x1] %v262
        %v264 = vld [vmem:[#allocation2 + $0xa8] sm:$0x1]
        %v265 = vsel %vm221, 0, %v264
        %266 = vst [vmem:[#allocation2 + $0xa8] sm:$0x1] %v265
        %v267 = vld [vmem:[#allocation2 + $0xb4] sm:$0x1]
        %v268 = vsel %vm221, 0, %v267
        %269 = vst [vmem:[#allocation2 + $0xb4] sm:$0x1] %v268
        %v270 = vld [vmem:[#allocation2 + $0xc0] sm:$0x1]
        %v271 = vsel %vm221, 0, %v270
        %272 = vst [vmem:[#allocation2 + $0xc0] sm:$0x1] %v271
        %v273 = vld [vmem:[#allocation2 + $0xcc] sm:$0x1]
        %v274 = vsel %vm221, 0, %v273
        %275 = vst [vmem:[#allocation2 + $0xcc] sm:$0x1] %v274
        %vm276 = vsmask.f32 7938
        %vm277 = vmand %vm219, %vm276
        %v278 = vld [vmem:[#allocation2 + $0x8] sm:$0x1]
        %v279 = vsel %vm277, 0, %v278
        %280 = vst [vmem:[#allocation2 + $0x8] sm:$0x1] %v279
        %v281 = vld [vmem:[#allocation2 + $0x14] sm:$0x1]
        %v282 = vsel %vm277, 0, %v281
        %283 = vst [vmem:[#allocation2 + $0x14] sm:$0x1] %v282
        %v284 = vld [vmem:[#allocation2 + $0x20] sm:$0x1]
        %v285 = vsel %vm277, 0, %v284
        %286 = vst [vmem:[#allocation2 + $0x20] sm:$0x1] %v285
        %v287 = vld [vmem:[#allocation2 + $0x2c] sm:$0x1]
        %v288 = vsel %vm277, 0, %v287
        %289 = vst [vmem:[#allocation2 + $0x2c] sm:$0x1] %v288
        %v290 = vld [vmem:[#allocation2 + $0x38] sm:$0x1]
        %v291 = vsel %vm277, 0, %v290
        %292 = vst [vmem:[#allocation2 + $0x38] sm:$0x1] %v291
        %v293 = vld [vmem:[#allocation2 + $0x44] sm:$0x1]
        %v294 = vsel %vm277, 0, %v293
        %295 = vst [vmem:[#allocation2 + $0x44] sm:$0x1] %v294
        %v296 = vld [vmem:[#allocation2 + $0x50] sm:$0x1]
        %v297 = vsel %vm277, 0, %v296
        %298 = vst [vmem:[#allocation2 + $0x50] sm:$0x1] %v297
        %v299 = vld [vmem:[#allocation2 + $0x5c] sm:$0x1]
        %v300 = vsel %vm277, 0, %v299
        %301 = vst [vmem:[#allocation2 + $0x5c] sm:$0x1] %v300
        %v302 = vld [vmem:[#allocation2 + $0x68] sm:$0x1]
        %v303 = vsel %vm277, 0, %v302
        %304 = vst [vmem:[#allocation2 + $0x68] sm:$0x1] %v303
        %v305 = vld [vmem:[#allocation2 + $0x74] sm:$0x1]
        %v306 = vsel %vm277, 0, %v305
        %307 = vst [vmem:[#allocation2 + $0x74] sm:$0x1] %v306
        %v308 = vld [vmem:[#allocation2 + $0x80] sm:$0x1]
        %v309 = vsel %vm277, 0, %v308
        %310 = vst [vmem:[#allocation2 + $0x80] sm:$0x1] %v309
        %v311 = vld [vmem:[#allocation2 + $0x8c] sm:$0x1]
        %v312 = vsel %vm277, 0, %v311
        %313 = vst [vmem:[#allocation2 + $0x8c] sm:$0x1] %v312
        %v314 = vld [vmem:[#allocation2 + $0x98] sm:$0x1]
        %v315 = vsel %vm277, 0, %v314
        %316 = vst [vmem:[#allocation2 + $0x98] sm:$0x1] %v315
        %v317 = vld [vmem:[#allocation2 + $0xa4] sm:$0x1]
        %v318 = vsel %vm277, 0, %v317
        %319 = vst [vmem:[#allocation2 + $0xa4] sm:$0x1] %v318
        %v320 = vld [vmem:[#allocation2 + $0xb0] sm:$0x1]
        %v321 = vsel %vm277, 0, %v320
        %322 = vst [vmem:[#allocation2 + $0xb0] sm:$0x1] %v321
        %v323 = vld [vmem:[#allocation2 + $0xbc] sm:$0x1]
        %v324 = vsel %vm277, 0, %v323
        %325 = vst [vmem:[#allocation2 + $0xbc] sm:$0x1] %v324
        %v326 = vld [vmem:[#allocation2 + $0xc8] sm:$0x1]
        %v327 = vsel %vm277, 0, %v326
        %328 = vst [vmem:[#allocation2 + $0xc8] sm:$0x1] %v327
        %v329 = vld [vmem:[#allocation2 + $0xd4] sm:$0x1]
        %v330 = vsel %vm277, 0, %v329
        %331 = vst [vmem:[#allocation2 + $0xd4] sm:$0x1] %v330
        %v332 = vld [vmem:[%s210] sm:$0xf]
        %v333 = vld [vmem:[%s210 + $0x4] sm:$0xf]
        %v334 = vld [vmem:[%s210 + $0x8] sm:$0x1]
        %v335 = vld [vmem:[%s210 + $0xc] sm:$0xf]
        %v336 = vld [vmem:[%s210 + $0x10] sm:$0xf]
        %v337 = vld [vmem:[%s210 + $0x14] sm:$0x1]
        %v338 = vld [vmem:[%s210 + $0x18] sm:$0xf]
        %v339 = vld [vmem:[%s210 + $0x1c] sm:$0xf]
        %v340 = vld [vmem:[%s210 + $0x20] sm:$0x1]
        %v341 = vld [vmem:[%s210 + $0x24] sm:$0xf]
        %v342 = vld [vmem:[%s210 + $0x28] sm:$0xf]
        %v343 = vld [vmem:[%s210 + $0x2c] sm:$0x1]
        %v344 = vld [vmem:[%s210 + $0x30] sm:$0xf]
        %v345 = vld [vmem:[%s210 + $0x34] sm:$0xf]
        %v346 = vld [vmem:[%s210 + $0x38] sm:$0x1]
        %v347 = vld [vmem:[%s210 + $0x3c] sm:$0xf]
        %v348 = vld [vmem:[%s210 + $0x40] sm:$0xf]
        %v349 = vld [vmem:[%s210 + $0x44] sm:$0x1]
        %v350 = vld [vmem:[%s210 + $0x48] sm:$0xf]
        %v351 = vld [vmem:[%s210 + $0x4c] sm:$0xf]
        %v352 = vld [vmem:[%s210 + $0x50] sm:$0x1]
        %v353 = vld [vmem:[%s210 + $0x54] sm:$0xf]
        %v354 = vld [vmem:[%s210 + $0x58] sm:$0xf]
        %v355 = vld [vmem:[%s210 + $0x5c] sm:$0x1]
        %v356 = vld [vmem:[%s210 + $0x60] sm:$0xf]
        %v357 = vld [vmem:[%s210 + $0x64] sm:$0xf]
        %v358 = vld [vmem:[%s210 + $0x68] sm:$0x1]
        %v359 = vld [vmem:[%s210 + $0x6c] sm:$0xf]
        %v360 = vld [vmem:[%s210 + $0x70] sm:$0xf]
        %v361 = vld [vmem:[%s210 + $0x74] sm:$0x1]
        %v362 = vld [vmem:[%s210 + $0x78] sm:$0xf]
        %v363 = vld [vmem:[%s210 + $0x7c] sm:$0xf]
        %v364 = vld [vmem:[%s210 + $0x80] sm:$0x1]
        %v365 = vld [vmem:[%s210 + $0x84] sm:$0xf]
        %v366 = vld [vmem:[%s210 + $0x88] sm:$0xf]
        %v367 = vld [vmem:[%s210 + $0x8c] sm:$0x1]
        %v368 = vld [vmem:[%s210 + $0x90] sm:$0xf]
        %v369 = vld [vmem:[%s210 + $0x94] sm:$0xf]
        %v370 = vld [vmem:[%s210 + $0x98] sm:$0x1]
        %v371 = vld [vmem:[%s210 + $0x9c] sm:$0xf]
        %v372 = vld [vmem:[%s210 + $0xa0] sm:$0xf]
        %v373 = vld [vmem:[%s210 + $0xa4] sm:$0x1]
        %v374 = vld [vmem:[%s210 + $0xa8] sm:$0xf]
        %v375 = vld [vmem:[%s210 + $0xac] sm:$0xf]
        %v376 = vld [vmem:[%s210 + $0xb0] sm:$0x1]
        %v377 = vld [vmem:[%s210 + $0xb4] sm:$0xf]
        %v378 = vld [vmem:[%s210 + $0xb8] sm:$0xf]
        %v379 = vld [vmem:[%s210 + $0xbc] sm:$0x1]
        %v380 = vld [vmem:[%s210 + $0xc0] sm:$0xf]
        %v381 = vld [vmem:[%s210 + $0xc4] sm:$0xf]
        %v382 = vld [vmem:[%s210 + $0xc8] sm:$0x1]
        %v383 = vld [vmem:[%s210 + $0xcc] sm:$0xf]
        %v384 = vld [vmem:[%s210 + $0xd0] sm:$0xf]
        %v385 = vld [vmem:[%s210 + $0xd4] sm:$0x1]
        %v422 = vunpack.c.l.b16 %v332
        %v423 = vunpack.c.l.b16 %v333
        %v424 = vunpack.c.l.b16 %v335
        %v425 = vunpack.c.l.b16 %v336
        %v426 = vunpack.c.l.b16 %v338
        %v427 = vunpack.c.l.b16 %v339
        %v428 = vunpack.c.l.b16 %v341
        %v429 = vunpack.c.l.b16 %v342
        %v430 = vunpack.c.l.b16 %v344
        %v431 = vunpack.c.l.b16 %v345
        %v432 = vunpack.c.l.b16 %v347
        %v433 = vunpack.c.l.b16 %v348
        %v434 = vunpack.c.l.b16 %v350
        %v435 = vunpack.c.l.b16 %v351
        %v436 = vunpack.c.l.b16 %v353
        %v437 = vunpack.c.l.b16 %v354
        %v438 = vunpack.c.l.b16 %v356
        %v439 = vunpack.c.l.b16 %v357
        %v440 = vunpack.c.l.b16 %v359
        %v441 = vunpack.c.l.b16 %v360
        %v442 = vunpack.c.l.b16 %v362
        %v443 = vunpack.c.l.b16 %v363
        %v444 = vunpack.c.l.b16 %v365
        %v445 = vunpack.c.l.b16 %v366
        %v446 = vunpack.c.l.b16 %v368
        %v447 = vunpack.c.l.b16 %v369
        %v448 = vunpack.c.l.b16 %v371
        %v449 = vunpack.c.l.b16 %v372
        %v450 = vunpack.c.l.b16 %v374
        %v451 = vunpack.c.l.b16 %v375
        %v452 = vunpack.c.l.b16 %v377
        %v453 = vunpack.c.l.b16 %v378
        %v454 = vunpack.c.l.b16 %v380
        %v455 = vunpack.c.l.b16 %v381
        %v456 = vunpack.c.l.b16 %v383
        %v457 = vunpack.c.l.b16 %v384
        %v458 = vpack.c.b16 %v423, %v422
        %v459 = vpack.c.b16 %v425, %v424
        %v460 = vpack.c.b16 %v427, %v426
        %v461 = vpack.c.b16 %v429, %v428
        %v462 = vpack.c.b16 %v431, %v430
        %v463 = vpack.c.b16 %v433, %v432
        %v464 = vpack.c.b16 %v435, %v434
        %v465 = vpack.c.b16 %v437, %v436
        %v466 = vpack.c.b16 %v439, %v438
        %v467 = vpack.c.b16 %v441, %v440
        %v468 = vpack.c.b16 %v443, %v442
        %v469 = vpack.c.b16 %v445, %v444
        %v470 = vpack.c.b16 %v447, %v446
        %v471 = vpack.c.b16 %v449, %v448
        %v472 = vpack.c.b16 %v451, %v450
        %v473 = vpack.c.b16 %v453, %v452
        %v474 = vpack.c.b16 %v455, %v454
        %v475 = vpack.c.b16 %v457, %v456
        %v512 = vunpack.c.l.b16 %v334
        %v513 = vunpack.c.l.b16 %v337
        %v514 = vunpack.c.l.b16 %v340
        %v515 = vunpack.c.l.b16 %v343
        %v516 = vunpack.c.l.b16 %v346
        %v517 = vunpack.c.l.b16 %v349
        %v518 = vunpack.c.l.b16 %v352
        %v519 = vunpack.c.l.b16 %v355
        %v520 = vunpack.c.l.b16 %v358
        %v521 = vunpack.c.l.b16 %v361
        %v522 = vunpack.c.l.b16 %v364
        %v523 = vunpack.c.l.b16 %v367
        %v524 = vunpack.c.l.b16 %v370
        %v525 = vunpack.c.l.b16 %v373
        %v526 = vunpack.c.l.b16 %v376
        %v527 = vunpack.c.l.b16 %v379
        %v528 = vunpack.c.l.b16 %v382
        %v529 = vunpack.c.l.b16 %v385
        %v530 = vpack.c.b16 %v512, %v512
        %v531 = vpack.c.b16 %v513, %v513
        %v532 = vpack.c.b16 %v514, %v514
        %v533 = vpack.c.b16 %v515, %v515
        %v534 = vpack.c.b16 %v516, %v516
        %v535 = vpack.c.b16 %v517, %v517
        %v536 = vpack.c.b16 %v518, %v518
        %v537 = vpack.c.b16 %v519, %v519
        %v538 = vpack.c.b16 %v520, %v520
        %v539 = vpack.c.b16 %v521, %v521
        %v540 = vpack.c.b16 %v522, %v522
        %v541 = vpack.c.b16 %v523, %v523
        %v542 = vpack.c.b16 %v524, %v524
        %v543 = vpack.c.b16 %v525, %v525
        %v544 = vpack.c.b16 %v526, %v526
        %v545 = vpack.c.b16 %v527, %v527
        %v546 = vpack.c.b16 %v528, %v528
        %v547 = vpack.c.b16 %v529, %v529
        %vm548 = vsmask.f32 7424
        %v550 = vshrl.u32 %v458, 16
        %v552 = vshll.u32 %v458, 16
        %v554 = vrot.slane %v552, 1
        %v555 = vor.u32 %v550, %v554
        %v557 = vshll.u32 %v530, 16
        %v559 = vrot.slane %v557, 1
        %v560 = vsel %vm548, %v555, %v559
        %v562 = vshrl.u32 %v459, 16
        %v564 = vshll.u32 %v459, 16
        %v566 = vrot.slane %v564, 1
        %v567 = vor.u32 %v562, %v566
        %v569 = vshll.u32 %v531, 16
        %v571 = vrot.slane %v569, 1
        %v572 = vsel %vm548, %v567, %v571
        %v574 = vshrl.u32 %v460, 16
        %v576 = vshll.u32 %v460, 16
        %v578 = vrot.slane %v576, 1
        %v579 = vor.u32 %v574, %v578
        %v581 = vshll.u32 %v532, 16
        %v583 = vrot.slane %v581, 1
        %v584 = vsel %vm548, %v579, %v583
        %v586 = vshrl.u32 %v461, 16
        %v588 = vshll.u32 %v461, 16
        %v590 = vrot.slane %v588, 1
        %v591 = vor.u32 %v586, %v590
        %v593 = vshll.u32 %v533, 16
        %v595 = vrot.slane %v593, 1
        %v596 = vsel %vm548, %v591, %v595
        %v598 = vshrl.u32 %v462, 16
        %v600 = vshll.u32 %v462, 16
        %v602 = vrot.slane %v600, 1
        %v603 = vor.u32 %v598, %v602
        %v605 = vshll.u32 %v534, 16
        %v607 = vrot.slane %v605, 1
        %v608 = vsel %vm548, %v603, %v607
        %v610 = vshrl.u32 %v463, 16
        %v612 = vshll.u32 %v463, 16
        %v614 = vrot.slane %v612, 1
        %v615 = vor.u32 %v610, %v614
        %v617 = vshll.u32 %v535, 16
        %v619 = vrot.slane %v617, 1
        %v620 = vsel %vm548, %v615, %v619
        %v622 = vshrl.u32 %v464, 16
        %v624 = vshll.u32 %v464, 16
        %v626 = vrot.slane %v624, 1
        %v627 = vor.u32 %v622, %v626
        %v629 = vshll.u32 %v536, 16
        %v631 = vrot.slane %v629, 1
        %v632 = vsel %vm548, %v627, %v631
        %v634 = vshrl.u32 %v465, 16
        %v636 = vshll.u32 %v465, 16
        %v638 = vrot.slane %v636, 1
        %v639 = vor.u32 %v634, %v638
        %v641 = vshll.u32 %v537, 16
        %v643 = vrot.slane %v641, 1
        %v644 = vsel %vm548, %v639, %v643
        %v646 = vshrl.u32 %v466, 16
        %v648 = vshll.u32 %v466, 16
        %v650 = vrot.slane %v648, 1
        %v651 = vor.u32 %v646, %v650
        %v653 = vshll.u32 %v538, 16
        %v655 = vrot.slane %v653, 1
        %v656 = vsel %vm548, %v651, %v655
        %v658 = vshrl.u32 %v467, 16
        %v660 = vshll.u32 %v467, 16
        %v662 = vrot.slane %v660, 1
        %v663 = vor.u32 %v658, %v662
        %v665 = vshll.u32 %v539, 16
        %v667 = vrot.slane %v665, 1
        %v668 = vsel %vm548, %v663, %v667
        %v670 = vshrl.u32 %v468, 16
        %v672 = vshll.u32 %v468, 16
        %v674 = vrot.slane %v672, 1
        %v675 = vor.u32 %v670, %v674
        %v677 = vshll.u32 %v540, 16
        %v679 = vrot.slane %v677, 1
        %v680 = vsel %vm548, %v675, %v679
        %v682 = vshrl.u32 %v469, 16
        %v684 = vshll.u32 %v469, 16
        %v686 = vrot.slane %v684, 1
        %v687 = vor.u32 %v682, %v686
        %v689 = vshll.u32 %v541, 16
        %v691 = vrot.slane %v689, 1
        %v692 = vsel %vm548, %v687, %v691
        %v694 = vshrl.u32 %v470, 16
        %v696 = vshll.u32 %v470, 16
        %v698 = vrot.slane %v696, 1
        %v699 = vor.u32 %v694, %v698
        %v701 = vshll.u32 %v542, 16
        %v703 = vrot.slane %v701, 1
        %v704 = vsel %vm548, %v699, %v703
        %v706 = vshrl.u32 %v471, 16
        %v708 = vshll.u32 %v471, 16
        %v710 = vrot.slane %v708, 1
        %v711 = vor.u32 %v706, %v710
        %v713 = vshll.u32 %v543, 16
        %v715 = vrot.slane %v713, 1
        %v716 = vsel %vm548, %v711, %v715
        %v718 = vshrl.u32 %v472, 16
        %v720 = vshll.u32 %v472, 16
        %v722 = vrot.slane %v720, 1
        %v723 = vor.u32 %v718, %v722
        %v725 = vshll.u32 %v544, 16
        %v727 = vrot.slane %v725, 1
        %v728 = vsel %vm548, %v723, %v727
        %v730 = vshrl.u32 %v473, 16
        %v732 = vshll.u32 %v473, 16
        %v734 = vrot.slane %v732, 1
        %v735 = vor.u32 %v730, %v734
        %v737 = vshll.u32 %v545, 16
        %v739 = vrot.slane %v737, 1
        %v740 = vsel %vm548, %v735, %v739
        %v742 = vshrl.u32 %v474, 16
        %v744 = vshll.u32 %v474, 16
        %v746 = vrot.slane %v744, 1
        %v747 = vor.u32 %v742, %v746
        %v749 = vshll.u32 %v546, 16
        %v751 = vrot.slane %v749, 1
        %v752 = vsel %vm548, %v747, %v751
        %v754 = vshrl.u32 %v475, 16
        %v756 = vshll.u32 %v475, 16
        %v758 = vrot.slane %v756, 1
        %v759 = vor.u32 %v754, %v758
        %v761 = vshll.u32 %v547, 16
        %v763 = vrot.slane %v761, 1
        %v764 = vsel %vm548, %v759, %v763
        %vm783 = vcmask 1046528
        %v784 = vrot.slane %v458, 1
        %v785 = vrot.slane %v530, 1
        %v786 = vsel %vm783, %v784, %v785
        %v787 = vrot.slane %v459, 1
        %v788 = vrot.slane %v531, 1
        %v789 = vsel %vm783, %v787, %v788
        %v790 = vrot.slane %v460, 1
        %v791 = vrot.slane %v532, 1
        %v792 = vsel %vm783, %v790, %v791
        %v793 = vrot.slane %v461, 1
        %v794 = vrot.slane %v533, 1
        %v795 = vsel %vm783, %v793, %v794
        %v796 = vrot.slane %v462, 1
        %v797 = vrot.slane %v534, 1
        %v798 = vsel %vm783, %v796, %v797
        %v799 = vrot.slane %v463, 1
        %v800 = vrot.slane %v535, 1
        %v801 = vsel %vm783, %v799, %v800
        %v802 = vrot.slane %v464, 1
        %v803 = vrot.slane %v536, 1
        %v804 = vsel %vm783, %v802, %v803
        %v805 = vrot.slane %v465, 1
        %v806 = vrot.slane %v537, 1
        %v807 = vsel %vm783, %v805, %v806
        %v808 = vrot.slane %v466, 1
        %v809 = vrot.slane %v538, 1
        %v810 = vsel %vm783, %v808, %v809
        %v811 = vrot.slane %v467, 1
        %v812 = vrot.slane %v539, 1
        %v813 = vsel %vm783, %v811, %v812
        %v814 = vrot.slane %v468, 1
        %v815 = vrot.slane %v540, 1
        %v816 = vsel %vm783, %v814, %v815
        %v817 = vrot.slane %v469, 1
        %v818 = vrot.slane %v541, 1
        %v819 = vsel %vm783, %v817, %v818
        %v820 = vrot.slane %v470, 1
        %v821 = vrot.slane %v542, 1
        %v822 = vsel %vm783, %v820, %v821
        %v823 = vrot.slane %v471, 1
        %v824 = vrot.slane %v543, 1
        %v825 = vsel %vm783, %v823, %v824
        %v826 = vrot.slane %v472, 1
        %v827 = vrot.slane %v544, 1
        %v828 = vsel %vm783, %v826, %v827
        %v829 = vrot.slane %v473, 1
        %v830 = vrot.slane %v545, 1
        %v831 = vsel %vm783, %v829, %v830
        %v832 = vrot.slane %v474, 1
        %v833 = vrot.slane %v546, 1
        %v834 = vsel %vm783, %v832, %v833
        %v835 = vrot.slane %v475, 1
        %v836 = vrot.slane %v547, 1
        %v837 = vsel %vm783, %v835, %v836
        %v856 = vld [vmem:[%s1] sm:$0xf]
        %v857 = vld [vmem:[%s1 + $0x4] sm:$0xf]
        %v858 = vld [vmem:[%s1 + $0x8] sm:$0xf]
        %v859 = vld [vmem:[%s1 + $0xc] sm:$0xf]
        %v860 = vld [vmem:[%s1 + $0x10] sm:$0xf]
        %v861 = vld [vmem:[%s1 + $0x14] sm:$0xf]
        %v862 = vld [vmem:[%s1 + $0x18] sm:$0xf]
        %v863 = vld [vmem:[%s1 + $0x1c] sm:$0xf]
        %v864 = vld [vmem:[%s1 + $0x20] sm:$0xf]
        %v865 = vld [vmem:[%s1 + $0x24] sm:$0xf]
        %v866 = vld [vmem:[%s1 + $0x28] sm:$0xf]
        %v867 = vld [vmem:[%s1 + $0x2c] sm:$0xf]
        %v868 = vld [vmem:[%s1 + $0x30] sm:$0xf]
        %v869 = vld [vmem:[%s1 + $0x34] sm:$0xf]
        %v870 = vld [vmem:[%s1 + $0x38] sm:$0xf]
        %v871 = vld [vmem:[%s1 + $0x3c] sm:$0xf]
        %v872 = vld [vmem:[%s1 + $0x40] sm:$0xf]
        %v873 = vld [vmem:[%s1 + $0x44] sm:$0xf]
        %v874 = vld [vmem:[%s1 + $0x48] sm:$0xf]
        %v875 = vld [vmem:[%s1 + $0x4c] sm:$0xf]
        %v876 = vld [vmem:[%s1 + $0x50] sm:$0xf]
        %v877 = vld [vmem:[%s1 + $0x54] sm:$0xf]
        %v878 = vld [vmem:[%s1 + $0x58] sm:$0xf]
        %v879 = vld [vmem:[%s1 + $0x5c] sm:$0xf]
        %v880 = vld [vmem:[%s1 + $0x60] sm:$0xf]
        %v881 = vld [vmem:[%s1 + $0x64] sm:$0xf]
        %v882 = vld [vmem:[%s1 + $0x68] sm:$0xf]
        %v883 = vld [vmem:[%s1 + $0x6c] sm:$0xf]
        %v884 = vld [vmem:[%s1 + $0x70] sm:$0xf]
        %v885 = vld [vmem:[%s1 + $0x74] sm:$0xf]
        %v886 = vld [vmem:[%s1 + $0x78] sm:$0xf]
        %v887 = vld [vmem:[%s1 + $0x7c] sm:$0xf]
        %v888 = vld [vmem:[%s1 + $0x80] sm:$0xf]
        %v889 = vld [vmem:[%s1 + $0x84] sm:$0xf]
        %v890 = vld [vmem:[%s1 + $0x88] sm:$0xf]
        %v891 = vld [vmem:[%s1 + $0x8c] sm:$0xf]
        %v892 = vld [vmem:[%s1 + $0x90] sm:$0xf]
        %v893 = vld [vmem:[%s1 + $0x94] sm:$0xf]
        %v894 = vld [vmem:[%s1 + $0x98] sm:$0xf]
        %v895 = vld [vmem:[%s1 + $0x9c] sm:$0xf]
        %v896 = vld [vmem:[%s1 + $0xa0] sm:$0xf]
        %v897 = vld [vmem:[%s1 + $0xa4] sm:$0xf]
        %v898 = vld [vmem:[%s1 + $0xa8] sm:$0xf]
        %v899 = vld [vmem:[%s1 + $0xac] sm:$0xf]
        %v900 = vld [vmem:[%s1 + $0xb0] sm:$0xf]
        %v901 = vld [vmem:[%s1 + $0xb4] sm:$0xf]
        %v902 = vld [vmem:[%s1 + $0xb8] sm:$0xf]
        %v903 = vld [vmem:[%s1 + $0xbc] sm:$0xf]
        %s904 = scalar_lea.vmem %s1, 192
        %v905 = vld [vmem:[%s904] sm:$0xf]
        %v906 = vld [vmem:[%s904 + $0x4] sm:$0xf]
        %v907 = vld [vmem:[%s904 + $0x8] sm:$0xf]
        %v908 = vld [vmem:[%s904 + $0xc] sm:$0xf]
        %v909 = vld [vmem:[%s904 + $0x10] sm:$0xf]
        %v910 = vld [vmem:[%s904 + $0x14] sm:$0xf]
        %v911 = vld [vmem:[%s904 + $0x18] sm:$0xf]
        %v912 = vld [vmem:[%s904 + $0x1c] sm:$0xf]
        %v913 = vld [vmem:[%s904 + $0x20] sm:$0xf]
        %v914 = vld [vmem:[%s904 + $0x24] sm:$0xf]
        %v915 = vld [vmem:[%s904 + $0x28] sm:$0xf]
        %v916 = vld [vmem:[%s904 + $0x2c] sm:$0xf]
        %v917 = vld [vmem:[%s904 + $0x30] sm:$0xf]
        %v918 = vld [vmem:[%s904 + $0x34] sm:$0xf]
        %v919 = vld [vmem:[%s904 + $0x38] sm:$0xf]
        %v920 = vld [vmem:[%s904 + $0x3c] sm:$0xf]
        %v921 = vld [vmem:[%s904 + $0x40] sm:$0xf]
        %v922 = vld [vmem:[%s904 + $0x44] sm:$0xf]
        %v923 = vld [vmem:[%s904 + $0x48] sm:$0xf]
        %v924 = vld [vmem:[%s904 + $0x4c] sm:$0xf]
        %v925 = vld [vmem:[%s904 + $0x50] sm:$0xf]
        %v926 = vld [vmem:[%s904 + $0x54] sm:$0xf]
        %v927 = vld [vmem:[%s904 + $0x58] sm:$0xf]
        %v928 = vld [vmem:[%s904 + $0x5c] sm:$0xf]
        %v929 = vld [vmem:[%s904 + $0x60] sm:$0xf]
        %v930 = vld [vmem:[%s904 + $0x64] sm:$0xf]
        %v931 = vld [vmem:[%s904 + $0x68] sm:$0xf]
        %v932 = vld [vmem:[%s904 + $0x6c] sm:$0xf]
        %v933 = vld [vmem:[%s904 + $0x70] sm:$0xf]
        %v934 = vld [vmem:[%s904 + $0x74] sm:$0xf]
        %v935 = vld [vmem:[%s904 + $0x78] sm:$0xf]
        %v936 = vld [vmem:[%s904 + $0x7c] sm:$0xf]
        %v937 = vld [vmem:[%s904 + $0x80] sm:$0xf]
        %v938 = vld [vmem:[%s904 + $0x84] sm:$0xf]
        %v939 = vld [vmem:[%s904 + $0x88] sm:$0xf]
        %v940 = vld [vmem:[%s904 + $0x8c] sm:$0xf]
        %v941 = vld [vmem:[%s904 + $0x90] sm:$0xf]
        %v942 = vld [vmem:[%s904 + $0x94] sm:$0xf]
        %v943 = vld [vmem:[%s904 + $0x98] sm:$0xf]
        %v944 = vld [vmem:[%s904 + $0x9c] sm:$0xf]
        %v945 = vld [vmem:[%s904 + $0xa0] sm:$0xf]
        %v946 = vld [vmem:[%s904 + $0xa4] sm:$0xf]
        %v947 = vld [vmem:[%s904 + $0xa8] sm:$0xf]
        %v948 = vld [vmem:[%s904 + $0xac] sm:$0xf]
        %v949 = vld [vmem:[%s904 + $0xb0] sm:$0xf]
        %v950 = vld [vmem:[%s904 + $0xb4] sm:$0xf]
        %v951 = vld [vmem:[%s904 + $0xb8] sm:$0xf]
        %v952 = vld [vmem:[%s904 + $0xbc] sm:$0xf]
        %v1001 = vunpack.c.l.b16 %v905
        %v1002 = vunpack.c.l.b16 %v906
        %v1003 = vunpack.c.l.b16 %v907
        %v1004 = vunpack.c.l.b16 %v908
        %v1005 = vunpack.c.l.b16 %v909
        %v1006 = vunpack.c.l.b16 %v910
        %v1007 = vunpack.c.l.b16 %v911
        %v1008 = vunpack.c.l.b16 %v912
        %v1009 = vunpack.c.l.b16 %v913
        %v1010 = vunpack.c.l.b16 %v914
        %v1011 = vunpack.c.l.b16 %v915
        %v1012 = vunpack.c.l.b16 %v916
        %v1013 = vunpack.c.l.b16 %v917
        %v1014 = vunpack.c.l.b16 %v918
        %v1015 = vunpack.c.l.b16 %v919
        %v1016 = vunpack.c.l.b16 %v920
        %v1017 = vunpack.c.l.b16 %v921
        %v1018 = vunpack.c.l.b16 %v922
        %v1019 = vunpack.c.l.b16 %v923
        %v1020 = vunpack.c.l.b16 %v924
        %v1021 = vunpack.c.l.b16 %v925
        %v1022 = vunpack.c.l.b16 %v926
        %v1023 = vunpack.c.l.b16 %v927
        %v1024 = vunpack.c.l.b16 %v928
        %v1025 = vunpack.c.l.b16 %v929
        %v1026 = vunpack.c.l.b16 %v930
        %v1027 = vunpack.c.l.b16 %v931
        %v1028 = vunpack.c.l.b16 %v932
        %v1029 = vunpack.c.l.b16 %v933
        %v1030 = vunpack.c.l.b16 %v934
        %v1031 = vunpack.c.l.b16 %v935
        %v1032 = vunpack.c.l.b16 %v936
        %v1033 = vunpack.c.l.b16 %v937
        %v1034 = vunpack.c.l.b16 %v938
        %v1035 = vunpack.c.l.b16 %v939
        %v1036 = vunpack.c.l.b16 %v940
        %v1037 = vunpack.c.l.b16 %v941
        %v1038 = vunpack.c.l.b16 %v942
        %v1039 = vunpack.c.l.b16 %v943
        %v1040 = vunpack.c.l.b16 %v944
        %v1041 = vunpack.c.l.b16 %v945
        %v1042 = vunpack.c.l.b16 %v946
        %v1043 = vunpack.c.l.b16 %v947
        %v1044 = vunpack.c.l.b16 %v948
        %v1045 = vunpack.c.l.b16 %v949
        %v1046 = vunpack.c.l.b16 %v950
        %v1047 = vunpack.c.l.b16 %v951
        %v1048 = vunpack.c.l.b16 %v952
        %v1049 = vpack.c.b16 %v1002, %v1001
        %v1050 = vpack.c.b16 %v1004, %v1003
        %v1051 = vpack.c.b16 %v1006, %v1005
        %v1052 = vpack.c.b16 %v1008, %v1007
        %v1053 = vpack.c.b16 %v1010, %v1009
        %v1054 = vpack.c.b16 %v1012, %v1011
        %v1055 = vpack.c.b16 %v1014, %v1013
        %v1056 = vpack.c.b16 %v1016, %v1015
        %v1057 = vpack.c.b16 %v1018, %v1017
        %v1058 = vpack.c.b16 %v1020, %v1019
        %v1059 = vpack.c.b16 %v1022, %v1021
        %v1060 = vpack.c.b16 %v1024, %v1023
        %v1061 = vpack.c.b16 %v1026, %v1025
        %v1062 = vpack.c.b16 %v1028, %v1027
        %v1063 = vpack.c.b16 %v1030, %v1029
        %v1064 = vpack.c.b16 %v1032, %v1031
        %v1065 = vpack.c.b16 %v1034, %v1033
        %v1066 = vpack.c.b16 %v1036, %v1035
        %v1067 = vpack.c.b16 %v1038, %v1037
        %v1068 = vpack.c.b16 %v1040, %v1039
        %v1069 = vpack.c.b16 %v1042, %v1041
        %v1070 = vpack.c.b16 %v1044, %v1043
        %v1071 = vpack.c.b16 %v1046, %v1045
        %v1072 = vpack.c.b16 %v1048, %v1047
        %1097 = vmatprep.subr.bf16.mxu0 0
        %1098 = vmatpush1.bf16.msra.mxu0 %v1049
        %1099 = vmatprep.subr.bf16.mxu0 0
        %1100 = vmatpush1.bf16.msra.mxu0 %v1050
        %1101 = vmatprep.subr.bf16.mxu0 0
        %1102 = vmatpush1.bf16.msra.mxu0 %v1051
        %1103 = vmatprep.subr.bf16.mxu0 0
        %1104 = vmatpush1.bf16.msra.mxu0 %v1052
        %1105 = vmatprep.subr.bf16.mxu0 0
        %1106 = vmatpush1.bf16.msra.mxu0 %v1053
        %1107 = vmatprep.subr.bf16.mxu0 0
        %1108 = vmatpush1.bf16.msra.mxu0 %v1054
        %1109 = vmatprep.subr.bf16.mxu0 0
        %1110 = vmatpush1.bf16.msra.mxu0 %v1055
        %1111 = vmatprep.subr.bf16.mxu0 0
        %1112 = vmatpush1.bf16.msra.mxu0 %v1056
        %1113 = vmatprep.subr.bf16.mxu0 0
        %1114 = vmatpush1.bf16.msra.mxu0 %v1057
        %1115 = vmatprep.subr.bf16.mxu0 0
        %1116 = vmatpush1.bf16.msra.mxu0 %v1058
        %1117 = vmatprep.subr.bf16.mxu0 0
        %1118 = vmatpush1.bf16.msra.mxu0 %v1059
        %1119 = vmatprep.subr.bf16.mxu0 0
        %1120 = vmatpush1.bf16.msra.mxu0 %v1060
        %1121 = vmatprep.subr.bf16.mxu0 0
        %1122 = vmatpush1.bf16.msra.mxu0 %v1061
        %1123 = vmatprep.subr.bf16.mxu0 0
        %1124 = vmatpush1.bf16.msra.mxu0 %v1062
        %1125 = vmatprep.subr.bf16.mxu0 0
        %1126 = vmatpush1.bf16.msra.mxu0 %v1063
        %1127 = vmatprep.subr.bf16.mxu0 0
        %1128 = vmatpush1.bf16.msra.mxu0 %v1064
        %1129 = vmatprep.mubr.bf16.mxu0 %v572
        %1130 = vmatmul.mubr.bf16.gmra.mrb[0].mxu0 %v459
        %v1131 = vpop.f32.mrb[0].mxu0
        %v1132 = vadd.f32 0.0, %v1131
        %v1133 = vpop.f32.mrb[0].mxu0
        %v1134 = vpop.f32.mrb[0].mxu0
        %v1135 = vadd.f32 0.0, %v1134
        %v1136 = vpop.f32.mrb[0].mxu0
        %1137 = vmatprep.mubr.bf16.mxu0 %v584
        %1138 = vmatmul.mubr.bf16.gmra.mrb[0].mxu0 %v460
        %v1139 = vpop.f32.mrb[0].mxu0
        %v1140 = vadd.f32 0.0, %v1139
        %v1141 = vpop.f32.mrb[0].mxu0
        %v1142 = vpop.f32.mrb[0].mxu0
        %v1143 = vadd.f32 0.0, %v1142
        %v1144 = vpop.f32.mrb[0].mxu0
        %1145 = vmatprep.mubr.bf16.mxu0 %v596
        %1146 = vmatmul.mubr.bf16.gmra.mrb[0].mxu0 %v461
        %v1147 = vpop.f32.mrb[0].mxu0
        %v1148 = vadd.f32 0.0, %v1147
        %v1149 = vpop.f32.mrb[0].mxu0
        %v1150 = vpop.f32.mrb[0].mxu0
        %v1151 = vadd.f32 0.0, %v1150
        %v1152 = vpop.f32.mrb[0].mxu0
        %1153 = vmatprep.mubr.bf16.mxu0 %v608
        %1154 = vmatmul.mubr.bf16.gmra.mrb[0].mxu0 %v462
        %v1155 = vpop.f32.mrb[0].mxu0
        %v1156 = vadd.f32 0.0, %v1155
        %v1157 = vpop.f32.mrb[0].mxu0
        %v1158 = vpop.f32.mrb[0].mxu0
        %v1159 = vadd.f32 0.0, %v1158
        %v1160 = vpop.f32.mrb[0].mxu0
        %1161 = vmatprep.mubr.bf16.mxu0 %v620
        %1162 = vmatmul.mubr.bf16.gmra.mrb[0].mxu0 %v463
        %v1163 = vpop.f32.mrb[0].mxu0
        %v1164 = vadd.f32 0.0, %v1163
        %v1165 = vpop.f32.mrb[0].mxu0
        %v1166 = vpop.f32.mrb[0].mxu0
        %v1167 = vadd.f32 0.0, %v1166
        %v1168 = vpop.f32.mrb[0].mxu0
        %1169 = vmatprep.mubr.bf16.mxu0 %v632
        %1170 = vmatmul.mubr.bf16.gmra.mrb[0].mxu0 %v464
        %v1171 = vpop.f32.mrb[0].mxu0
        %v1172 = vadd.f32 0.0, %v1171
        %v1173 = vpop.f32.mrb[0].mxu0
        %v1174 = vpop.f32.mrb[0].mxu0
        %v1175 = vadd.f32 0.0, %v1174
        %v1176 = vpop.f32.mrb[0].mxu0
        %1177 = vmatprep.mubr.bf16.mxu0 %v644
        %1178 = vmatmul.mubr.bf16.gmra.mrb[0].mxu0 %v465
        %v1179 = vpop.f32.mrb[0].mxu0
        %v1180 = vadd.f32 0.0, %v1179
        %v1181 = vpop.f32.mrb[0].mxu0
        %v1182 = vpop.f32.mrb[0].mxu0
        %v1183 = vadd.f32 0.0, %v1182
        %v1184 = vpop.f32.mrb[0].mxu0
        %1185 = vmatprep.mubr.bf16.mxu0 %v656
        %1186 = vmatmul.mubr.bf16.gmra.mrb[0].mxu0 %v466
        %v1187 = vpop.f32.mrb[0].mxu0
        %v1188 = vadd.f32 0.0, %v1187
        %v1189 = vpop.f32.mrb[0].mxu0
        %v1190 = vpop.f32.mrb[0].mxu0
        %v1191 = vadd.f32 0.0, %v1190
        %v1192 = vpop.f32.mrb[0].mxu0
        %1193 = vmatprep.mubr.bf16.mxu0 %v668
        %1194 = vmatmul.mubr.bf16.gmra.mrb[0].mxu0 %v467
        %v1195 = vpop.f32.mrb[0].mxu0
        %v1196 = vadd.f32 0.0, %v1195
        %v1197 = vpop.f32.mrb[0].mxu0
        %v1198 = vpop.f32.mrb[0].mxu0
        %v1199 = vadd.f32 0.0, %v1198
        %v1200 = vpop.f32.mrb[0].mxu0
        %1201 = vmatprep.mubr.bf16.mxu0 %v680
        %1202 = vmatmul.mubr.bf16.gmra.mrb[0].mxu0 %v468
        %v1203 = vpop.f32.mrb[0].mxu0
        %v1204 = vadd.f32 0.0, %v1203
        %v1205 = vpop.f32.mrb[0].mxu0
        %v1206 = vpop.f32.mrb[0].mxu0
        %v1207 = vadd.f32 0.0, %v1206
        %v1208 = vpop.f32.mrb[0].mxu0
        %1209 = vmatprep.mubr.bf16.mxu0 %v692
        %1210 = vmatmul.mubr.bf16.gmra.mrb[0].mxu0 %v469
        %v1211 = vpop.f32.mrb[0].mxu0
        %v1212 = vadd.f32 0.0, %v1211
        %v1213 = vpop.f32.mrb[0].mxu0
        %v1214 = vpop.f32.mrb[0].mxu0
        %v1215 = vadd.f32 0.0, %v1214
        %v1216 = vpop.f32.mrb[0].mxu0
        %1217 = vmatprep.mubr.bf16.mxu0 %v704
        %1218 = vmatmul.mubr.bf16.gmra.mrb[0].mxu0 %v470
        %v1219 = vpop.f32.mrb[0].mxu0
        %v1220 = vadd.f32 0.0, %v1219
        %v1221 = vpop.f32.mrb[0].mxu0
        %v1222 = vpop.f32.mrb[0].mxu0
        %v1223 = vadd.f32 0.0, %v1222
        %v1224 = vpop.f32.mrb[0].mxu0
        %1225 = vmatprep.mubr.bf16.mxu0 %v716
        %1226 = vmatmul.mubr.bf16.gmra.mrb[0].mxu0 %v471
        %v1227 = vpop.f32.mrb[0].mxu0
        %v1228 = vadd.f32 0.0, %v1227
        %v1229 = vpop.f32.mrb[0].mxu0
        %v1230 = vpop.f32.mrb[0].mxu0
        %v1231 = vadd.f32 0.0, %v1230
        %v1232 = vpop.f32.mrb[0].mxu0
        %1233 = vmatprep.mubr.bf16.mxu0 %v728
        %1234 = vmatmul.mubr.bf16.gmra.mrb[0].mxu0 %v472
        %v1235 = vpop.f32.mrb[0].mxu0
        %v1236 = vadd.f32 0.0, %v1235
        %v1237 = vpop.f32.mrb[0].mxu0
        %v1238 = vpop.f32.mrb[0].mxu0
        %v1239 = vadd.f32 0.0, %v1238
        %v1240 = vpop.f32.mrb[0].mxu0
        %1241 = vmatprep.mubr.bf16.mxu0 %v740
        %1242 = vmatmul.mubr.bf16.gmra.mrb[0].mxu0 %v473
        %v1243 = vpop.f32.mrb[0].mxu0
        %v1244 = vadd.f32 0.0, %v1243
        %v1245 = vpop.f32.mrb[0].mxu0
        %v1246 = vpop.f32.mrb[0].mxu0
        %v1247 = vadd.f32 0.0, %v1246
        %v1248 = vpop.f32.mrb[0].mxu0
        %1249 = vmatprep.mubr.bf16.mxu0 %v752
        %1250 = vmatmul.mubr.bf16.gmra.mrb[0].mxu0 %v474
        %v1251 = vpop.f32.mrb[0].mxu0
        %v1252 = vadd.f32 0.0, %v1251
        %v1253 = vpop.f32.mrb[0].mxu0
        %v1254 = vpop.f32.mrb[0].mxu0
        %v1255 = vadd.f32 0.0, %v1254
        %v1256 = vpop.f32.mrb[0].mxu0
        %1257 = vdwg.mxu0
        %1258 = vmatprep.subr.bf16.mxu0 0
        %1259 = vmatpush1.bf16.msra.mxu0 %v1065
        %1260 = vmatprep.subr.bf16.mxu0 0
        %1261 = vmatpush1.bf16.msra.mxu0 %v1066
        %1262 = vmatprep.subr.bf16.mxu0 0
        %1263 = vmatpush1.bf16.msra.mxu0 %v1067
        %1264 = vmatprep.subr.bf16.mxu0 0
        %1265 = vmatpush1.bf16.msra.mxu0 %v1068
        %1266 = vmatprep.subr.bf16.mxu0 0
        %1267 = vmatpush1.bf16.msra.mxu0 %v1069
        %1268 = vmatprep.subr.bf16.mxu0 0
        %1269 = vmatpush1.bf16.msra.mxu0 %v1070
        %1270 = vmatprep.subr.bf16.mxu0 0
        %1271 = vmatpush1.bf16.msra.mxu0 %v1071
        %1272 = vmatprep.subr.bf16.mxu0 0
        %1273 = vmatpush1.bf16.msra.mxu0 %v1072
        %1274 = vmatprep.subr.bf16.mxu0 0
        %1275 = vmatpush1.bf16.msra.mxu0 0
        %1276 = vmatprep.subr.bf16.mxu0 0
        %1277 = vmatpush1.bf16.msra.mxu0 0
        %1278 = vmatprep.subr.bf16.mxu0 0
        %1279 = vmatpush1.bf16.msra.mxu0 0
        %1280 = vmatprep.subr.bf16.mxu0 0
        %1281 = vmatpush1.bf16.msra.mxu0 0
        %1282 = vmatprep.subr.bf16.mxu0 0
        %1283 = vmatpush1.bf16.msra.mxu0 0
        %1284 = vmatprep.subr.bf16.mxu0 0
        %1285 = vmatpush1.bf16.msra.mxu0 0
        %1286 = vmatprep.subr.bf16.mxu0 0
        %1287 = vmatpush1.bf16.msra.mxu0 0
        %1288 = vmatprep.subr.bf16.mxu0 0
        %1289 = vmatpush1.bf16.msra.mxu0 0
        %1290 = vmatprep.mubr.bf16.mxu0 0
        %1291 = vmatmul.mubr.bf16.gmra.mrb[0].mxu0 %v789
        %v1292 = vpop.f32.mrb[0].mxu0
        %v1293 = vadd.f32 %v1132, %v1292
        %v1294 = vpop.f32.mrb[0].mxu0
        %v1295 = vpop.f32.mrb[0].mxu0
        %v1296 = vadd.f32 %v1135, %v1295
        %v1297 = vpop.f32.mrb[0].mxu0
        %1298 = vmatprep.mubr.bf16.mxu0 0
        %1299 = vmatmul.mubr.bf16.gmra.mrb[0].mxu0 %v792
        %v1300 = vpop.f32.mrb[0].mxu0
        %v1301 = vadd.f32 %v1140, %v1300
        %v1302 = vpop.f32.mrb[0].mxu0
        %v1303 = vpop.f32.mrb[0].mxu0
        %v1304 = vadd.f32 %v1143, %v1303
        %v1305 = vpop.f32.mrb[0].mxu0
        %1306 = vmatprep.mubr.bf16.mxu0 0
        %1307 = vmatmul.mubr.bf16.gmra.mrb[0].mxu0 %v795
        %v1308 = vpop.f32.mrb[0].mxu0
        %v1309 = vadd.f32 %v1148, %v1308
        %v1310 = vpop.f32.mrb[0].mxu0
        %v1311 = vpop.f32.mrb[0].mxu0
        %v1312 = vadd.f32 %v1151, %v1311
        %v1313 = vpop.f32.mrb[0].mxu0
        %1314 = vmatprep.mubr.bf16.mxu0 0
        %1315 = vmatmul.mubr.bf16.gmra.mrb[0].mxu0 %v798
        %v1316 = vpop.f32.mrb[0].mxu0
        %v1317 = vadd.f32 %v1156, %v1316
        %v1318 = vpop.f32.mrb[0].mxu0
        %v1319 = vpop.f32.mrb[0].mxu0
        %v1320 = vadd.f32 %v1159, %v1319
        %v1321 = vpop.f32.mrb[0].mxu0
        %1322 = vmatprep.mubr.bf16.mxu0 0
        %1323 = vmatmul.mubr.bf16.gmra.mrb[0].mxu0 %v801
        %v1324 = vpop.f32.mrb[0].mxu0
        %v1325 = vadd.f32 %v1164, %v1324
        %v1326 = vpop.f32.mrb[0].mxu0
        %v1327 = vpop.f32.mrb[0].mxu0
        %v1328 = vadd.f32 %v1167, %v1327
        %v1329 = vpop.f32.mrb[0].mxu0
        %1330 = vmatprep.mubr.bf16.mxu0 0
        %1331 = vmatmul.mubr.bf16.gmra.mrb[0].mxu0 %v804
        %v1332 = vpop.f32.mrb[0].mxu0
        %v1333 = vadd.f32 %v1172, %v1332
        %v1334 = vpop.f32.mrb[0].mxu0
        %v1335 = vpop.f32.mrb[0].mxu0
        %v1336 = vadd.f32 %v1175, %v1335
        %v1337 = vpop.f32.mrb[0].mxu0
        %1338 = vmatprep.mubr.bf16.mxu0 0
        %1339 = vmatmul.mubr.bf16.gmra.mrb[0].mxu0 %v807
        %v1340 = vpop.f32.mrb[0].mxu0
        %v1341 = vadd.f32 %v1180, %v1340
        %v1342 = vpop.f32.mrb[0].mxu0
        %v1343 = vpop.f32.mrb[0].mxu0
        %v1344 = vadd.f32 %v1183, %v1343
        %v1345 = vpop.f32.mrb[0].mxu0
        %1346 = vmatprep.mubr.bf16.mxu0 0
        %1347 = vmatmul.mubr.bf16.gmra.mrb[0].mxu0 %v810
        %v1348 = vpop.f32.mrb[0].mxu0
        %v1349 = vadd.f32 %v1188, %v1348
        %v1350 = vpop.f32.mrb[0].mxu0
        %v1351 = vpop.f32.mrb[0].mxu0
        %v1352 = vadd.f32 %v1191, %v1351
        %v1353 = vpop.f32.mrb[0].mxu0
        %1354 = vmatprep.mubr.bf16.mxu0 0
        %1355 = vmatmul.mubr.bf16.gmra.mrb[0].mxu0 %v813
        %v1356 = vpop.f32.mrb[0].mxu0
        %v1357 = vadd.f32 %v1196, %v1356
        %v1358 = vpop.f32.mrb[0].mxu0
        %v1359 = vpop.f32.mrb[0].mxu0
        %v1360 = vadd.f32 %v1199, %v1359
        %v1361 = vpop.f32.mrb[0].mxu0
        %1362 = vmatprep.mubr.bf16.mxu0 0
        %1363 = vmatmul.mubr.bf16.gmra.mrb[0].mxu0 %v816
        %v1364 = vpop.f32.mrb[0].mxu0
        %v1365 = vadd.f32 %v1204, %v1364
        %v1366 = vpop.f32.mrb[0].mxu0
        %v1367 = vpop.f32.mrb[0].mxu0
        %v1368 = vadd.f32 %v1207, %v1367
        %v1369 = vpop.f32.mrb[0].mxu0
        %1370 = vmatprep.mubr.bf16.mxu0 0
        %1371 = vmatmul.mubr.bf16.gmra.mrb[0].mxu0 %v819
        %v1372 = vpop.f32.mrb[0].mxu0
        %v1373 = vadd.f32 %v1212, %v1372
        %v1374 = vpop.f32.mrb[0].mxu0
        %v1375 = vpop.f32.mrb[0].mxu0
        %v1376 = vadd.f32 %v1215, %v1375
        %v1377 = vpop.f32.mrb[0].mxu0
        %1378 = vmatprep.mubr.bf16.mxu0 0
        %1379 = vmatmul.mubr.bf16.gmra.mrb[0].mxu0 %v822
        %v1380 = vpop.f32.mrb[0].mxu0
        %v1381 = vadd.f32 %v1220, %v1380
        %v1382 = vpop.f32.mrb[0].mxu0
        %v1383 = vpop.f32.mrb[0].mxu0
        %v1384 = vadd.f32 %v1223, %v1383
        %v1385 = vpop.f32.mrb[0].mxu0
        %1386 = vmatprep.mubr.bf16.mxu0 0
        %1387 = vmatmul.mubr.bf16.gmra.mrb[0].mxu0 %v825
        %v1388 = vpop.f32.mrb[0].mxu0
        %v1389 = vadd.f32 %v1228, %v1388
        %v1390 = vpop.f32.mrb[0].mxu0
        %v1391 = vpop.f32.mrb[0].mxu0
        %v1392 = vadd.f32 %v1231, %v1391
        %v1393 = vpop.f32.mrb[0].mxu0
        %1394 = vmatprep.mubr.bf16.mxu0 0
        %1395 = vmatmul.mubr.bf16.gmra.mrb[0].mxu0 %v828
        %v1396 = vpop.f32.mrb[0].mxu0
        %v1397 = vadd.f32 %v1236, %v1396
        %v1398 = vpop.f32.mrb[0].mxu0
        %v1399 = vpop.f32.mrb[0].mxu0
        %v1400 = vadd.f32 %v1239, %v1399
        %v1401 = vpop.f32.mrb[0].mxu0
        %1402 = vmatprep.mubr.bf16.mxu0 0
        %1403 = vmatmul.mubr.bf16.gmra.mrb[0].mxu0 %v831
        %v1404 = vpop.f32.mrb[0].mxu0
        %v1405 = vadd.f32 %v1244, %v1404
        %v1406 = vpop.f32.mrb[0].mxu0
        %v1407 = vpop.f32.mrb[0].mxu0
        %v1408 = vadd.f32 %v1247, %v1407
        %v1409 = vpop.f32.mrb[0].mxu0
        %1410 = vmatprep.mubr.bf16.mxu0 0
        %1411 = vmatmul.mubr.bf16.gmra.mrb[0].mxu0 %v834
        %v1412 = vpop.f32.mrb[0].mxu0
        %v1413 = vadd.f32 %v1252, %v1412
        %v1414 = vpop.f32.mrb[0].mxu0
        %v1415 = vpop.f32.mrb[0].mxu0
        %v1416 = vadd.f32 %v1255, %v1415
        %v1417 = vpop.f32.mrb[0].mxu0
        %1418 = vdwg.mxu0
        %v1467 = vunpack.c.l.b16 %v856
        %v1468 = vunpack.c.l.b16 %v857
        %v1469 = vunpack.c.l.b16 %v858
        %v1470 = vunpack.c.l.b16 %v859
        %v1471 = vunpack.c.l.b16 %v860
        %v1472 = vunpack.c.l.b16 %v861
        %v1473 = vunpack.c.l.b16 %v862
        %v1474 = vunpack.c.l.b16 %v863
        %v1475 = vunpack.c.l.b16 %v864
        %v1476 = vunpack.c.l.b16 %v865
        %v1477 = vunpack.c.l.b16 %v866
        %v1478 = vunpack.c.l.b16 %v867
        %v1479 = vunpack.c.l.b16 %v868
        %v1480 = vunpack.c.l.b16 %v869
        %v1481 = vunpack.c.l.b16 %v870
        %v1482 = vunpack.c.l.b16 %v871
        %v1483 = vunpack.c.l.b16 %v872
        %v1484 = vunpack.c.l.b16 %v873
        %v1485 = vunpack.c.l.b16 %v874
        %v1486 = vunpack.c.l.b16 %v875
        %v1487 = vunpack.c.l.b16 %v876
        %v1488 = vunpack.c.l.b16 %v877
        %v1489 = vunpack.c.l.b16 %v878
        %v1490 = vunpack.c.l.b16 %v879
        %v1491 = vunpack.c.l.b16 %v880
        %v1492 = vunpack.c.l.b16 %v881
        %v1493 = vunpack.c.l.b16 %v882
        %v1494 = vunpack.c.l.b16 %v883
        %v1495 = vunpack.c.l.b16 %v884
        %v1496 = vunpack.c.l.b16 %v885
        %v1497 = vunpack.c.l.b16 %v886
        %v1498 = vunpack.c.l.b16 %v887
        %v1499 = vunpack.c.l.b16 %v888
        %v1500 = vunpack.c.l.b16 %v889
        %v1501 = vunpack.c.l.b16 %v890
        %v1502 = vunpack.c.l.b16 %v891
        %v1503 = vunpack.c.l.b16 %v892
        %v1504 = vunpack.c.l.b16 %v893
        %v1505 = vunpack.c.l.b16 %v894
        %v1506 = vunpack.c.l.b16 %v895
        %v1507 = vunpack.c.l.b16 %v896
        %v1508 = vunpack.c.l.b16 %v897
        %v1509 = vunpack.c.l.b16 %v898
        %v1510 = vunpack.c.l.b16 %v899
        %v1511 = vunpack.c.l.b16 %v900
        %v1512 = vunpack.c.l.b16 %v901
        %v1513 = vunpack.c.l.b16 %v902
        %v1514 = vunpack.c.l.b16 %v903
        %v1515 = vpack.c.b16 %v1468, %v1467
        %v1516 = vpack.c.b16 %v1470, %v1469
        %v1517 = vpack.c.b16 %v1472, %v1471
        %v1518 = vpack.c.b16 %v1474, %v1473
        %v1519 = vpack.c.b16 %v1476, %v1475
        %v1520 = vpack.c.b16 %v1478, %v1477
        %v1521 = vpack.c.b16 %v1480, %v1479
        %v1522 = vpack.c.b16 %v1482, %v1481
        %v1523 = vpack.c.b16 %v1484, %v1483
        %v1524 = vpack.c.b16 %v1486, %v1485
        %v1525 = vpack.c.b16 %v1488, %v1487
        %v1526 = vpack.c.b16 %v1490, %v1489
        %v1527 = vpack.c.b16 %v1492, %v1491
        %v1528 = vpack.c.b16 %v1494, %v1493
        %v1529 = vpack.c.b16 %v1496, %v1495
        %v1530 = vpack.c.b16 %v1498, %v1497
        %v1531 = vpack.c.b16 %v1500, %v1499
        %v1532 = vpack.c.b16 %v1502, %v1501
        %v1533 = vpack.c.b16 %v1504, %v1503
        %v1534 = vpack.c.b16 %v1506, %v1505
        %v1535 = vpack.c.b16 %v1508, %v1507
        %v1536 = vpack.c.b16 %v1510, %v1509
        %v1537 = vpack.c.b16 %v1512, %v1511
        %v1538 = vpack.c.b16 %v1514, %v1513
        %1563 = vmatprep.subr.bf16.mxu0 0
        %1564 = vmatpush1.bf16.msra.mxu0 %v1515
        %1565 = vmatprep.subr.bf16.mxu0 0
        %1566 = vmatpush1.bf16.msra.mxu0 %v1516
        %1567 = vmatprep.subr.bf16.mxu0 0
        %1568 = vmatpush1.bf16.msra.mxu0 %v1517
        %1569 = vmatprep.subr.bf16.mxu0 0
        %1570 = vmatpush1.bf16.msra.mxu0 %v1518
        %1571 = vmatprep.subr.bf16.mxu0 0
        %1572 = vmatpush1.bf16.msra.mxu0 %v1519
        %1573 = vmatprep.subr.bf16.mxu0 0
        %1574 = vmatpush1.bf16.msra.mxu0 %v1520
        %1575 = vmatprep.subr.bf16.mxu0 0
        %1576 = vmatpush1.bf16.msra.mxu0 %v1521
        %1577 = vmatprep.subr.bf16.mxu0 0
        %1578 = vmatpush1.bf16.msra.mxu0 %v1522
        %1579 = vmatprep.subr.bf16.mxu0 0
        %1580 = vmatpush1.bf16.msra.mxu0 %v1523
        %1581 = vmatprep.subr.bf16.mxu0 0
        %1582 = vmatpush1.bf16.msra.mxu0 %v1524
        %1583 = vmatprep.subr.bf16.mxu0 0
        %1584 = vmatpush1.bf16.msra.mxu0 %v1525
        %1585 = vmatprep.subr.bf16.mxu0 0
        %1586 = vmatpush1.bf16.msra.mxu0 %v1526
        %1587 = vmatprep.subr.bf16.mxu0 0
        %1588 = vmatpush1.bf16.msra.mxu0 %v1527
        %1589 = vmatprep.subr.bf16.mxu0 0
        %1590 = vmatpush1.bf16.msra.mxu0 %v1528
        %1591 = vmatprep.subr.bf16.mxu0 0
        %1592 = vmatpush1.bf16.msra.mxu0 %v1529
        %1593 = vmatprep.subr.bf16.mxu0 0
        %1594 = vmatpush1.bf16.msra.mxu0 %v1530
        %1595 = vmatprep.mubr.bf16.mxu0 %v560
        %1596 = vmatmul.mubr.bf16.gmra.mrb[0].mxu0 %v458
        %v1597 = vpop.f32.mrb[0].mxu0
        %v1598 = vadd.f32 %v1293, %v1597
        %v1599 = vpop.f32.mrb[0].mxu0
        %v1600 = vpop.f32.mrb[0].mxu0
        %v1601 = vadd.f32 %v1296, %v1600
        %v1602 = vpop.f32.mrb[0].mxu0
        %1603 = vmatprep.mubr.bf16.mxu0 %v572
        %1604 = vmatmul.mubr.bf16.gmra.mrb[0].mxu0 %v459
        %v1605 = vpop.f32.mrb[0].mxu0
        %v1606 = vadd.f32 %v1301, %v1605
        %v1607 = vpop.f32.mrb[0].mxu0
        %v1608 = vpop.f32.mrb[0].mxu0
        %v1609 = vadd.f32 %v1304, %v1608
        %v1610 = vpop.f32.mrb[0].mxu0
        %1611 = vmatprep.mubr.bf16.mxu0 %v584
        %1612 = vmatmul.mubr.bf16.gmra.mrb[0].mxu0 %v460
        %v1613 = vpop.f32.mrb[0].mxu0
        %v1614 = vadd.f32 %v1309, %v1613
        %v1615 = vpop.f32.mrb[0].mxu0
        %v1616 = vpop.f32.mrb[0].mxu0
        %v1617 = vadd.f32 %v1312, %v1616
        %v1618 = vpop.f32.mrb[0].mxu0
        %1619 = vmatprep.mubr.bf16.mxu0 %v596
        %1620 = vmatmul.mubr.bf16.gmra.mrb[0].mxu0 %v461
        %v1621 = vpop.f32.mrb[0].mxu0
        %v1622 = vadd.f32 %v1317, %v1621
        %v1623 = vpop.f32.mrb[0].mxu0
        %v1624 = vpop.f32.mrb[0].mxu0
        %v1625 = vadd.f32 %v1320, %v1624
        %v1626 = vpop.f32.mrb[0].mxu0
        %1627 = vmatprep.mubr.bf16.mxu0 %v608
        %1628 = vmatmul.mubr.bf16.gmra.mrb[0].mxu0 %v462
        %v1629 = vpop.f32.mrb[0].mxu0
        %v1630 = vadd.f32 %v1325, %v1629
        %v1631 = vpop.f32.mrb[0].mxu0
        %v1632 = vpop.f32.mrb[0].mxu0
        %v1633 = vadd.f32 %v1328, %v1632
        %v1634 = vpop.f32.mrb[0].mxu0
        %1635 = vmatprep.mubr.bf16.mxu0 %v620
        %1636 = vmatmul.mubr.bf16.gmra.mrb[0].mxu0 %v463
        %v1637 = vpop.f32.mrb[0].mxu0
        %v1638 = vadd.f32 %v1333, %v1637
        %v1639 = vpop.f32.mrb[0].mxu0
        %v1640 = vpop.f32.mrb[0].mxu0
        %v1641 = vadd.f32 %v1336, %v1640
        %v1642 = vpop.f32.mrb[0].mxu0
        %1643 = vmatprep.mubr.bf16.mxu0 %v632
        %1644 = vmatmul.mubr.bf16.gmra.mrb[0].mxu0 %v464
        %v1645 = vpop.f32.mrb[0].mxu0
        %v1646 = vadd.f32 %v1341, %v1645
        %v1647 = vpop.f32.mrb[0].mxu0
        %v1648 = vpop.f32.mrb[0].mxu0
        %v1649 = vadd.f32 %v1344, %v1648
        %v1650 = vpop.f32.mrb[0].mxu0
        %1651 = vmatprep.mubr.bf16.mxu0 %v644
        %1652 = vmatmul.mubr.bf16.gmra.mrb[0].mxu0 %v465
        %v1653 = vpop.f32.mrb[0].mxu0
        %v1654 = vadd.f32 %v1349, %v1653
        %v1655 = vpop.f32.mrb[0].mxu0
        %v1656 = vpop.f32.mrb[0].mxu0
        %v1657 = vadd.f32 %v1352, %v1656
        %v1658 = vpop.f32.mrb[0].mxu0
        %1659 = vmatprep.mubr.bf16.mxu0 %v656
        %1660 = vmatmul.mubr.bf16.gmra.mrb[0].mxu0 %v466
        %v1661 = vpop.f32.mrb[0].mxu0
        %v1662 = vadd.f32 %v1357, %v1661
        %v1663 = vpop.f32.mrb[0].mxu0
        %v1664 = vpop.f32.mrb[0].mxu0
        %v1665 = vadd.f32 %v1360, %v1664
        %v1666 = vpop.f32.mrb[0].mxu0
        %1667 = vmatprep.mubr.bf16.mxu0 %v668
        %1668 = vmatmul.mubr.bf16.gmra.mrb[0].mxu0 %v467
        %v1669 = vpop.f32.mrb[0].mxu0
        %v1670 = vadd.f32 %v1365, %v1669
        %v1671 = vpop.f32.mrb[0].mxu0
        %v1672 = vpop.f32.mrb[0].mxu0
        %v1673 = vadd.f32 %v1368, %v1672
        %v1674 = vpop.f32.mrb[0].mxu0
        %1675 = vmatprep.mubr.bf16.mxu0 %v680
        %1676 = vmatmul.mubr.bf16.gmra.mrb[0].mxu0 %v468
        %v1677 = vpop.f32.mrb[0].mxu0
        %v1678 = vadd.f32 %v1373, %v1677
        %v1679 = vpop.f32.mrb[0].mxu0
        %v1680 = vpop.f32.mrb[0].mxu0
        %v1681 = vadd.f32 %v1376, %v1680
        %v1682 = vpop.f32.mrb[0].mxu0
        %1683 = vmatprep.mubr.bf16.mxu0 %v692
        %1684 = vmatmul.mubr.bf16.gmra.mrb[0].mxu0 %v469
        %v1685 = vpop.f32.mrb[0].mxu0
        %v1686 = vadd.f32 %v1381, %v1685
        %v1687 = vpop.f32.mrb[0].mxu0
        %v1688 = vpop.f32.mrb[0].mxu0
        %v1689 = vadd.f32 %v1384, %v1688
        %v1690 = vpop.f32.mrb[0].mxu0
        %1691 = vmatprep.mubr.bf16.mxu0 %v704
        %1692 = vmatmul.mubr.bf16.gmra.mrb[0].mxu0 %v470
        %v1693 = vpop.f32.mrb[0].mxu0
        %v1694 = vadd.f32 %v1389, %v1693
        %v1695 = vpop.f32.mrb[0].mxu0
        %v1696 = vpop.f32.mrb[0].mxu0
        %v1697 = vadd.f32 %v1392, %v1696
        %v1698 = vpop.f32.mrb[0].mxu0
        %1699 = vmatprep.mubr.bf16.mxu0 %v716
        %1700 = vmatmul.mubr.bf16.gmra.mrb[0].mxu0 %v471
        %v1701 = vpop.f32.mrb[0].mxu0
        %v1702 = vadd.f32 %v1397, %v1701
        %v1703 = vpop.f32.mrb[0].mxu0
        %v1704 = vpop.f32.mrb[0].mxu0
        %v1705 = vadd.f32 %v1400, %v1704
        %v1706 = vpop.f32.mrb[0].mxu0
        %1707 = vmatprep.mubr.bf16.mxu0 %v728
        %1708 = vmatmul.mubr.bf16.gmra.mrb[0].mxu0 %v472
        %v1709 = vpop.f32.mrb[0].mxu0
        %v1710 = vadd.f32 %v1405, %v1709
        %v1711 = vpop.f32.mrb[0].mxu0
        %v1712 = vpop.f32.mrb[0].mxu0
        %v1713 = vadd.f32 %v1408, %v1712
        %v1714 = vpop.f32.mrb[0].mxu0
        %1715 = vmatprep.mubr.bf16.mxu0 %v740
        %1716 = vmatmul.mubr.bf16.gmra.mrb[0].mxu0 %v473
        %v1717 = vpop.f32.mrb[0].mxu0
        %v1718 = vadd.f32 %v1413, %v1717
        %v1719 = vpop.f32.mrb[0].mxu0
        %v1720 = vpop.f32.mrb[0].mxu0
        %v1721 = vadd.f32 %v1416, %v1720
        %v1722 = vpop.f32.mrb[0].mxu0
        %1723 = vdwg.mxu0
        %1724 = vmatprep.subr.bf16.mxu0 0
        %1725 = vmatpush1.bf16.msra.mxu0 %v1531
        %1726 = vmatprep.subr.bf16.mxu0 0
        %1727 = vmatpush1.bf16.msra.mxu0 %v1532
        %1728 = vmatprep.subr.bf16.mxu0 0
        %1729 = vmatpush1.bf16.msra.mxu0 %v1533
        %1730 = vmatprep.subr.bf16.mxu0 0
        %1731 = vmatpush1.bf16.msra.mxu0 %v1534
        %1732 = vmatprep.subr.bf16.mxu0 0
        %1733 = vmatpush1.bf16.msra.mxu0 %v1535
        %1734 = vmatprep.subr.bf16.mxu0 0
        %1735 = vmatpush1.bf16.msra.mxu0 %v1536
        %1736 = vmatprep.subr.bf16.mxu0 0
        %1737 = vmatpush1.bf16.msra.mxu0 %v1537
        %1738 = vmatprep.subr.bf16.mxu0 0
        %1739 = vmatpush1.bf16.msra.mxu0 %v1538
        %1740 = vmatprep.subr.bf16.mxu0 0
        %1741 = vmatpush1.bf16.msra.mxu0 0
        %1742 = vmatprep.subr.bf16.mxu0 0
        %1743 = vmatpush1.bf16.msra.mxu0 0
        %1744 = vmatprep.subr.bf16.mxu0 0
        %1745 = vmatpush1.bf16.msra.mxu0 0
        %1746 = vmatprep.subr.bf16.mxu0 0
        %1747 = vmatpush1.bf16.msra.mxu0 0
        %1748 = vmatprep.subr.bf16.mxu0 0
        %1749 = vmatpush1.bf16.msra.mxu0 0
        %1750 = vmatprep.subr.bf16.mxu0 0
        %1751 = vmatpush1.bf16.msra.mxu0 0
        %1752 = vmatprep.subr.bf16.mxu0 0
        %1753 = vmatpush1.bf16.msra.mxu0 0
        %1754 = vmatprep.subr.bf16.mxu0 0
        %1755 = vmatpush1.bf16.msra.mxu0 0
        %1756 = vmatprep.mubr.bf16.mxu0 0
        %1757 = vmatmul.mubr.bf16.gmra.mrb[0].mxu0 %v786
        %v1758 = vpop.f32.mrb[0].mxu0
        %v1759 = vadd.f32 %v1598, %v1758
        %v1760 = vpop.f32.mrb[0].mxu0
        %v1761 = vpop.f32.mrb[0].mxu0
        %v1762 = vadd.f32 %v1601, %v1761
        %v1763 = vpop.f32.mrb[0].mxu0
        %1764 = vmatprep.mubr.bf16.mxu0 0
        %1765 = vmatmul.mubr.bf16.gmra.mrb[0].mxu0 %v789
        %v1766 = vpop.f32.mrb[0].mxu0
        %v1767 = vadd.f32 %v1606, %v1766
        %v1768 = vpop.f32.mrb[0].mxu0
        %v1769 = vpop.f32.mrb[0].mxu0
        %v1770 = vadd.f32 %v1609, %v1769
        %v1771 = vpop.f32.mrb[0].mxu0
        %1772 = vmatprep.mubr.bf16.mxu0 0
        %1773 = vmatmul.mubr.bf16.gmra.mrb[0].mxu0 %v792
        %v1774 = vpop.f32.mrb[0].mxu0
        %v1775 = vadd.f32 %v1614, %v1774
        %v1776 = vpop.f32.mrb[0].mxu0
        %v1777 = vpop.f32.mrb[0].mxu0
        %v1778 = vadd.f32 %v1617, %v1777
        %v1779 = vpop.f32.mrb[0].mxu0
        %1780 = vmatprep.mubr.bf16.mxu0 0
        %1781 = vmatmul.mubr.bf16.gmra.mrb[0].mxu0 %v795
        %v1782 = vpop.f32.mrb[0].mxu0
        %v1783 = vadd.f32 %v1622, %v1782
        %v1784 = vpop.f32.mrb[0].mxu0
        %v1785 = vpop.f32.mrb[0].mxu0
        %v1786 = vadd.f32 %v1625, %v1785
        %v1787 = vpop.f32.mrb[0].mxu0
        %1788 = vmatprep.mubr.bf16.mxu0 0
        %1789 = vmatmul.mubr.bf16.gmra.mrb[0].mxu0 %v798
        %v1790 = vpop.f32.mrb[0].mxu0
        %v1791 = vadd.f32 %v1630, %v1790
        %v1792 = vpop.f32.mrb[0].mxu0
        %v1793 = vpop.f32.mrb[0].mxu0
        %v1794 = vadd.f32 %v1633, %v1793
        %v1795 = vpop.f32.mrb[0].mxu0
        %1796 = vmatprep.mubr.bf16.mxu0 0
        %1797 = vmatmul.mubr.bf16.gmra.mrb[0].mxu0 %v801
        %v1798 = vpop.f32.mrb[0].mxu0
        %v1799 = vadd.f32 %v1638, %v1798
        %v1800 = vpop.f32.mrb[0].mxu0
        %v1801 = vpop.f32.mrb[0].mxu0
        %v1802 = vadd.f32 %v1641, %v1801
        %v1803 = vpop.f32.mrb[0].mxu0
        %1804 = vmatprep.mubr.bf16.mxu0 0
        %1805 = vmatmul.mubr.bf16.gmra.mrb[0].mxu0 %v804
        %v1806 = vpop.f32.mrb[0].mxu0
        %v1807 = vadd.f32 %v1646, %v1806
        %v1808 = vpop.f32.mrb[0].mxu0
        %v1809 = vpop.f32.mrb[0].mxu0
        %v1810 = vadd.f32 %v1649, %v1809
        %v1811 = vpop.f32.mrb[0].mxu0
        %1812 = vmatprep.mubr.bf16.mxu0 0
        %1813 = vmatmul.mubr.bf16.gmra.mrb[0].mxu0 %v807
        %v1814 = vpop.f32.mrb[0].mxu0
        %v1815 = vadd.f32 %v1654, %v1814
        %v1816 = vpop.f32.mrb[0].mxu0
        %v1817 = vpop.f32.mrb[0].mxu0
        %v1818 = vadd.f32 %v1657, %v1817
        %v1819 = vpop.f32.mrb[0].mxu0
        %1820 = vmatprep.mubr.bf16.mxu0 0
        %1821 = vmatmul.mubr.bf16.gmra.mrb[0].mxu0 %v810
        %v1822 = vpop.f32.mrb[0].mxu0
        %v1823 = vadd.f32 %v1662, %v1822
        %v1824 = vpop.f32.mrb[0].mxu0
        %v1825 = vpop.f32.mrb[0].mxu0
        %v1826 = vadd.f32 %v1665, %v1825
        %v1827 = vpop.f32.mrb[0].mxu0
        %1828 = vmatprep.mubr.bf16.mxu0 0
        %1829 = vmatmul.mubr.bf16.gmra.mrb[0].mxu0 %v813
        %v1830 = vpop.f32.mrb[0].mxu0
        %v1831 = vadd.f32 %v1670, %v1830
        %v1832 = vpop.f32.mrb[0].mxu0
        %v1833 = vpop.f32.mrb[0].mxu0
        %v1834 = vadd.f32 %v1673, %v1833
        %v1835 = vpop.f32.mrb[0].mxu0
        %1836 = vmatprep.mubr.bf16.mxu0 0
        %1837 = vmatmul.mubr.bf16.gmra.mrb[0].mxu0 %v816
        %v1838 = vpop.f32.mrb[0].mxu0
        %v1839 = vadd.f32 %v1678, %v1838
        %v1840 = vpop.f32.mrb[0].mxu0
        %v1841 = vpop.f32.mrb[0].mxu0
        %v1842 = vadd.f32 %v1681, %v1841
        %v1843 = vpop.f32.mrb[0].mxu0
        %1844 = vmatprep.mubr.bf16.mxu0 0
        %1845 = vmatmul.mubr.bf16.gmra.mrb[0].mxu0 %v819
        %v1846 = vpop.f32.mrb[0].mxu0
        %v1847 = vadd.f32 %v1686, %v1846
        %v1848 = vpop.f32.mrb[0].mxu0
        %v1849 = vpop.f32.mrb[0].mxu0
        %v1850 = vadd.f32 %v1689, %v1849
        %v1851 = vpop.f32.mrb[0].mxu0
        %1852 = vmatprep.mubr.bf16.mxu0 0
        %1853 = vmatmul.mubr.bf16.gmra.mrb[0].mxu0 %v822
        %v1854 = vpop.f32.mrb[0].mxu0
        %v1855 = vadd.f32 %v1694, %v1854
        %v1856 = vpop.f32.mrb[0].mxu0
        %v1857 = vpop.f32.mrb[0].mxu0
        %v1858 = vadd.f32 %v1697, %v1857
        %v1859 = vpop.f32.mrb[0].mxu0
        %1860 = vmatprep.mubr.bf16.mxu0 0
        %1861 = vmatmul.mubr.bf16.gmra.mrb[0].mxu0 %v825
        %v1862 = vpop.f32.mrb[0].mxu0
        %v1863 = vadd.f32 %v1702, %v1862
        %v1864 = vpop.f32.mrb[0].mxu0
        %v1865 = vpop.f32.mrb[0].mxu0
        %v1866 = vadd.f32 %v1705, %v1865
        %v1867 = vpop.f32.mrb[0].mxu0
        %1868 = vmatprep.mubr.bf16.mxu0 0
        %1869 = vmatmul.mubr.bf16.gmra.mrb[0].mxu0 %v828
        %v1870 = vpop.f32.mrb[0].mxu0
        %v1871 = vadd.f32 %v1710, %v1870
        %v1872 = vpop.f32.mrb[0].mxu0
        %v1873 = vpop.f32.mrb[0].mxu0
        %v1874 = vadd.f32 %v1713, %v1873
        %v1875 = vpop.f32.mrb[0].mxu0
        %1876 = vmatprep.mubr.bf16.mxu0 0
        %1877 = vmatmul.mubr.bf16.gmra.mrb[0].mxu0 %v831
        %v1878 = vpop.f32.mrb[0].mxu0
        %v1879 = vadd.f32 %v1718, %v1878
        %v1880 = vpop.f32.mrb[0].mxu0
        %v1881 = vpop.f32.mrb[0].mxu0
        %v1882 = vadd.f32 %v1721, %v1881
        %v1883 = vpop.f32.mrb[0].mxu0
        %1884 = vdwg.mxu0
        %s1885 = scalar_lea.vmem %s1, 384
        %v1886 = vld [vmem:[%s1885] sm:$0xf]
        %v1887 = vld [vmem:[%s1885 + $0x4] sm:$0xf]
        %v1888 = vld [vmem:[%s1885 + $0x8] sm:$0xf]
        %v1889 = vld [vmem:[%s1885 + $0xc] sm:$0xf]
        %v1890 = vld [vmem:[%s1885 + $0x10] sm:$0xf]
        %v1891 = vld [vmem:[%s1885 + $0x14] sm:$0xf]
        %v1892 = vld [vmem:[%s1885 + $0x18] sm:$0xf]
        %v1893 = vld [vmem:[%s1885 + $0x1c] sm:$0xf]
        %v1894 = vld [vmem:[%s1885 + $0x20] sm:$0xf]
        %v1895 = vld [vmem:[%s1885 + $0x24] sm:$0xf]
        %v1896 = vld [vmem:[%s1885 + $0x28] sm:$0xf]
        %v1897 = vld [vmem:[%s1885 + $0x2c] sm:$0xf]
        %v1898 = vld [vmem:[%s1885 + $0x30] sm:$0xf]
        %v1899 = vld [vmem:[%s1885 + $0x34] sm:$0xf]
        %v1900 = vld [vmem:[%s1885 + $0x38] sm:$0xf]
        %v1901 = vld [vmem:[%s1885 + $0x3c] sm:$0xf]
        %v1902 = vld [vmem:[%s1885 + $0x40] sm:$0xf]
        %v1903 = vld [vmem:[%s1885 + $0x44] sm:$0xf]
        %v1904 = vld [vmem:[%s1885 + $0x48] sm:$0xf]
        %v1905 = vld [vmem:[%s1885 + $0x4c] sm:$0xf]
        %v1906 = vld [vmem:[%s1885 + $0x50] sm:$0xf]
        %v1907 = vld [vmem:[%s1885 + $0x54] sm:$0xf]
        %v1908 = vld [vmem:[%s1885 + $0x58] sm:$0xf]
        %v1909 = vld [vmem:[%s1885 + $0x5c] sm:$0xf]
        %v1910 = vld [vmem:[%s1885 + $0x60] sm:$0xf]
        %v1911 = vld [vmem:[%s1885 + $0x64] sm:$0xf]
        %v1912 = vld [vmem:[%s1885 + $0x68] sm:$0xf]
        %v1913 = vld [vmem:[%s1885 + $0x6c] sm:$0xf]
        %v1914 = vld [vmem:[%s1885 + $0x70] sm:$0xf]
        %v1915 = vld [vmem:[%s1885 + $0x74] sm:$0xf]
        %v1916 = vld [vmem:[%s1885 + $0x78] sm:$0xf]
        %v1917 = vld [vmem:[%s1885 + $0x7c] sm:$0xf]
        %v1918 = vld [vmem:[%s1885 + $0x80] sm:$0xf]
        %v1919 = vld [vmem:[%s1885 + $0x84] sm:$0xf]
        %v1920 = vld [vmem:[%s1885 + $0x88] sm:$0xf]
        %v1921 = vld [vmem:[%s1885 + $0x8c] sm:$0xf]
        %v1922 = vld [vmem:[%s1885 + $0x90] sm:$0xf]
        %v1923 = vld [vmem:[%s1885 + $0x94] sm:$0xf]
        %v1924 = vld [vmem:[%s1885 + $0x98] sm:$0xf]
        %v1925 = vld [vmem:[%s1885 + $0x9c] sm:$0xf]
        %v1926 = vld [vmem:[%s1885 + $0xa0] sm:$0xf]
        %v1927 = vld [vmem:[%s1885 + $0xa4] sm:$0xf]
        %v1928 = vld [vmem:[%s1885 + $0xa8] sm:$0xf]
        %v1929 = vld [vmem:[%s1885 + $0xac] sm:$0xf]
        %v1930 = vld [vmem:[%s1885 + $0xb0] sm:$0xf]
        %v1931 = vld [vmem:[%s1885 + $0xb4] sm:$0xf]
        %v1932 = vld [vmem:[%s1885 + $0xb8] sm:$0xf]
        %v1933 = vld [vmem:[%s1885 + $0xbc] sm:$0xf]
        %v1982 = vunpack.c.l.b16 %v1886
        %v1983 = vunpack.c.l.b16 %v1887
        %v1984 = vunpack.c.l.b16 %v1888
        %v1985 = vunpack.c.l.b16 %v1889
        %v1986 = vunpack.c.l.b16 %v1890
        %v1987 = vunpack.c.l.b16 %v1891
        %v1988 = vunpack.c.l.b16 %v1892
        %v1989 = vunpack.c.l.b16 %v1893
        %v1990 = vunpack.c.l.b16 %v1894
        %v1991 = vunpack.c.l.b16 %v1895
        %v1992 = vunpack.c.l.b16 %v1896
        %v1993 = vunpack.c.l.b16 %v1897
        %v1994 = vunpack.c.l.b16 %v1898
        %v1995 = vunpack.c.l.b16 %v1899
        %v1996 = vunpack.c.l.b16 %v1900
        %v1997 = vunpack.c.l.b16 %v1901
        %v1998 = vunpack.c.l.b16 %v1902
        %v1999 = vunpack.c.l.b16 %v1903
        %v2000 = vunpack.c.l.b16 %v1904
        %v2001 = vunpack.c.l.b16 %v1905
        %v2002 = vunpack.c.l.b16 %v1906
        %v2003 = vunpack.c.l.b16 %v1907
        %v2004 = vunpack.c.l.b16 %v1908
        %v2005 = vunpack.c.l.b16 %v1909
        %v2006 = vunpack.c.l.b16 %v1910
        %v2007 = vunpack.c.l.b16 %v1911
        %v2008 = vunpack.c.l.b16 %v1912
        %v2009 = vunpack.c.l.b16 %v1913
        %v2010 = vunpack.c.l.b16 %v1914
        %v2011 = vunpack.c.l.b16 %v1915
        %v2012 = vunpack.c.l.b16 %v1916
        %v2013 = vunpack.c.l.b16 %v1917
        %v2014 = vunpack.c.l.b16 %v1918
        %v2015 = vunpack.c.l.b16 %v1919
        %v2016 = vunpack.c.l.b16 %v1920
        %v2017 = vunpack.c.l.b16 %v1921
        %v2018 = vunpack.c.l.b16 %v1922
        %v2019 = vunpack.c.l.b16 %v1923
        %v2020 = vunpack.c.l.b16 %v1924
        %v2021 = vunpack.c.l.b16 %v1925
        %v2022 = vunpack.c.l.b16 %v1926
        %v2023 = vunpack.c.l.b16 %v1927
        %v2024 = vunpack.c.l.b16 %v1928
        %v2025 = vunpack.c.l.b16 %v1929
        %v2026 = vunpack.c.l.b16 %v1930
        %v2027 = vunpack.c.l.b16 %v1931
        %v2028 = vunpack.c.l.b16 %v1932
        %v2029 = vunpack.c.l.b16 %v1933
        %v2030 = vpack.c.b16 %v1983, %v1982
        %v2031 = vpack.c.b16 %v1985, %v1984
        %v2032 = vpack.c.b16 %v1987, %v1986
        %v2033 = vpack.c.b16 %v1989, %v1988
        %v2034 = vpack.c.b16 %v1991, %v1990
        %v2035 = vpack.c.b16 %v1993, %v1992
        %v2036 = vpack.c.b16 %v1995, %v1994
        %v2037 = vpack.c.b16 %v1997, %v1996
        %v2038 = vpack.c.b16 %v1999, %v1998
        %v2039 = vpack.c.b16 %v2001, %v2000
        %v2040 = vpack.c.b16 %v2003, %v2002
        %v2041 = vpack.c.b16 %v2005, %v2004
        %v2042 = vpack.c.b16 %v2007, %v2006
        %v2043 = vpack.c.b16 %v2009, %v2008
        %v2044 = vpack.c.b16 %v2011, %v2010
        %v2045 = vpack.c.b16 %v2013, %v2012
        %v2046 = vpack.c.b16 %v2015, %v2014
        %v2047 = vpack.c.b16 %v2017, %v2016
        %v2048 = vpack.c.b16 %v2019, %v2018
        %v2049 = vpack.c.b16 %v2021, %v2020
        %v2050 = vpack.c.b16 %v2023, %v2022
        %v2051 = vpack.c.b16 %v2025, %v2024
        %v2052 = vpack.c.b16 %v2027, %v2026
        %v2053 = vpack.c.b16 %v2029, %v2028
        %2078 = vmatprep.subr.bf16.mxu0 0
        %2079 = vmatpush1.bf16.msra.mxu0 %v2030
        %2080 = vmatprep.subr.bf16.mxu0 0
        %2081 = vmatpush1.bf16.msra.mxu0 %v2031
        %2082 = vmatprep.subr.bf16.mxu0 0
        %2083 = vmatpush1.bf16.msra.mxu0 %v2032
        %2084 = vmatprep.subr.bf16.mxu0 0
        %2085 = vmatpush1.bf16.msra.mxu0 %v2033
        %2086 = vmatprep.subr.bf16.mxu0 0
        %2087 = vmatpush1.bf16.msra.mxu0 %v2034
        %2088 = vmatprep.subr.bf16.mxu0 0
        %2089 = vmatpush1.bf16.msra.mxu0 %v2035
        %2090 = vmatprep.subr.bf16.mxu0 0
        %2091 = vmatpush1.bf16.msra.mxu0 %v2036
        %2092 = vmatprep.subr.bf16.mxu0 0
        %2093 = vmatpush1.bf16.msra.mxu0 %v2037
        %2094 = vmatprep.subr.bf16.mxu0 0
        %2095 = vmatpush1.bf16.msra.mxu0 %v2038
        %2096 = vmatprep.subr.bf16.mxu0 0
        %2097 = vmatpush1.bf16.msra.mxu0 %v2039
        %2098 = vmatprep.subr.bf16.mxu0 0
        %2099 = vmatpush1.bf16.msra.mxu0 %v2040
        %2100 = vmatprep.subr.bf16.mxu0 0
        %2101 = vmatpush1.bf16.msra.mxu0 %v2041
        %2102 = vmatprep.subr.bf16.mxu0 0
        %2103 = vmatpush1.bf16.msra.mxu0 %v2042
        %2104 = vmatprep.subr.bf16.mxu0 0
        %2105 = vmatpush1.bf16.msra.mxu0 %v2043
        %2106 = vmatprep.subr.bf16.mxu0 0
        %2107 = vmatpush1.bf16.msra.mxu0 %v2044
        %2108 = vmatprep.subr.bf16.mxu0 0
        %2109 = vmatpush1.bf16.msra.mxu0 %v2045
        %2110 = vmatprep.mubr.bf16.mxu0 %v584
        %2111 = vmatmul.mubr.bf16.gmra.mrb[0].mxu0 %v460
        %v2112 = vpop.f32.mrb[0].mxu0
        %v2113 = vadd.f32 0.0, %v2112
        %v2114 = vpop.f32.mrb[0].mxu0
        %v2115 = vpop.f32.mrb[0].mxu0
        %v2116 = vadd.f32 0.0, %v2115
        %v2117 = vpop.f32.mrb[0].mxu0
        %2118 = vmatprep.mubr.bf16.mxu0 %v596
        %2119 = vmatmul.mubr.bf16.gmra.mrb[0].mxu0 %v461
        %v2120 = vpop.f32.mrb[0].mxu0
        %v2121 = vadd.f32 0.0, %v2120
        %v2122 = vpop.f32.mrb[0].mxu0
        %v2123 = vpop.f32.mrb[0].mxu0
        %v2124 = vadd.f32 0.0, %v2123
        %v2125 = vpop.f32.mrb[0].mxu0
        %2126 = vmatprep.mubr.bf16.mxu0 %v608
        %2127 = vmatmul.mubr.bf16.gmra.mrb[0].mxu0 %v462
        %v2128 = vpop.f32.mrb[0].mxu0
        %v2129 = vadd.f32 0.0, %v2128
        %v2130 = vpop.f32.mrb[0].mxu0
        %v2131 = vpop.f32.mrb[0].mxu0
        %v2132 = vadd.f32 0.0, %v2131
        %v2133 = vpop.f32.mrb[0].mxu0
        %2134 = vmatprep.mubr.bf16.mxu0 %v620
        %2135 = vmatmul.mubr.bf16.gmra.mrb[0].mxu0 %v463
        %v2136 = vpop.f32.mrb[0].mxu0
        %v2137 = vadd.f32 0.0, %v2136
        %v2138 = vpop.f32.mrb[0].mxu0
        %v2139 = vpop.f32.mrb[0].mxu0
        %v2140 = vadd.f32 0.0, %v2139
        %v2141 = vpop.f32.mrb[0].mxu0
        %2142 = vmatprep.mubr.bf16.mxu0 %v632
        %2143 = vmatmul.mubr.bf16.gmra.mrb[0].mxu0 %v464
        %v2144 = vpop.f32.mrb[0].mxu0
        %v2145 = vadd.f32 0.0, %v2144
        %v2146 = vpop.f32.mrb[0].mxu0
        %v2147 = vpop.f32.mrb[0].mxu0
        %v2148 = vadd.f32 0.0, %v2147
        %v2149 = vpop.f32.mrb[0].mxu0
        %2150 = vmatprep.mubr.bf16.mxu0 %v644
        %2151 = vmatmul.mubr.bf16.gmra.mrb[0].mxu0 %v465
        %v2152 = vpop.f32.mrb[0].mxu0
        %v2153 = vadd.f32 0.0, %v2152
        %v2154 = vpop.f32.mrb[0].mxu0
        %v2155 = vpop.f32.mrb[0].mxu0
        %v2156 = vadd.f32 0.0, %v2155
        %v2157 = vpop.f32.mrb[0].mxu0
        %2158 = vmatprep.mubr.bf16.mxu0 %v656
        %2159 = vmatmul.mubr.bf16.gmra.mrb[0].mxu0 %v466
        %v2160 = vpop.f32.mrb[0].mxu0
        %v2161 = vadd.f32 0.0, %v2160
        %v2162 = vpop.f32.mrb[0].mxu0
        %v2163 = vpop.f32.mrb[0].mxu0
        %v2164 = vadd.f32 0.0, %v2163
        %v2165 = vpop.f32.mrb[0].mxu0
        %2166 = vmatprep.mubr.bf16.mxu0 %v668
        %2167 = vmatmul.mubr.bf16.gmra.mrb[0].mxu0 %v467
        %v2168 = vpop.f32.mrb[0].mxu0
        %v2169 = vadd.f32 0.0, %v2168
        %v2170 = vpop.f32.mrb[0].mxu0
        %v2171 = vpop.f32.mrb[0].mxu0
        %v2172 = vadd.f32 0.0, %v2171
        %v2173 = vpop.f32.mrb[0].mxu0
        %2174 = vmatprep.mubr.bf16.mxu0 %v680
        %2175 = vmatmul.mubr.bf16.gmra.mrb[0].mxu0 %v468
        %v2176 = vpop.f32.mrb[0].mxu0
        %v2177 = vadd.f32 0.0, %v2176
        %v2178 = vpop.f32.mrb[0].mxu0
        %v2179 = vpop.f32.mrb[0].mxu0
        %v2180 = vadd.f32 0.0, %v2179
        %v2181 = vpop.f32.mrb[0].mxu0
        %2182 = vmatprep.mubr.bf16.mxu0 %v692
        %2183 = vmatmul.mubr.bf16.gmra.mrb[0].mxu0 %v469
        %v2184 = vpop.f32.mrb[0].mxu0
        %v2185 = vadd.f32 0.0, %v2184
        %v2186 = vpop.f32.mrb[0].mxu0
        %v2187 = vpop.f32.mrb[0].mxu0
        %v2188 = vadd.f32 0.0, %v2187
        %v2189 = vpop.f32.mrb[0].mxu0
        %2190 = vmatprep.mubr.bf16.mxu0 %v704
        %2191 = vmatmul.mubr.bf16.gmra.mrb[0].mxu0 %v470
        %v2192 = vpop.f32.mrb[0].mxu0
        %v2193 = vadd.f32 0.0, %v2192
        %v2194 = vpop.f32.mrb[0].mxu0
        %v2195 = vpop.f32.mrb[0].mxu0
        %v2196 = vadd.f32 0.0, %v2195
        %v2197 = vpop.f32.mrb[0].mxu0
        %2198 = vmatprep.mubr.bf16.mxu0 %v716
        %2199 = vmatmul.mubr.bf16.gmra.mrb[0].mxu0 %v471
        %v2200 = vpop.f32.mrb[0].mxu0
        %v2201 = vadd.f32 0.0, %v2200
        %v2202 = vpop.f32.mrb[0].mxu0
        %v2203 = vpop.f32.mrb[0].mxu0
        %v2204 = vadd.f32 0.0, %v2203
        %v2205 = vpop.f32.mrb[0].mxu0
        %2206 = vmatprep.mubr.bf16.mxu0 %v728
        %2207 = vmatmul.mubr.bf16.gmra.mrb[0].mxu0 %v472
        %v2208 = vpop.f32.mrb[0].mxu0
        %v2209 = vadd.f32 0.0, %v2208
        %v2210 = vpop.f32.mrb[0].mxu0
        %v2211 = vpop.f32.mrb[0].mxu0
        %v2212 = vadd.f32 0.0, %v2211
        %v2213 = vpop.f32.mrb[0].mxu0
        %2214 = vmatprep.mubr.bf16.mxu0 %v740
        %2215 = vmatmul.mubr.bf16.gmra.mrb[0].mxu0 %v473
        %v2216 = vpop.f32.mrb[0].mxu0
        %v2217 = vadd.f32 0.0, %v2216
        %v2218 = vpop.f32.mrb[0].mxu0
        %v2219 = vpop.f32.mrb[0].mxu0
        %v2220 = vadd.f32 0.0, %v2219
        %v2221 = vpop.f32.mrb[0].mxu0
        %2222 = vmatprep.mubr.bf16.mxu0 %v752
        %2223 = vmatmul.mubr.bf16.gmra.mrb[0].mxu0 %v474
        %v2224 = vpop.f32.mrb[0].mxu0
        %v2225 = vadd.f32 0.0, %v2224
        %v2226 = vpop.f32.mrb[0].mxu0
        %v2227 = vpop.f32.mrb[0].mxu0
        %v2228 = vadd.f32 0.0, %v2227
        %v2229 = vpop.f32.mrb[0].mxu0
        %2230 = vmatprep.mubr.bf16.mxu0 %v764
        %2231 = vmatmul.mubr.bf16.gmra.mrb[0].mxu0 %v475
        %v2232 = vpop.f32.mrb[0].mxu0
        %v2233 = vadd.f32 0.0, %v2232
        %v2234 = vpop.f32.mrb[0].mxu0
        %v2235 = vpop.f32.mrb[0].mxu0
        %v2236 = vadd.f32 0.0, %v2235
        %v2237 = vpop.f32.mrb[0].mxu0
        %2238 = vdwg.mxu0
        %2239 = vmatprep.subr.bf16.mxu0 0
        %2240 = vmatpush1.bf16.msra.mxu0 %v2046
        %2241 = vmatprep.subr.bf16.mxu0 0
        %2242 = vmatpush1.bf16.msra.mxu0 %v2047
        %2243 = vmatprep.subr.bf16.mxu0 0
        %2244 = vmatpush1.bf16.msra.mxu0 %v2048
        %2245 = vmatprep.subr.bf16.mxu0 0
        %2246 = vmatpush1.bf16.msra.mxu0 %v2049
        %2247 = vmatprep.subr.bf16.mxu0 0
        %2248 = vmatpush1.bf16.msra.mxu0 %v2050
        %2249 = vmatprep.subr.bf16.mxu0 0
        %2250 = vmatpush1.bf16.msra.mxu0 %v2051
        %2251 = vmatprep.subr.bf16.mxu0 0
        %2252 = vmatpush1.bf16.msra.mxu0 %v2052
        %2253 = vmatprep.subr.bf16.mxu0 0
        %2254 = vmatpush1.bf16.msra.mxu0 %v2053
        %2255 = vmatprep.subr.bf16.mxu0 0
        %2256 = vmatpush1.bf16.msra.mxu0 0
        %2257 = vmatprep.subr.bf16.mxu0 0
        %2258 = vmatpush1.bf16.msra.mxu0 0
        %2259 = vmatprep.subr.bf16.mxu0 0
        %2260 = vmatpush1.bf16.msra.mxu0 0
        %2261 = vmatprep.subr.bf16.mxu0 0
        %2262 = vmatpush1.bf16.msra.mxu0 0
        %2263 = vmatprep.subr.bf16.mxu0 0
        %2264 = vmatpush1.bf16.msra.mxu0 0
        %2265 = vmatprep.subr.bf16.mxu0 0
        %2266 = vmatpush1.bf16.msra.mxu0 0
        %2267 = vmatprep.subr.bf16.mxu0 0
        %2268 = vmatpush1.bf16.msra.mxu0 0
        %2269 = vmatprep.subr.bf16.mxu0 0
        %2270 = vmatpush1.bf16.msra.mxu0 0
        %2271 = vmatprep.mubr.bf16.mxu0 0
        %2272 = vmatmul.mubr.bf16.gmra.mrb[0].mxu0 %v792
        %v2273 = vpop.f32.mrb[0].mxu0
        %v2274 = vadd.f32 %v2113, %v2273
        %v2275 = vpop.f32.mrb[0].mxu0
        %v2276 = vpop.f32.mrb[0].mxu0
        %v2277 = vadd.f32 %v2116, %v2276
        %v2278 = vpop.f32.mrb[0].mxu0
        %2279 = vmatprep.mubr.bf16.mxu0 0
        %2280 = vmatmul.mubr.bf16.gmra.mrb[0].mxu0 %v795
        %v2281 = vpop.f32.mrb[0].mxu0
        %v2282 = vadd.f32 %v2121, %v2281
        %v2283 = vpop.f32.mrb[0].mxu0
        %v2284 = vpop.f32.mrb[0].mxu0
        %v2285 = vadd.f32 %v2124, %v2284
        %v2286 = vpop.f32.mrb[0].mxu0
        %2287 = vmatprep.mubr.bf16.mxu0 0
        %2288 = vmatmul.mubr.bf16.gmra.mrb[0].mxu0 %v798
        %v2289 = vpop.f32.mrb[0].mxu0
        %v2290 = vadd.f32 %v2129, %v2289
        %v2291 = vpop.f32.mrb[0].mxu0
        %v2292 = vpop.f32.mrb[0].mxu0
        %v2293 = vadd.f32 %v2132, %v2292
        %v2294 = vpop.f32.mrb[0].mxu0
        %2295 = vmatprep.mubr.bf16.mxu0 0
        %2296 = vmatmul.mubr.bf16.gmra.mrb[0].mxu0 %v801
        %v2297 = vpop.f32.mrb[0].mxu0
        %v2298 = vadd.f32 %v2137, %v2297
        %v2299 = vpop.f32.mrb[0].mxu0
        %v2300 = vpop.f32.mrb[0].mxu0
        %v2301 = vadd.f32 %v2140, %v2300
        %v2302 = vpop.f32.mrb[0].mxu0
        %2303 = vmatprep.mubr.bf16.mxu0 0
        %2304 = vmatmul.mubr.bf16.gmra.mrb[0].mxu0 %v804
        %v2305 = vpop.f32.mrb[0].mxu0
        %v2306 = vadd.f32 %v2145, %v2305
        %v2307 = vpop.f32.mrb[0].mxu0
        %v2308 = vpop.f32.mrb[0].mxu0
        %v2309 = vadd.f32 %v2148, %v2308
        %v2310 = vpop.f32.mrb[0].mxu0
        %2311 = vmatprep.mubr.bf16.mxu0 0
        %2312 = vmatmul.mubr.bf16.gmra.mrb[0].mxu0 %v807
        %v2313 = vpop.f32.mrb[0].mxu0
        %v2314 = vadd.f32 %v2153, %v2313
        %v2315 = vpop.f32.mrb[0].mxu0
        %v2316 = vpop.f32.mrb[0].mxu0
        %v2317 = vadd.f32 %v2156, %v2316
        %v2318 = vpop.f32.mrb[0].mxu0
        %2319 = vmatprep.mubr.bf16.mxu0 0
        %2320 = vmatmul.mubr.bf16.gmra.mrb[0].mxu0 %v810
        %v2321 = vpop.f32.mrb[0].mxu0
        %v2322 = vadd.f32 %v2161, %v2321
        %v2323 = vpop.f32.mrb[0].mxu0
        %v2324 = vpop.f32.mrb[0].mxu0
        %v2325 = vadd.f32 %v2164, %v2324
        %v2326 = vpop.f32.mrb[0].mxu0
        %2327 = vmatprep.mubr.bf16.mxu0 0
        %2328 = vmatmul.mubr.bf16.gmra.mrb[0].mxu0 %v813
        %v2329 = vpop.f32.mrb[0].mxu0
        %v2330 = vadd.f32 %v2169, %v2329
        %v2331 = vpop.f32.mrb[0].mxu0
        %v2332 = vpop.f32.mrb[0].mxu0
        %v2333 = vadd.f32 %v2172, %v2332
        %v2334 = vpop.f32.mrb[0].mxu0
        %2335 = vmatprep.mubr.bf16.mxu0 0
        %2336 = vmatmul.mubr.bf16.gmra.mrb[0].mxu0 %v816
        %v2337 = vpop.f32.mrb[0].mxu0
        %v2338 = vadd.f32 %v2177, %v2337
        %v2339 = vpop.f32.mrb[0].mxu0
        %v2340 = vpop.f32.mrb[0].mxu0
        %v2341 = vadd.f32 %v2180, %v2340
        %v2342 = vpop.f32.mrb[0].mxu0
        %2343 = vmatprep.mubr.bf16.mxu0 0
        %2344 = vmatmul.mubr.bf16.gmra.mrb[0].mxu0 %v819
        %v2345 = vpop.f32.mrb[0].mxu0
        %v2346 = vadd.f32 %v2185, %v2345
        %v2347 = vpop.f32.mrb[0].mxu0
        %v2348 = vpop.f32.mrb[0].mxu0
        %v2349 = vadd.f32 %v2188, %v2348
        %v2350 = vpop.f32.mrb[0].mxu0
        %2351 = vmatprep.mubr.bf16.mxu0 0
        %2352 = vmatmul.mubr.bf16.gmra.mrb[0].mxu0 %v822
        %v2353 = vpop.f32.mrb[0].mxu0
        %v2354 = vadd.f32 %v2193, %v2353
        %v2355 = vpop.f32.mrb[0].mxu0
        %v2356 = vpop.f32.mrb[0].mxu0
        %v2357 = vadd.f32 %v2196, %v2356
        %v2358 = vpop.f32.mrb[0].mxu0
        %2359 = vmatprep.mubr.bf16.mxu0 0
        %2360 = vmatmul.mubr.bf16.gmra.mrb[0].mxu0 %v825
        %v2361 = vpop.f32.mrb[0].mxu0
        %v2362 = vadd.f32 %v2201, %v2361
        %v2363 = vpop.f32.mrb[0].mxu0
        %v2364 = vpop.f32.mrb[0].mxu0
        %v2365 = vadd.f32 %v2204, %v2364
        %v2366 = vpop.f32.mrb[0].mxu0
        %2367 = vmatprep.mubr.bf16.mxu0 0
        %2368 = vmatmul.mubr.bf16.gmra.mrb[0].mxu0 %v828
        %v2369 = vpop.f32.mrb[0].mxu0
        %v2370 = vadd.f32 %v2209, %v2369
        %v2371 = vpop.f32.mrb[0].mxu0
        %v2372 = vpop.f32.mrb[0].mxu0
        %v2373 = vadd.f32 %v2212, %v2372
        %v2374 = vpop.f32.mrb[0].mxu0
        %2375 = vmatprep.mubr.bf16.mxu0 0
        %2376 = vmatmul.mubr.bf16.gmra.mrb[0].mxu0 %v831
        %v2377 = vpop.f32.mrb[0].mxu0
        %v2378 = vadd.f32 %v2217, %v2377
        %v2379 = vpop.f32.mrb[0].mxu0
        %v2380 = vpop.f32.mrb[0].mxu0
        %v2381 = vadd.f32 %v2220, %v2380
        %v2382 = vpop.f32.mrb[0].mxu0
        %2383 = vmatprep.mubr.bf16.mxu0 0
        %2384 = vmatmul.mubr.bf16.gmra.mrb[0].mxu0 %v834
        %v2385 = vpop.f32.mrb[0].mxu0
        %v2386 = vadd.f32 %v2225, %v2385
        %v2387 = vpop.f32.mrb[0].mxu0
        %v2388 = vpop.f32.mrb[0].mxu0
        %v2389 = vadd.f32 %v2228, %v2388
        %v2390 = vpop.f32.mrb[0].mxu0
        %2391 = vmatprep.mubr.bf16.mxu0 0
        %2392 = vmatmul.mubr.bf16.gmra.mrb[0].mxu0 %v837
        %v2393 = vpop.f32.mrb[0].mxu0
        %v2394 = vadd.f32 %v2233, %v2393
        %v2395 = vpop.f32.mrb[0].mxu0
        %v2396 = vpop.f32.mrb[0].mxu0
        %v2397 = vadd.f32 %v2236, %v2396
        %v2398 = vpop.f32.mrb[0].mxu0
        %2399 = vdwg.mxu0
        %v2400 = vadd.f32 %v1759, %v2274
        %v2401 = vadd.f32 %v1762, %v2277
        %v2402 = vadd.f32 %v1767, %v2282
        %v2403 = vadd.f32 %v1770, %v2285
        %v2404 = vadd.f32 %v1775, %v2290
        %v2405 = vadd.f32 %v1778, %v2293
        %v2406 = vadd.f32 %v1783, %v2298
        %v2407 = vadd.f32 %v1786, %v2301
        %v2408 = vadd.f32 %v1791, %v2306
        %v2409 = vadd.f32 %v1794, %v2309
        %v2410 = vadd.f32 %v1799, %v2314
        %v2411 = vadd.f32 %v1802, %v2317
        %v2412 = vadd.f32 %v1807, %v2322
        %v2413 = vadd.f32 %v1810, %v2325
        %v2414 = vadd.f32 %v1815, %v2330
        %v2415 = vadd.f32 %v1818, %v2333
        %v2416 = vadd.f32 %v1823, %v2338
        %v2417 = vadd.f32 %v1826, %v2341
        %v2418 = vadd.f32 %v1831, %v2346
        %v2419 = vadd.f32 %v1834, %v2349
        %v2420 = vadd.f32 %v1839, %v2354
        %v2421 = vadd.f32 %v1842, %v2357
        %v2422 = vadd.f32 %v1847, %v2362
        %v2423 = vadd.f32 %v1850, %v2365
        %v2424 = vadd.f32 %v1855, %v2370
        %v2425 = vadd.f32 %v1858, %v2373
        %v2426 = vadd.f32 %v1863, %v2378
        %v2427 = vadd.f32 %v1866, %v2381
        %v2428 = vadd.f32 %v1871, %v2386
        %v2429 = vadd.f32 %v1874, %v2389
        %v2430 = vadd.f32 %v1879, %v2394
        %v2431 = vadd.f32 %v1882, %v2397
        %v2432 = vld [vmem:[%s3] sm:$0x1]
        %v2433 = vlaneseq
        %v2434 = vshrl.u32 %v2433, 7
        %v2435 = vsub.s32 0, %v2434
        %v2436 = vrot.slane %v2432, %v2435
        %v2437 = vadd.f32 %v2400, %v2436
        %v2438 = vadd.f32 %v2401, %v2436
        %v2439 = vadd.f32 %v2402, %v2436
        %v2440 = vadd.f32 %v2403, %v2436
        %v2441 = vadd.f32 %v2404, %v2436
        %v2442 = vadd.f32 %v2405, %v2436
        %v2443 = vadd.f32 %v2406, %v2436
        %v2444 = vadd.f32 %v2407, %v2436
        %v2445 = vadd.f32 %v2408, %v2436
        %v2446 = vadd.f32 %v2409, %v2436
        %v2447 = vadd.f32 %v2410, %v2436
        %v2448 = vadd.f32 %v2411, %v2436
        %v2449 = vadd.f32 %v2412, %v2436
        %v2450 = vadd.f32 %v2413, %v2436
        %v2451 = vadd.f32 %v2414, %v2436
        %v2452 = vadd.f32 %v2415, %v2436
        %v2453 = vadd.f32 %v2416, %v2436
        %v2454 = vadd.f32 %v2417, %v2436
        %v2455 = vadd.f32 %v2418, %v2436
        %v2456 = vadd.f32 %v2419, %v2436
        %v2457 = vadd.f32 %v2420, %v2436
        %v2458 = vadd.f32 %v2421, %v2436
        %v2459 = vadd.f32 %v2422, %v2436
        %v2460 = vadd.f32 %v2423, %v2436
        %v2461 = vadd.f32 %v2424, %v2436
        %v2462 = vadd.f32 %v2425, %v2436
        %v2463 = vadd.f32 %v2426, %v2436
        %v2464 = vadd.f32 %v2427, %v2436
        %v2465 = vadd.f32 %v2428, %v2436
        %v2466 = vadd.f32 %v2429, %v2436
        %v2467 = vadd.f32 %v2430, %v2436
        %v2468 = vadd.f32 %v2431, %v2436
        %v2469 = vmax.f32 %v2437, 0.0
        %v2470 = vmax.f32 %v2438, 0.0
        %v2471 = vmax.f32 %v2439, 0.0
        %v2472 = vmax.f32 %v2440, 0.0
        %v2473 = vmax.f32 %v2441, 0.0
        %v2474 = vmax.f32 %v2442, 0.0
        %v2475 = vmax.f32 %v2443, 0.0
        %v2476 = vmax.f32 %v2444, 0.0
        %v2477 = vmax.f32 %v2445, 0.0
        %v2478 = vmax.f32 %v2446, 0.0
        %v2479 = vmax.f32 %v2447, 0.0
        %v2480 = vmax.f32 %v2448, 0.0
        %v2481 = vmax.f32 %v2449, 0.0
        %v2482 = vmax.f32 %v2450, 0.0
        %v2483 = vmax.f32 %v2451, 0.0
        %v2484 = vmax.f32 %v2452, 0.0
        %v2485 = vmax.f32 %v2453, 0.0
        %v2486 = vmax.f32 %v2454, 0.0
        %v2487 = vmax.f32 %v2455, 0.0
        %v2488 = vmax.f32 %v2456, 0.0
        %v2489 = vmax.f32 %v2457, 0.0
        %v2490 = vmax.f32 %v2458, 0.0
        %v2491 = vmax.f32 %v2459, 0.0
        %v2492 = vmax.f32 %v2460, 0.0
        %v2493 = vmax.f32 %v2461, 0.0
        %v2494 = vmax.f32 %v2462, 0.0
        %v2495 = vmax.f32 %v2463, 0.0
        %v2496 = vmax.f32 %v2464, 0.0
        %v2497 = vmax.f32 %v2465, 0.0
        %v2498 = vmax.f32 %v2466, 0.0
        %v2499 = vmax.f32 %v2467, 0.0
        %v2500 = vmax.f32 %v2468, 0.0
        %v2501 = vpack.c.bf16 %v2470, %v2469
        %v2502 = vpack.c.bf16 %v2472, %v2471
        %v2503 = vpack.c.bf16 %v2474, %v2473
        %v2504 = vpack.c.bf16 %v2476, %v2475
        %v2505 = vpack.c.bf16 %v2478, %v2477
        %v2506 = vpack.c.bf16 %v2480, %v2479
        %v2507 = vpack.c.bf16 %v2482, %v2481
        %v2508 = vpack.c.bf16 %v2484, %v2483
        %v2509 = vpack.c.bf16 %v2486, %v2485
        %v2510 = vpack.c.bf16 %v2488, %v2487
        %v2511 = vpack.c.bf16 %v2490, %v2489
        %v2512 = vpack.c.bf16 %v2492, %v2491
        %v2513 = vpack.c.bf16 %v2494, %v2493
        %v2514 = vpack.c.bf16 %v2496, %v2495
        %v2515 = vpack.c.bf16 %v2498, %v2497
        %v2516 = vpack.c.bf16 %v2500, %v2499
        %v2533 = vunpack.c.l.b16 %v2501
        %v2534 = vunpack.c.h.b16 %v2501
        %v2535 = vunpack.c.l.b16 %v2502
        %v2536 = vunpack.c.h.b16 %v2502
        %v2537 = vunpack.c.l.b16 %v2503
        %v2538 = vunpack.c.h.b16 %v2503
        %v2539 = vunpack.c.l.b16 %v2504
        %v2540 = vunpack.c.h.b16 %v2504
        %v2541 = vunpack.c.l.b16 %v2505
        %v2542 = vunpack.c.h.b16 %v2505
        %v2543 = vunpack.c.l.b16 %v2506
        %v2544 = vunpack.c.h.b16 %v2506
        %v2545 = vunpack.c.l.b16 %v2507
        %v2546 = vunpack.c.h.b16 %v2507
        %v2547 = vunpack.c.l.b16 %v2508
        %v2548 = vunpack.c.h.b16 %v2508
        %v2549 = vunpack.c.l.b16 %v2509
        %v2550 = vunpack.c.h.b16 %v2509
        %v2551 = vunpack.c.l.b16 %v2510
        %v2552 = vunpack.c.h.b16 %v2510
        %v2553 = vunpack.c.l.b16 %v2511
        %v2554 = vunpack.c.h.b16 %v2511
        %v2555 = vunpack.c.l.b16 %v2512
        %v2556 = vunpack.c.h.b16 %v2512
        %v2557 = vunpack.c.l.b16 %v2513
        %v2558 = vunpack.c.h.b16 %v2513
        %v2559 = vunpack.c.l.b16 %v2514
        %v2560 = vunpack.c.h.b16 %v2514
        %v2561 = vunpack.c.l.b16 %v2515
        %v2562 = vunpack.c.h.b16 %v2515
        %v2563 = vunpack.c.l.b16 %v2516
        %v2564 = vunpack.c.h.b16 %v2516
        %v2565 = vpack.c.b16 %v2533, %v2533
        %v2566 = vpack.c.b16 %v2534, %v2534
        %v2567 = vpack.c.b16 %v2535, %v2535
        %v2568 = vpack.c.b16 %v2536, %v2536
        %v2569 = vpack.c.b16 %v2537, %v2537
        %v2570 = vpack.c.b16 %v2538, %v2538
        %v2571 = vpack.c.b16 %v2539, %v2539
        %v2572 = vpack.c.b16 %v2540, %v2540
        %v2573 = vpack.c.b16 %v2541, %v2541
        %v2574 = vpack.c.b16 %v2542, %v2542
        %v2575 = vpack.c.b16 %v2543, %v2543
        %v2576 = vpack.c.b16 %v2544, %v2544
        %v2577 = vpack.c.b16 %v2545, %v2545
        %v2578 = vpack.c.b16 %v2546, %v2546
        %v2579 = vpack.c.b16 %v2547, %v2547
        %v2580 = vpack.c.b16 %v2548, %v2548
        %v2581 = vpack.c.b16 %v2549, %v2549
        %v2582 = vpack.c.b16 %v2550, %v2550
        %v2583 = vpack.c.b16 %v2551, %v2551
        %v2584 = vpack.c.b16 %v2552, %v2552
        %v2585 = vpack.c.b16 %v2553, %v2553
        %v2586 = vpack.c.b16 %v2554, %v2554
        %v2587 = vpack.c.b16 %v2555, %v2555
        %v2588 = vpack.c.b16 %v2556, %v2556
        %v2589 = vpack.c.b16 %v2557, %v2557
        %v2590 = vpack.c.b16 %v2558, %v2558
        %v2591 = vpack.c.b16 %v2559, %v2559
        %v2592 = vpack.c.b16 %v2560, %v2560
        %v2593 = vpack.c.b16 %v2561, %v2561
        %v2594 = vpack.c.b16 %v2562, %v2562
        %v2595 = vpack.c.b16 %v2563, %v2563
        %v2596 = vpack.c.b16 %v2564, %v2564
        %vm2597 = vsmask.f32 4368
        %vm2598 = vmor %vm220, %vm2597
        %v2600 = vshrl.u32 %v2565, 16
        %v2602 = vrot.slane %v2600, 7
        %v2603 = vshll.u32 %v2565, 16
        %v2605 = vor.u32 %v2602, %v2603
        %v2606 = vrot.slane %v2602, 4
        %v2608 = vshrl.u32 %v2566, 16
        %v2610 = vrot.slane %v2608, 7
        %v2611 = vshll.u32 %v2566, 16
        %v2613 = vor.u32 %v2610, %v2611
        %v2614 = vsel %vm2598, %v2606, %v2613
        %v2615 = vrot.slane %v2610, 4
        %v2617 = vshrl.u32 %v2567, 16
        %v2619 = vrot.slane %v2617, 7
        %v2620 = vshll.u32 %v2567, 16
        %v2622 = vor.u32 %v2619, %v2620
        %v2623 = vrot.slane %v2619, 4
        %v2625 = vshrl.u32 %v2568, 16
        %v2627 = vrot.slane %v2625, 7
        %v2628 = vshll.u32 %v2568, 16
        %v2630 = vor.u32 %v2627, %v2628
        %v2631 = vsel %vm2598, %v2623, %v2630
        %v2632 = vrot.slane %v2627, 4
        %v2634 = vshrl.u32 %v2569, 16
        %v2636 = vrot.slane %v2634, 7
        %v2637 = vshll.u32 %v2569, 16
        %v2639 = vor.u32 %v2636, %v2637
        %v2640 = vrot.slane %v2636, 4
        %v2642 = vshrl.u32 %v2570, 16
        %v2644 = vrot.slane %v2642, 7
        %v2645 = vshll.u32 %v2570, 16
        %v2647 = vor.u32 %v2644, %v2645
        %v2648 = vsel %vm2598, %v2640, %v2647
        %v2649 = vrot.slane %v2644, 4
        %v2651 = vshrl.u32 %v2571, 16
        %v2653 = vrot.slane %v2651, 7
        %v2654 = vshll.u32 %v2571, 16
        %v2656 = vor.u32 %v2653, %v2654
        %v2657 = vrot.slane %v2653, 4
        %v2659 = vshrl.u32 %v2572, 16
        %v2661 = vrot.slane %v2659, 7
        %v2662 = vshll.u32 %v2572, 16
        %v2664 = vor.u32 %v2661, %v2662
        %v2665 = vsel %vm2598, %v2657, %v2664
        %v2666 = vrot.slane %v2661, 4
        %v2668 = vshrl.u32 %v2573, 16
        %v2670 = vrot.slane %v2668, 7
        %v2671 = vshll.u32 %v2573, 16
        %v2673 = vor.u32 %v2670, %v2671
        %v2674 = vrot.slane %v2670, 4
        %v2676 = vshrl.u32 %v2574, 16
        %v2678 = vrot.slane %v2676, 7
        %v2679 = vshll.u32 %v2574, 16
        %v2681 = vor.u32 %v2678, %v2679
        %v2682 = vsel %vm2598, %v2674, %v2681
        %v2683 = vrot.slane %v2678, 4
        %v2685 = vshrl.u32 %v2575, 16
        %v2687 = vrot.slane %v2685, 7
        %v2688 = vshll.u32 %v2575, 16
        %v2690 = vor.u32 %v2687, %v2688
        %v2691 = vrot.slane %v2687, 4
        %v2693 = vshrl.u32 %v2576, 16
        %v2695 = vrot.slane %v2693, 7
        %v2696 = vshll.u32 %v2576, 16
        %v2698 = vor.u32 %v2695, %v2696
        %v2699 = vsel %vm2598, %v2691, %v2698
        %v2700 = vrot.slane %v2695, 4
        %v2702 = vshrl.u32 %v2577, 16
        %v2704 = vrot.slane %v2702, 7
        %v2705 = vshll.u32 %v2577, 16
        %v2707 = vor.u32 %v2704, %v2705
        %v2708 = vrot.slane %v2704, 4
        %v2710 = vshrl.u32 %v2578, 16
        %v2712 = vrot.slane %v2710, 7
        %v2713 = vshll.u32 %v2578, 16
        %v2715 = vor.u32 %v2712, %v2713
        %v2716 = vsel %vm2598, %v2708, %v2715
        %v2717 = vrot.slane %v2712, 4
        %v2719 = vshrl.u32 %v2579, 16
        %v2721 = vrot.slane %v2719, 7
        %v2722 = vshll.u32 %v2579, 16
        %v2724 = vor.u32 %v2721, %v2722
        %v2725 = vrot.slane %v2721, 4
        %v2727 = vshrl.u32 %v2580, 16
        %v2729 = vrot.slane %v2727, 7
        %v2730 = vshll.u32 %v2580, 16
        %v2732 = vor.u32 %v2729, %v2730
        %v2733 = vsel %vm2598, %v2725, %v2732
        %v2734 = vrot.slane %v2729, 4
        %v2736 = vshrl.u32 %v2581, 16
        %v2738 = vrot.slane %v2736, 7
        %v2739 = vshll.u32 %v2581, 16
        %v2741 = vor.u32 %v2738, %v2739
        %v2742 = vrot.slane %v2738, 4
        %v2744 = vshrl.u32 %v2582, 16
        %v2746 = vrot.slane %v2744, 7
        %v2747 = vshll.u32 %v2582, 16
        %v2749 = vor.u32 %v2746, %v2747
        %v2750 = vsel %vm2598, %v2742, %v2749
        %v2751 = vrot.slane %v2746, 4
        %v2753 = vshrl.u32 %v2583, 16
        %v2755 = vrot.slane %v2753, 7
        %v2756 = vshll.u32 %v2583, 16
        %v2758 = vor.u32 %v2755, %v2756
        %v2759 = vrot.slane %v2755, 4
        %v2761 = vshrl.u32 %v2584, 16
        %v2763 = vrot.slane %v2761, 7
        %v2764 = vshll.u32 %v2584, 16
        %v2766 = vor.u32 %v2763, %v2764
        %v2767 = vsel %vm2598, %v2759, %v2766
        %v2768 = vrot.slane %v2763, 4
        %v2770 = vshrl.u32 %v2585, 16
        %v2772 = vrot.slane %v2770, 7
        %v2773 = vshll.u32 %v2585, 16
        %v2775 = vor.u32 %v2772, %v2773
        %v2776 = vrot.slane %v2772, 4
        %v2778 = vshrl.u32 %v2586, 16
        %v2780 = vrot.slane %v2778, 7
        %v2781 = vshll.u32 %v2586, 16
        %v2783 = vor.u32 %v2780, %v2781
        %v2784 = vsel %vm2598, %v2776, %v2783
        %v2785 = vrot.slane %v2780, 4
        %v2787 = vshrl.u32 %v2587, 16
        %v2789 = vrot.slane %v2787, 7
        %v2790 = vshll.u32 %v2587, 16
        %v2792 = vor.u32 %v2789, %v2790
        %v2793 = vrot.slane %v2789, 4
        %v2795 = vshrl.u32 %v2588, 16
        %v2797 = vrot.slane %v2795, 7
        %v2798 = vshll.u32 %v2588, 16
        %v2800 = vor.u32 %v2797, %v2798
        %v2801 = vsel %vm2598, %v2793, %v2800
        %v2802 = vrot.slane %v2797, 4
        %v2804 = vshrl.u32 %v2589, 16
        %v2806 = vrot.slane %v2804, 7
        %v2807 = vshll.u32 %v2589, 16
        %v2809 = vor.u32 %v2806, %v2807
        %v2810 = vrot.slane %v2806, 4
        %v2812 = vshrl.u32 %v2590, 16
        %v2814 = vrot.slane %v2812, 7
        %v2815 = vshll.u32 %v2590, 16
        %v2817 = vor.u32 %v2814, %v2815
        %v2818 = vsel %vm2598, %v2810, %v2817
        %v2819 = vrot.slane %v2814, 4
        %v2821 = vshrl.u32 %v2591, 16
        %v2823 = vrot.slane %v2821, 7
        %v2824 = vshll.u32 %v2591, 16
        %v2826 = vor.u32 %v2823, %v2824
        %v2827 = vrot.slane %v2823, 4
        %v2829 = vshrl.u32 %v2592, 16
        %v2831 = vrot.slane %v2829, 7
        %v2832 = vshll.u32 %v2592, 16
        %v2834 = vor.u32 %v2831, %v2832
        %v2835 = vsel %vm2598, %v2827, %v2834
        %v2836 = vrot.slane %v2831, 4
        %v2838 = vshrl.u32 %v2593, 16
        %v2840 = vrot.slane %v2838, 7
        %v2841 = vshll.u32 %v2593, 16
        %v2843 = vor.u32 %v2840, %v2841
        %v2844 = vrot.slane %v2840, 4
        %v2846 = vshrl.u32 %v2594, 16
        %v2848 = vrot.slane %v2846, 7
        %v2849 = vshll.u32 %v2594, 16
        %v2851 = vor.u32 %v2848, %v2849
        %v2852 = vsel %vm2598, %v2844, %v2851
        %v2853 = vrot.slane %v2848, 4
        %v2855 = vshrl.u32 %v2595, 16
        %v2857 = vrot.slane %v2855, 7
        %v2858 = vshll.u32 %v2595, 16
        %v2860 = vor.u32 %v2857, %v2858
        %v2861 = vrot.slane %v2857, 4
        %v2863 = vshrl.u32 %v2596, 16
        %v2865 = vrot.slane %v2863, 7
        %v2866 = vshll.u32 %v2596, 16
        %v2868 = vor.u32 %v2865, %v2866
        %v2869 = vsel %vm2598, %v2861, %v2868
        %v2870 = vrot.slane %v2865, 4
        %s2919 = scalar_lea.vmem [#allocation2], 12
        %vm2920 = vcmask 1043456
        %vm2921 = vmand %vm2920, %vm276
        %v2922 = vld [vmem:[%s2919] sm:$0xf]
        %v2923 = vsel %vm2921, %v2605, %v2922
        %2924 = vst [vmem:[%s2919] sm:$0xf] %v2923
        %2925 = vst [vmem:[%s2919 + $0x4] sm:$0xf] %v2614
        %v2926 = vld [vmem:[%s2919 + $0x8] sm:$0x1]
        %v2927 = vsel %vm221, %v2615, %v2926
        %2928 = vst [vmem:[%s2919 + $0x8] sm:$0x1] %v2927
        %v2929 = vld [vmem:[%s2919 + $0xc] sm:$0xf]
        %v2930 = vsel %vm2921, %v2622, %v2929
        %2931 = vst [vmem:[%s2919 + $0xc] sm:$0xf] %v2930
        %2932 = vst [vmem:[%s2919 + $0x10] sm:$0xf] %v2631
        %v2933 = vld [vmem:[%s2919 + $0x14] sm:$0x1]
        %v2934 = vsel %vm221, %v2632, %v2933
        %2935 = vst [vmem:[%s2919 + $0x14] sm:$0x1] %v2934
        %v2936 = vld [vmem:[%s2919 + $0x18] sm:$0xf]
        %v2937 = vsel %vm2921, %v2639, %v2936
        %2938 = vst [vmem:[%s2919 + $0x18] sm:$0xf] %v2937
        %2939 = vst [vmem:[%s2919 + $0x1c] sm:$0xf] %v2648
        %v2940 = vld [vmem:[%s2919 + $0x20] sm:$0x1]
        %v2941 = vsel %vm221, %v2649, %v2940
        %2942 = vst [vmem:[%s2919 + $0x20] sm:$0x1] %v2941
        %v2943 = vld [vmem:[%s2919 + $0x24] sm:$0xf]
        %v2944 = vsel %vm2921, %v2656, %v2943
        %2945 = vst [vmem:[%s2919 + $0x24] sm:$0xf] %v2944
        %2946 = vst [vmem:[%s2919 + $0x28] sm:$0xf] %v2665
        %v2947 = vld [vmem:[%s2919 + $0x2c] sm:$0x1]
        %v2948 = vsel %vm221, %v2666, %v2947
        %2949 = vst [vmem:[%s2919 + $0x2c] sm:$0x1] %v2948
        %v2950 = vld [vmem:[%s2919 + $0x30] sm:$0xf]
        %v2951 = vsel %vm2921, %v2673, %v2950
        %2952 = vst [vmem:[%s2919 + $0x30] sm:$0xf] %v2951
        %2953 = vst [vmem:[%s2919 + $0x34] sm:$0xf] %v2682
        %v2954 = vld [vmem:[%s2919 + $0x38] sm:$0x1]
        %v2955 = vsel %vm221, %v2683, %v2954
        %2956 = vst [vmem:[%s2919 + $0x38] sm:$0x1] %v2955
        %v2957 = vld [vmem:[%s2919 + $0x3c] sm:$0xf]
        %v2958 = vsel %vm2921, %v2690, %v2957
        %2959 = vst [vmem:[%s2919 + $0x3c] sm:$0xf] %v2958
        %2960 = vst [vmem:[%s2919 + $0x40] sm:$0xf] %v2699
        %v2961 = vld [vmem:[%s2919 + $0x44] sm:$0x1]
        %v2962 = vsel %vm221, %v2700, %v2961
        %2963 = vst [vmem:[%s2919 + $0x44] sm:$0x1] %v2962
        %v2964 = vld [vmem:[%s2919 + $0x48] sm:$0xf]
        %v2965 = vsel %vm2921, %v2707, %v2964
        %2966 = vst [vmem:[%s2919 + $0x48] sm:$0xf] %v2965
        %2967 = vst [vmem:[%s2919 + $0x4c] sm:$0xf] %v2716
        %v2968 = vld [vmem:[%s2919 + $0x50] sm:$0x1]
        %v2969 = vsel %vm221, %v2717, %v2968
        %2970 = vst [vmem:[%s2919 + $0x50] sm:$0x1] %v2969
        %v2971 = vld [vmem:[%s2919 + $0x54] sm:$0xf]
        %v2972 = vsel %vm2921, %v2724, %v2971
        %2973 = vst [vmem:[%s2919 + $0x54] sm:$0xf] %v2972
        %2974 = vst [vmem:[%s2919 + $0x58] sm:$0xf] %v2733
        %v2975 = vld [vmem:[%s2919 + $0x5c] sm:$0x1]
        %v2976 = vsel %vm221, %v2734, %v2975
        %2977 = vst [vmem:[%s2919 + $0x5c] sm:$0x1] %v2976
        %v2978 = vld [vmem:[%s2919 + $0x60] sm:$0xf]
        %v2979 = vsel %vm2921, %v2741, %v2978
        %2980 = vst [vmem:[%s2919 + $0x60] sm:$0xf] %v2979
        %2981 = vst [vmem:[%s2919 + $0x64] sm:$0xf] %v2750
        %v2982 = vld [vmem:[%s2919 + $0x68] sm:$0x1]
        %v2983 = vsel %vm221, %v2751, %v2982
        %2984 = vst [vmem:[%s2919 + $0x68] sm:$0x1] %v2983
        %v2985 = vld [vmem:[%s2919 + $0x6c] sm:$0xf]
        %v2986 = vsel %vm2921, %v2758, %v2985
        %2987 = vst [vmem:[%s2919 + $0x6c] sm:$0xf] %v2986
        %2988 = vst [vmem:[%s2919 + $0x70] sm:$0xf] %v2767
        %v2989 = vld [vmem:[%s2919 + $0x74] sm:$0x1]
        %v2990 = vsel %vm221, %v2768, %v2989
        %2991 = vst [vmem:[%s2919 + $0x74] sm:$0x1] %v2990
        %v2992 = vld [vmem:[%s2919 + $0x78] sm:$0xf]
        %v2993 = vsel %vm2921, %v2775, %v2992
        %2994 = vst [vmem:[%s2919 + $0x78] sm:$0xf] %v2993
        %2995 = vst [vmem:[%s2919 + $0x7c] sm:$0xf] %v2784
        %v2996 = vld [vmem:[%s2919 + $0x80] sm:$0x1]
        %v2997 = vsel %vm221, %v2785, %v2996
        %2998 = vst [vmem:[%s2919 + $0x80] sm:$0x1] %v2997
        %v2999 = vld [vmem:[%s2919 + $0x84] sm:$0xf]
        %v3000 = vsel %vm2921, %v2792, %v2999
        %3001 = vst [vmem:[%s2919 + $0x84] sm:$0xf] %v3000
        %3002 = vst [vmem:[%s2919 + $0x88] sm:$0xf] %v2801
        %v3003 = vld [vmem:[%s2919 + $0x8c] sm:$0x1]
        %v3004 = vsel %vm221, %v2802, %v3003
        %3005 = vst [vmem:[%s2919 + $0x8c] sm:$0x1] %v3004
        %v3006 = vld [vmem:[%s2919 + $0x90] sm:$0xf]
        %v3007 = vsel %vm2921, %v2809, %v3006
        %3008 = vst [vmem:[%s2919 + $0x90] sm:$0xf] %v3007
        %3009 = vst [vmem:[%s2919 + $0x94] sm:$0xf] %v2818
        %v3010 = vld [vmem:[%s2919 + $0x98] sm:$0x1]
        %v3011 = vsel %vm221, %v2819, %v3010
        %3012 = vst [vmem:[%s2919 + $0x98] sm:$0x1] %v3011
        %v3013 = vld [vmem:[%s2919 + $0x9c] sm:$0xf]
        %v3014 = vsel %vm2921, %v2826, %v3013
        %3015 = vst [vmem:[%s2919 + $0x9c] sm:$0xf] %v3014
        %3016 = vst [vmem:[%s2919 + $0xa0] sm:$0xf] %v2835
        %v3017 = vld [vmem:[%s2919 + $0xa4] sm:$0x1]
        %v3018 = vsel %vm221, %v2836, %v3017
        %3019 = vst [vmem:[%s2919 + $0xa4] sm:$0x1] %v3018
        %v3020 = vld [vmem:[%s2919 + $0xa8] sm:$0xf]
        %v3021 = vsel %vm2921, %v2843, %v3020
        %3022 = vst [vmem:[%s2919 + $0xa8] sm:$0xf] %v3021
        %3023 = vst [vmem:[%s2919 + $0xac] sm:$0xf] %v2852
        %v3024 = vld [vmem:[%s2919 + $0xb0] sm:$0x1]
        %v3025 = vsel %vm221, %v2853, %v3024
        %3026 = vst [vmem:[%s2919 + $0xb0] sm:$0x1] %v3025
        %v3027 = vld [vmem:[%s2919 + $0xb4] sm:$0xf]
        %v3028 = vsel %vm2921, %v2860, %v3027
        %3029 = vst [vmem:[%s2919 + $0xb4] sm:$0xf] %v3028
        %3030 = vst [vmem:[%s2919 + $0xb8] sm:$0xf] %v2869
        %v3031 = vld [vmem:[%s2919 + $0xbc] sm:$0x1]
        %v3032 = vsel %vm221, %v2870, %v3031
        %3033 = vst [vmem:[%s2919 + $0xbc] sm:$0x1] %v3032
        %v3034 = vld [vmem:[#allocation2] sm:$0xf]
        %v3035 = vld [vmem:[#allocation2 + $0x4] sm:$0xf]
        %v3036 = vld [vmem:[#allocation2 + $0x8] sm:$0x1]
        %v3037 = vld [vmem:[#allocation2 + $0xc] sm:$0xf]
        %v3038 = vld [vmem:[#allocation2 + $0x10] sm:$0xf]
        %v3039 = vld [vmem:[#allocation2 + $0x14] sm:$0x1]
        %v3040 = vld [vmem:[#allocation2 + $0x18] sm:$0xf]
        %v3041 = vld [vmem:[#allocation2 + $0x1c] sm:$0xf]
        %v3042 = vld [vmem:[#allocation2 + $0x20] sm:$0x1]
        %v3043 = vld [vmem:[#allocation2 + $0x24] sm:$0xf]
        %v3044 = vld [vmem:[#allocation2 + $0x28] sm:$0xf]
        %v3045 = vld [vmem:[#allocation2 + $0x2c] sm:$0x1]
        %v3046 = vld [vmem:[#allocation2 + $0x30] sm:$0xf]
        %v3047 = vld [vmem:[#allocation2 + $0x34] sm:$0xf]
        %v3048 = vld [vmem:[#allocation2 + $0x38] sm:$0x1]
        %v3049 = vld [vmem:[#allocation2 + $0x3c] sm:$0xf]
        %v3050 = vld [vmem:[#allocation2 + $0x40] sm:$0xf]
        %v3051 = vld [vmem:[#allocation2 + $0x44] sm:$0x1]
        %v3052 = vld [vmem:[#allocation2 + $0x48] sm:$0xf]
        %v3053 = vld [vmem:[#allocation2 + $0x4c] sm:$0xf]
        %v3054 = vld [vmem:[#allocation2 + $0x50] sm:$0x1]
        %v3055 = vld [vmem:[#allocation2 + $0x54] sm:$0xf]
        %v3056 = vld [vmem:[#allocation2 + $0x58] sm:$0xf]
        %v3057 = vld [vmem:[#allocation2 + $0x5c] sm:$0x1]
        %v3058 = vld [vmem:[#allocation2 + $0x60] sm:$0xf]
        %v3059 = vld [vmem:[#allocation2 + $0x64] sm:$0xf]
        %v3060 = vld [vmem:[#allocation2 + $0x68] sm:$0x1]
        %v3061 = vld [vmem:[#allocation2 + $0x6c] sm:$0xf]
        %v3062 = vld [vmem:[#allocation2 + $0x70] sm:$0xf]
        %v3063 = vld [vmem:[#allocation2 + $0x74] sm:$0x1]
        %v3064 = vld [vmem:[#allocation2 + $0x78] sm:$0xf]
        %v3065 = vld [vmem:[#allocation2 + $0x7c] sm:$0xf]
        %v3066 = vld [vmem:[#allocation2 + $0x80] sm:$0x1]
        %v3067 = vld [vmem:[#allocation2 + $0x84] sm:$0xf]
        %v3068 = vld [vmem:[#allocation2 + $0x88] sm:$0xf]
        %v3069 = vld [vmem:[#allocation2 + $0x8c] sm:$0x1]
        %v3070 = vld [vmem:[#allocation2 + $0x90] sm:$0xf]
        %v3071 = vld [vmem:[#allocation2 + $0x94] sm:$0xf]
        %v3072 = vld [vmem:[#allocation2 + $0x98] sm:$0x1]
        %v3073 = vld [vmem:[#allocation2 + $0x9c] sm:$0xf]
        %v3074 = vld [vmem:[#allocation2 + $0xa0] sm:$0xf]
        %v3075 = vld [vmem:[#allocation2 + $0xa4] sm:$0x1]
        %v3076 = vld [vmem:[#allocation2 + $0xa8] sm:$0xf]
        %v3077 = vld [vmem:[#allocation2 + $0xac] sm:$0xf]
        %v3078 = vld [vmem:[#allocation2 + $0xb0] sm:$0x1]
        %v3079 = vld [vmem:[#allocation2 + $0xb4] sm:$0xf]
        %v3080 = vld [vmem:[#allocation2 + $0xb8] sm:$0xf]
        %v3081 = vld [vmem:[#allocation2 + $0xbc] sm:$0x1]
        %v3082 = vld [vmem:[#allocation2 + $0xc0] sm:$0xf]
        %v3083 = vld [vmem:[#allocation2 + $0xc4] sm:$0xf]
        %v3084 = vld [vmem:[#allocation2 + $0xc8] sm:$0x1]
        %v3085 = vld [vmem:[#allocation2 + $0xcc] sm:$0xf]
        %v3086 = vld [vmem:[#allocation2 + $0xd0] sm:$0xf]
        %v3087 = vld [vmem:[#allocation2 + $0xd4] sm:$0x1]
        %v3124 = vunpack.c.l.b16 %v3034
        %v3125 = vunpack.c.l.b16 %v3035
        %v3126 = vunpack.c.l.b16 %v3037
        %v3127 = vunpack.c.l.b16 %v3038
        %v3128 = vunpack.c.l.b16 %v3040
        %v3129 = vunpack.c.l.b16 %v3041
        %v3130 = vunpack.c.l.b16 %v3043
        %v3131 = vunpack.c.l.b16 %v3044
        %v3132 = vunpack.c.l.b16 %v3046
        %v3133 = vunpack.c.l.b16 %v3047
        %v3134 = vunpack.c.l.b16 %v3049
        %v3135 = vunpack.c.l.b16 %v3050
        %v3136 = vunpack.c.l.b16 %v3052
        %v3137 = vunpack.c.l.b16 %v3053
        %v3138 = vunpack.c.l.b16 %v3055
        %v3139 = vunpack.c.l.b16 %v3056
        %v3140 = vunpack.c.l.b16 %v3058
        %v3141 = vunpack.c.l.b16 %v3059
        %v3142 = vunpack.c.l.b16 %v3061
        %v3143 = vunpack.c.l.b16 %v3062
        %v3144 = vunpack.c.l.b16 %v3064
        %v3145 = vunpack.c.l.b16 %v3065
        %v3146 = vunpack.c.l.b16 %v3067
        %v3147 = vunpack.c.l.b16 %v3068
        %v3148 = vunpack.c.l.b16 %v3070
        %v3149 = vunpack.c.l.b16 %v3071
        %v3150 = vunpack.c.l.b16 %v3073
        %v3151 = vunpack.c.l.b16 %v3074
        %v3152 = vunpack.c.l.b16 %v3076
        %v3153 = vunpack.c.l.b16 %v3077
        %v3154 = vunpack.c.l.b16 %v3079
        %v3155 = vunpack.c.l.b16 %v3080
        %v3156 = vunpack.c.l.b16 %v3082
        %v3157 = vunpack.c.l.b16 %v3083
        %v3158 = vunpack.c.l.b16 %v3085
        %v3159 = vunpack.c.l.b16 %v3086
        %v3160 = vpack.c.b16 %v3125, %v3124
        %v3161 = vpack.c.b16 %v3127, %v3126
        %v3162 = vpack.c.b16 %v3129, %v3128
        %v3163 = vpack.c.b16 %v3131, %v3130
        %v3164 = vpack.c.b16 %v3133, %v3132
        %v3165 = vpack.c.b16 %v3135, %v3134
        %v3166 = vpack.c.b16 %v3137, %v3136
        %v3167 = vpack.c.b16 %v3139, %v3138
        %v3168 = vpack.c.b16 %v3141, %v3140
        %v3169 = vpack.c.b16 %v3143, %v3142
        %v3170 = vpack.c.b16 %v3145, %v3144
        %v3171 = vpack.c.b16 %v3147, %v3146
        %v3172 = vpack.c.b16 %v3149, %v3148
        %v3173 = vpack.c.b16 %v3151, %v3150
        %v3174 = vpack.c.b16 %v3153, %v3152
        %v3175 = vpack.c.b16 %v3155, %v3154
        %v3176 = vpack.c.b16 %v3157, %v3156
        %v3177 = vpack.c.b16 %v3159, %v3158
        %v3214 = vunpack.c.l.b16 %v3036
        %v3215 = vunpack.c.l.b16 %v3039
        %v3216 = vunpack.c.l.b16 %v3042
        %v3217 = vunpack.c.l.b16 %v3045
        %v3218 = vunpack.c.l.b16 %v3048
        %v3219 = vunpack.c.l.b16 %v3051
        %v3220 = vunpack.c.l.b16 %v3054
        %v3221 = vunpack.c.l.b16 %v3057
        %v3222 = vunpack.c.l.b16 %v3060
        %v3223 = vunpack.c.l.b16 %v3063
        %v3224 = vunpack.c.l.b16 %v3066
        %v3225 = vunpack.c.l.b16 %v3069
        %v3226 = vunpack.c.l.b16 %v3072
        %v3227 = vunpack.c.l.b16 %v3075
        %v3228 = vunpack.c.l.b16 %v3078
        %v3229 = vunpack.c.l.b16 %v3081
        %v3230 = vunpack.c.l.b16 %v3084
        %v3231 = vunpack.c.l.b16 %v3087
        %v3232 = vpack.c.b16 %v3214, %v3214
        %v3233 = vpack.c.b16 %v3215, %v3215
        %v3234 = vpack.c.b16 %v3216, %v3216
        %v3235 = vpack.c.b16 %v3217, %v3217
        %v3236 = vpack.c.b16 %v3218, %v3218
        %v3237 = vpack.c.b16 %v3219, %v3219
        %v3238 = vpack.c.b16 %v3220, %v3220
        %v3239 = vpack.c.b16 %v3221, %v3221
        %v3240 = vpack.c.b16 %v3222, %v3222
        %v3241 = vpack.c.b16 %v3223, %v3223
        %v3242 = vpack.c.b16 %v3224, %v3224
        %v3243 = vpack.c.b16 %v3225, %v3225
        %v3244 = vpack.c.b16 %v3226, %v3226
        %v3245 = vpack.c.b16 %v3227, %v3227
        %v3246 = vpack.c.b16 %v3228, %v3228
        %v3247 = vpack.c.b16 %v3229, %v3229
        %v3248 = vpack.c.b16 %v3230, %v3230
        %v3249 = vpack.c.b16 %v3231, %v3231
        %v3251 = vshrl.u32 %v3160, 16
        %v3253 = vshll.u32 %v3160, 16
        %v3255 = vrot.slane %v3253, 1
        %v3256 = vor.u32 %v3251, %v3255
        %v3258 = vshll.u32 %v3232, 16
        %v3260 = vrot.slane %v3258, 1
        %v3261 = vsel %vm548, %v3256, %v3260
        %v3263 = vshrl.u32 %v3161, 16
        %v3265 = vshll.u32 %v3161, 16
        %v3267 = vrot.slane %v3265, 1
        %v3268 = vor.u32 %v3263, %v3267
        %v3270 = vshll.u32 %v3233, 16
        %v3272 = vrot.slane %v3270, 1
        %v3273 = vsel %vm548, %v3268, %v3272
        %v3275 = vshrl.u32 %v3162, 16
        %v3277 = vshll.u32 %v3162, 16
        %v3279 = vrot.slane %v3277, 1
        %v3280 = vor.u32 %v3275, %v3279
        %v3282 = vshll.u32 %v3234, 16
        %v3284 = vrot.slane %v3282, 1
        %v3285 = vsel %vm548, %v3280, %v3284
        %v3287 = vshrl.u32 %v3163, 16
        %v3289 = vshll.u32 %v3163, 16
        %v3291 = vrot.slane %v3289, 1
        %v3292 = vor.u32 %v3287, %v3291
        %v3294 = vshll.u32 %v3235, 16
        %v3296 = vrot.slane %v3294, 1
        %v3297 = vsel %vm548, %v3292, %v3296
        %v3299 = vshrl.u32 %v3164, 16
        %v3301 = vshll.u32 %v3164, 16
        %v3303 = vrot.slane %v3301, 1
        %v3304 = vor.u32 %v3299, %v3303
        %v3306 = vshll.u32 %v3236, 16
        %v3308 = vrot.slane %v3306, 1
        %v3309 = vsel %vm548, %v3304, %v3308
        %v3311 = vshrl.u32 %v3165, 16
        %v3313 = vshll.u32 %v3165, 16
        %v3315 = vrot.slane %v3313, 1
        %v3316 = vor.u32 %v3311, %v3315
        %v3318 = vshll.u32 %v3237, 16
        %v3320 = vrot.slane %v3318, 1
        %v3321 = vsel %vm548, %v3316, %v3320
        %v3323 = vshrl.u32 %v3166, 16
        %v3325 = vshll.u32 %v3166, 16
        %v3327 = vrot.slane %v3325, 1
        %v3328 = vor.u32 %v3323, %v3327
        %v3330 = vshll.u32 %v3238, 16
        %v3332 = vrot.slane %v3330, 1
        %v3333 = vsel %vm548, %v3328, %v3332
        %v3335 = vshrl.u32 %v3167, 16
        %v3337 = vshll.u32 %v3167, 16
        %v3339 = vrot.slane %v3337, 1
        %v3340 = vor.u32 %v3335, %v3339
        %v3342 = vshll.u32 %v3239, 16
        %v3344 = vrot.slane %v3342, 1
        %v3345 = vsel %vm548, %v3340, %v3344
        %v3347 = vshrl.u32 %v3168, 16
        %v3349 = vshll.u32 %v3168, 16
        %v3351 = vrot.slane %v3349, 1
        %v3352 = vor.u32 %v3347, %v3351
        %v3354 = vshll.u32 %v3240, 16
        %v3356 = vrot.slane %v3354, 1
        %v3357 = vsel %vm548, %v3352, %v3356
        %v3359 = vshrl.u32 %v3169, 16
        %v3361 = vshll.u32 %v3169, 16
        %v3363 = vrot.slane %v3361, 1
        %v3364 = vor.u32 %v3359, %v3363
        %v3366 = vshll.u32 %v3241, 16
        %v3368 = vrot.slane %v3366, 1
        %v3369 = vsel %vm548, %v3364, %v3368
        %v3371 = vshrl.u32 %v3170, 16
        %v3373 = vshll.u32 %v3170, 16
        %v3375 = vrot.slane %v3373, 1
        %v3376 = vor.u32 %v3371, %v3375
        %v3378 = vshll.u32 %v3242, 16
        %v3380 = vrot.slane %v3378, 1
        %v3381 = vsel %vm548, %v3376, %v3380
        %v3383 = vshrl.u32 %v3171, 16
        %v3385 = vshll.u32 %v3171, 16
        %v3387 = vrot.slane %v3385, 1
        %v3388 = vor.u32 %v3383, %v3387
        %v3390 = vshll.u32 %v3243, 16
        %v3392 = vrot.slane %v3390, 1
        %v3393 = vsel %vm548, %v3388, %v3392
        %v3395 = vshrl.u32 %v3172, 16
        %v3397 = vshll.u32 %v3172, 16
        %v3399 = vrot.slane %v3397, 1
        %v3400 = vor.u32 %v3395, %v3399
        %v3402 = vshll.u32 %v3244, 16
        %v3404 = vrot.slane %v3402, 1
        %v3405 = vsel %vm548, %v3400, %v3404
        %v3407 = vshrl.u32 %v3173, 16
        %v3409 = vshll.u32 %v3173, 16
        %v3411 = vrot.slane %v3409, 1
        %v3412 = vor.u32 %v3407, %v3411
        %v3414 = vshll.u32 %v3245, 16
        %v3416 = vrot.slane %v3414, 1
        %v3417 = vsel %vm548, %v3412, %v3416
        %v3419 = vshrl.u32 %v3174, 16
        %v3421 = vshll.u32 %v3174, 16
        %v3423 = vrot.slane %v3421, 1
        %v3424 = vor.u32 %v3419, %v3423
        %v3426 = vshll.u32 %v3246, 16
        %v3428 = vrot.slane %v3426, 1
        %v3429 = vsel %vm548, %v3424, %v3428
        %v3431 = vshrl.u32 %v3175, 16
        %v3433 = vshll.u32 %v3175, 16
        %v3435 = vrot.slane %v3433, 1
        %v3436 = vor.u32 %v3431, %v3435
        %v3438 = vshll.u32 %v3247, 16
        %v3440 = vrot.slane %v3438, 1
        %v3441 = vsel %vm548, %v3436, %v3440
        %v3443 = vshrl.u32 %v3176, 16
        %v3445 = vshll.u32 %v3176, 16
        %v3447 = vrot.slane %v3445, 1
        %v3448 = vor.u32 %v3443, %v3447
        %v3450 = vshll.u32 %v3248, 16
        %v3452 = vrot.slane %v3450, 1
        %v3453 = vsel %vm548, %v3448, %v3452
        %v3455 = vshrl.u32 %v3177, 16
        %v3457 = vshll.u32 %v3177, 16
        %v3459 = vrot.slane %v3457, 1
        %v3460 = vor.u32 %v3455, %v3459
        %v3462 = vshll.u32 %v3249, 16
        %v3464 = vrot.slane %v3462, 1
        %v3465 = vsel %vm548, %v3460, %v3464
        %v3484 = vrot.slane %v3160, 1
        %v3485 = vrot.slane %v3232, 1
        %v3486 = vsel %vm783, %v3484, %v3485
        %v3487 = vrot.slane %v3161, 1
        %v3488 = vrot.slane %v3233, 1
        %v3489 = vsel %vm783, %v3487, %v3488
        %v3490 = vrot.slane %v3162, 1
        %v3491 = vrot.slane %v3234, 1
        %v3492 = vsel %vm783, %v3490, %v3491
        %v3493 = vrot.slane %v3163, 1
        %v3494 = vrot.slane %v3235, 1
        %v3495 = vsel %vm783, %v3493, %v3494
        %v3496 = vrot.slane %v3164, 1
        %v3497 = vrot.slane %v3236, 1
        %v3498 = vsel %vm783, %v3496, %v3497
        %v3499 = vrot.slane %v3165, 1
        %v3500 = vrot.slane %v3237, 1
        %v3501 = vsel %vm783, %v3499, %v3500
        %v3502 = vrot.slane %v3166, 1
        %v3503 = vrot.slane %v3238, 1
        %v3504 = vsel %vm783, %v3502, %v3503
        %v3505 = vrot.slane %v3167, 1
        %v3506 = vrot.slane %v3239, 1
        %v3507 = vsel %vm783, %v3505, %v3506
        %v3508 = vrot.slane %v3168, 1
        %v3509 = vrot.slane %v3240, 1
        %v3510 = vsel %vm783, %v3508, %v3509
        %v3511 = vrot.slane %v3169, 1
        %v3512 = vrot.slane %v3241, 1
        %v3513 = vsel %vm783, %v3511, %v3512
        %v3514 = vrot.slane %v3170, 1
        %v3515 = vrot.slane %v3242, 1
        %v3516 = vsel %vm783, %v3514, %v3515
        %v3517 = vrot.slane %v3171, 1
        %v3518 = vrot.slane %v3243, 1
        %v3519 = vsel %vm783, %v3517, %v3518
        %v3520 = vrot.slane %v3172, 1
        %v3521 = vrot.slane %v3244, 1
        %v3522 = vsel %vm783, %v3520, %v3521
        %v3523 = vrot.slane %v3173, 1
        %v3524 = vrot.slane %v3245, 1
        %v3525 = vsel %vm783, %v3523, %v3524
        %v3526 = vrot.slane %v3174, 1
        %v3527 = vrot.slane %v3246, 1
        %v3528 = vsel %vm783, %v3526, %v3527
        %v3529 = vrot.slane %v3175, 1
        %v3530 = vrot.slane %v3247, 1
        %v3531 = vsel %vm783, %v3529, %v3530
        %v3532 = vrot.slane %v3176, 1
        %v3533 = vrot.slane %v3248, 1
        %v3534 = vsel %vm783, %v3532, %v3533
        %v3535 = vrot.slane %v3177, 1
        %v3536 = vrot.slane %v3249, 1
        %v3537 = vsel %vm783, %v3535, %v3536
        %v3556 = vld [vmem:[#allocation3] sm:$0xf]
        %v3557 = vld [vmem:[#allocation3 + $0x4] sm:$0xf]
        %v3558 = vld [vmem:[#allocation3 + $0x8] sm:$0xf]
        %v3559 = vld [vmem:[#allocation3 + $0xc] sm:$0xf]
        %v3560 = vld [vmem:[#allocation3 + $0x10] sm:$0xf]
        %v3561 = vld [vmem:[#allocation3 + $0x14] sm:$0xf]
        %v3562 = vld [vmem:[#allocation3 + $0x18] sm:$0xf]
        %v3563 = vld [vmem:[#allocation3 + $0x1c] sm:$0xf]
        %v3564 = vld [vmem:[#allocation3 + $0x20] sm:$0xf]
        %v3565 = vld [vmem:[#allocation3 + $0x24] sm:$0xf]
        %v3566 = vld [vmem:[#allocation3 + $0x28] sm:$0xf]
        %v3567 = vld [vmem:[#allocation3 + $0x2c] sm:$0xf]
        %v3568 = vld [vmem:[#allocation3 + $0x30] sm:$0xf]
        %v3569 = vld [vmem:[#allocation3 + $0x34] sm:$0xf]
        %v3570 = vld [vmem:[#allocation3 + $0x38] sm:$0xf]
        %v3571 = vld [vmem:[#allocation3 + $0x3c] sm:$0xf]
        %v3572 = vld [vmem:[#allocation3 + $0x40] sm:$0xf]
        %v3573 = vld [vmem:[#allocation3 + $0x44] sm:$0xf]
        %v3574 = vld [vmem:[#allocation3 + $0x48] sm:$0xf]
        %v3575 = vld [vmem:[#allocation3 + $0x4c] sm:$0xf]
        %v3576 = vld [vmem:[#allocation3 + $0x50] sm:$0xf]
        %v3577 = vld [vmem:[#allocation3 + $0x54] sm:$0xf]
        %v3578 = vld [vmem:[#allocation3 + $0x58] sm:$0xf]
        %v3579 = vld [vmem:[#allocation3 + $0x5c] sm:$0xf]
        %v3580 = vld [vmem:[#allocation3 + $0x60] sm:$0xf]
        %v3581 = vld [vmem:[#allocation3 + $0x64] sm:$0xf]
        %v3582 = vld [vmem:[#allocation3 + $0x68] sm:$0xf]
        %v3583 = vld [vmem:[#allocation3 + $0x6c] sm:$0xf]
        %v3584 = vld [vmem:[#allocation3 + $0x70] sm:$0xf]
        %v3585 = vld [vmem:[#allocation3 + $0x74] sm:$0xf]
        %v3586 = vld [vmem:[#allocation3 + $0x78] sm:$0xf]
        %v3587 = vld [vmem:[#allocation3 + $0x7c] sm:$0xf]
        %v3588 = vld [vmem:[#allocation3 + $0x80] sm:$0xf]
        %v3589 = vld [vmem:[#allocation3 + $0x84] sm:$0xf]
        %v3590 = vld [vmem:[#allocation3 + $0x88] sm:$0xf]
        %v3591 = vld [vmem:[#allocation3 + $0x8c] sm:$0xf]
        %v3592 = vld [vmem:[#allocation3 + $0x90] sm:$0xf]
        %v3593 = vld [vmem:[#allocation3 + $0x94] sm:$0xf]
        %v3594 = vld [vmem:[#allocation3 + $0x98] sm:$0xf]
        %v3595 = vld [vmem:[#allocation3 + $0x9c] sm:$0xf]
        %v3596 = vld [vmem:[#allocation3 + $0xa0] sm:$0xf]
        %v3597 = vld [vmem:[#allocation3 + $0xa4] sm:$0xf]
        %v3598 = vld [vmem:[#allocation3 + $0xa8] sm:$0xf]
        %v3599 = vld [vmem:[#allocation3 + $0xac] sm:$0xf]
        %v3600 = vld [vmem:[#allocation3 + $0xb0] sm:$0xf]
        %v3601 = vld [vmem:[#allocation3 + $0xb4] sm:$0xf]
        %v3602 = vld [vmem:[#allocation3 + $0xb8] sm:$0xf]
        %v3603 = vld [vmem:[#allocation3 + $0xbc] sm:$0xf]
        %s3604 = scalar_lea.vmem [#allocation3], 192
        %v3605 = vld [vmem:[%s3604] sm:$0xf]
        %v3606 = vld [vmem:[%s3604 + $0x4] sm:$0xf]
        %v3607 = vld [vmem:[%s3604 + $0x8] sm:$0xf]
        %v3608 = vld [vmem:[%s3604 + $0xc] sm:$0xf]
        %v3609 = vld [vmem:[%s3604 + $0x10] sm:$0xf]
        %v3610 = vld [vmem:[%s3604 + $0x14] sm:$0xf]
        %v3611 = vld [vmem:[%s3604 + $0x18] sm:$0xf]
        %v3612 = vld [vmem:[%s3604 + $0x1c] sm:$0xf]
        %v3613 = vld [vmem:[%s3604 + $0x20] sm:$0xf]
        %v3614 = vld [vmem:[%s3604 + $0x24] sm:$0xf]
        %v3615 = vld [vmem:[%s3604 + $0x28] sm:$0xf]
        %v3616 = vld [vmem:[%s3604 + $0x2c] sm:$0xf]
        %v3617 = vld [vmem:[%s3604 + $0x30] sm:$0xf]
        %v3618 = vld [vmem:[%s3604 + $0x34] sm:$0xf]
        %v3619 = vld [vmem:[%s3604 + $0x38] sm:$0xf]
        %v3620 = vld [vmem:[%s3604 + $0x3c] sm:$0xf]
        %v3621 = vld [vmem:[%s3604 + $0x40] sm:$0xf]
        %v3622 = vld [vmem:[%s3604 + $0x44] sm:$0xf]
        %v3623 = vld [vmem:[%s3604 + $0x48] sm:$0xf]
        %v3624 = vld [vmem:[%s3604 + $0x4c] sm:$0xf]
        %v3625 = vld [vmem:[%s3604 + $0x50] sm:$0xf]
        %v3626 = vld [vmem:[%s3604 + $0x54] sm:$0xf]
        %v3627 = vld [vmem:[%s3604 + $0x58] sm:$0xf]
        %v3628 = vld [vmem:[%s3604 + $0x5c] sm:$0xf]
        %v3629 = vld [vmem:[%s3604 + $0x60] sm:$0xf]
        %v3630 = vld [vmem:[%s3604 + $0x64] sm:$0xf]
        %v3631 = vld [vmem:[%s3604 + $0x68] sm:$0xf]
        %v3632 = vld [vmem:[%s3604 + $0x6c] sm:$0xf]
        %v3633 = vld [vmem:[%s3604 + $0x70] sm:$0xf]
        %v3634 = vld [vmem:[%s3604 + $0x74] sm:$0xf]
        %v3635 = vld [vmem:[%s3604 + $0x78] sm:$0xf]
        %v3636 = vld [vmem:[%s3604 + $0x7c] sm:$0xf]
        %v3637 = vld [vmem:[%s3604 + $0x80] sm:$0xf]
        %v3638 = vld [vmem:[%s3604 + $0x84] sm:$0xf]
        %v3639 = vld [vmem:[%s3604 + $0x88] sm:$0xf]
        %v3640 = vld [vmem:[%s3604 + $0x8c] sm:$0xf]
        %v3641 = vld [vmem:[%s3604 + $0x90] sm:$0xf]
        %v3642 = vld [vmem:[%s3604 + $0x94] sm:$0xf]
        %v3643 = vld [vmem:[%s3604 + $0x98] sm:$0xf]
        %v3644 = vld [vmem:[%s3604 + $0x9c] sm:$0xf]
        %v3645 = vld [vmem:[%s3604 + $0xa0] sm:$0xf]
        %v3646 = vld [vmem:[%s3604 + $0xa4] sm:$0xf]
        %v3647 = vld [vmem:[%s3604 + $0xa8] sm:$0xf]
        %v3648 = vld [vmem:[%s3604 + $0xac] sm:$0xf]
        %v3649 = vld [vmem:[%s3604 + $0xb0] sm:$0xf]
        %v3650 = vld [vmem:[%s3604 + $0xb4] sm:$0xf]
        %v3651 = vld [vmem:[%s3604 + $0xb8] sm:$0xf]
        %v3652 = vld [vmem:[%s3604 + $0xbc] sm:$0xf]
        %v3701 = vunpack.c.l.b16 %v3605
        %v3702 = vunpack.c.l.b16 %v3606
        %v3703 = vunpack.c.l.b16 %v3607
        %v3704 = vunpack.c.l.b16 %v3608
        %v3705 = vunpack.c.l.b16 %v3609
        %v3706 = vunpack.c.l.b16 %v3610
        %v3707 = vunpack.c.l.b16 %v3611
        %v3708 = vunpack.c.l.b16 %v3612
        %v3709 = vunpack.c.l.b16 %v3613
        %v3710 = vunpack.c.l.b16 %v3614
        %v3711 = vunpack.c.l.b16 %v3615
        %v3712 = vunpack.c.l.b16 %v3616
        %v3713 = vunpack.c.l.b16 %v3617
        %v3714 = vunpack.c.l.b16 %v3618
        %v3715 = vunpack.c.l.b16 %v3619
        %v3716 = vunpack.c.l.b16 %v3620
        %v3717 = vunpack.c.l.b16 %v3621
        %v3718 = vunpack.c.l.b16 %v3622
        %v3719 = vunpack.c.l.b16 %v3623
        %v3720 = vunpack.c.l.b16 %v3624
        %v3721 = vunpack.c.l.b16 %v3625
        %v3722 = vunpack.c.l.b16 %v3626
        %v3723 = vunpack.c.l.b16 %v3627
        %v3724 = vunpack.c.l.b16 %v3628
        %v3725 = vunpack.c.l.b16 %v3629
        %v3726 = vunpack.c.l.b16 %v3630
        %v3727 = vunpack.c.l.b16 %v3631
        %v3728 = vunpack.c.l.b16 %v3632
        %v3729 = vunpack.c.l.b16 %v3633
        %v3730 = vunpack.c.l.b16 %v3634
        %v3731 = vunpack.c.l.b16 %v3635
        %v3732 = vunpack.c.l.b16 %v3636
        %v3733 = vunpack.c.l.b16 %v3637
        %v3734 = vunpack.c.l.b16 %v3638
        %v3735 = vunpack.c.l.b16 %v3639
        %v3736 = vunpack.c.l.b16 %v3640
        %v3737 = vunpack.c.l.b16 %v3641
        %v3738 = vunpack.c.l.b16 %v3642
        %v3739 = vunpack.c.l.b16 %v3643
        %v3740 = vunpack.c.l.b16 %v3644
        %v3741 = vunpack.c.l.b16 %v3645
        %v3742 = vunpack.c.l.b16 %v3646
        %v3743 = vunpack.c.l.b16 %v3647
        %v3744 = vunpack.c.l.b16 %v3648
        %v3745 = vunpack.c.l.b16 %v3649
        %v3746 = vunpack.c.l.b16 %v3650
        %v3747 = vunpack.c.l.b16 %v3651
        %v3748 = vunpack.c.l.b16 %v3652
        %v3749 = vpack.c.b16 %v3702, %v3701
        %v3750 = vpack.c.b16 %v3704, %v3703
        %v3751 = vpack.c.b16 %v3706, %v3705
        %v3752 = vpack.c.b16 %v3708, %v3707
        %v3753 = vpack.c.b16 %v3710, %v3709
        %v3754 = vpack.c.b16 %v3712, %v3711
        %v3755 = vpack.c.b16 %v3714, %v3713
        %v3756 = vpack.c.b16 %v3716, %v3715
        %v3757 = vpack.c.b16 %v3718, %v3717
        %v3758 = vpack.c.b16 %v3720, %v3719
        %v3759 = vpack.c.b16 %v3722, %v3721
        %v3760 = vpack.c.b16 %v3724, %v3723
        %v3761 = vpack.c.b16 %v3726, %v3725
        %v3762 = vpack.c.b16 %v3728, %v3727
        %v3763 = vpack.c.b16 %v3730, %v3729
        %v3764 = vpack.c.b16 %v3732, %v3731
        %v3765 = vpack.c.b16 %v3734, %v3733
        %v3766 = vpack.c.b16 %v3736, %v3735
        %v3767 = vpack.c.b16 %v3738, %v3737
        %v3768 = vpack.c.b16 %v3740, %v3739
        %v3769 = vpack.c.b16 %v3742, %v3741
        %v3770 = vpack.c.b16 %v3744, %v3743
        %v3771 = vpack.c.b16 %v3746, %v3745
        %v3772 = vpack.c.b16 %v3748, %v3747
        %3797 = vmatprep.subr.bf16.mxu0 0
        %3798 = vmatpush1.bf16.msra.mxu0 %v3749
        %3799 = vmatprep.subr.bf16.mxu0 0
        %3800 = vmatpush1.bf16.msra.mxu0 %v3750
        %3801 = vmatprep.subr.bf16.mxu0 0
        %3802 = vmatpush1.bf16.msra.mxu0 %v3751
        %3803 = vmatprep.subr.bf16.mxu0 0
        %3804 = vmatpush1.bf16.msra.mxu0 %v3752
        %3805 = vmatprep.subr.bf16.mxu0 0
        %3806 = vmatpush1.bf16.msra.mxu0 %v3753
        %3807 = vmatprep.subr.bf16.mxu0 0
        %3808 = vmatpush1.bf16.msra.mxu0 %v3754
        %3809 = vmatprep.subr.bf16.mxu0 0
        %3810 = vmatpush1.bf16.msra.mxu0 %v3755
        %3811 = vmatprep.subr.bf16.mxu0 0
        %3812 = vmatpush1.bf16.msra.mxu0 %v3756
        %3813 = vmatprep.subr.bf16.mxu0 0
        %3814 = vmatpush1.bf16.msra.mxu0 %v3757
        %3815 = vmatprep.subr.bf16.mxu0 0
        %3816 = vmatpush1.bf16.msra.mxu0 %v3758
        %3817 = vmatprep.subr.bf16.mxu0 0
        %3818 = vmatpush1.bf16.msra.mxu0 %v3759
        %3819 = vmatprep.subr.bf16.mxu0 0
        %3820 = vmatpush1.bf16.msra.mxu0 %v3760
        %3821 = vmatprep.subr.bf16.mxu0 0
        %3822 = vmatpush1.bf16.msra.mxu0 %v3761
        %3823 = vmatprep.subr.bf16.mxu0 0
        %3824 = vmatpush1.bf16.msra.mxu0 %v3762
        %3825 = vmatprep.subr.bf16.mxu0 0
        %3826 = vmatpush1.bf16.msra.mxu0 %v3763
        %3827 = vmatprep.subr.bf16.mxu0 0
        %3828 = vmatpush1.bf16.msra.mxu0 %v3764
        %3829 = vmatprep.mubr.bf16.mxu0 %v3273
        %3830 = vmatmul.mubr.bf16.gmra.mrb[0].mxu0 %v3161
        %v3831 = vpop.f32.mrb[0].mxu0
        %v3832 = vadd.f32 0.0, %v3831
        %v3833 = vpop.f32.mrb[0].mxu0
        %v3834 = vpop.f32.mrb[0].mxu0
        %v3835 = vadd.f32 0.0, %v3834
        %v3836 = vpop.f32.mrb[0].mxu0
        %3837 = vmatprep.mubr.bf16.mxu0 %v3285
        %3838 = vmatmul.mubr.bf16.gmra.mrb[0].mxu0 %v3162
        %v3839 = vpop.f32.mrb[0].mxu0
        %v3840 = vadd.f32 0.0, %v3839
        %v3841 = vpop.f32.mrb[0].mxu0
        %v3842 = vpop.f32.mrb[0].mxu0
        %v3843 = vadd.f32 0.0, %v3842
        %v3844 = vpop.f32.mrb[0].mxu0
        %3845 = vmatprep.mubr.bf16.mxu0 %v3297
        %3846 = vmatmul.mubr.bf16.gmra.mrb[0].mxu0 %v3163
        %v3847 = vpop.f32.mrb[0].mxu0
        %v3848 = vadd.f32 0.0, %v3847
        %v3849 = vpop.f32.mrb[0].mxu0
        %v3850 = vpop.f32.mrb[0].mxu0
        %v3851 = vadd.f32 0.0, %v3850
        %v3852 = vpop.f32.mrb[0].mxu0
        %3853 = vmatprep.mubr.bf16.mxu0 %v3309
        %3854 = vmatmul.mubr.bf16.gmra.mrb[0].mxu0 %v3164
        %v3855 = vpop.f32.mrb[0].mxu0
        %v3856 = vadd.f32 0.0, %v3855
        %v3857 = vpop.f32.mrb[0].mxu0
        %v3858 = vpop.f32.mrb[0].mxu0
        %v3859 = vadd.f32 0.0, %v3858
        %v3860 = vpop.f32.mrb[0].mxu0
        %3861 = vmatprep.mubr.bf16.mxu0 %v3321
        %3862 = vmatmul.mubr.bf16.gmra.mrb[0].mxu0 %v3165
        %v3863 = vpop.f32.mrb[0].mxu0
        %v3864 = vadd.f32 0.0, %v3863
        %v3865 = vpop.f32.mrb[0].mxu0
        %v3866 = vpop.f32.mrb[0].mxu0
        %v3867 = vadd.f32 0.0, %v3866
        %v3868 = vpop.f32.mrb[0].mxu0
        %3869 = vmatprep.mubr.bf16.mxu0 %v3333
        %3870 = vmatmul.mubr.bf16.gmra.mrb[0].mxu0 %v3166
        %v3871 = vpop.f32.mrb[0].mxu0
        %v3872 = vadd.f32 0.0, %v3871
        %v3873 = vpop.f32.mrb[0].mxu0
        %v3874 = vpop.f32.mrb[0].mxu0
        %v3875 = vadd.f32 0.0, %v3874
        %v3876 = vpop.f32.mrb[0].mxu0
        %3877 = vmatprep.mubr.bf16.mxu0 %v3345
        %3878 = vmatmul.mubr.bf16.gmra.mrb[0].mxu0 %v3167
        %v3879 = vpop.f32.mrb[0].mxu0
        %v3880 = vadd.f32 0.0, %v3879
        %v3881 = vpop.f32.mrb[0].mxu0
        %v3882 = vpop.f32.mrb[0].mxu0
        %v3883 = vadd.f32 0.0, %v3882
        %v3884 = vpop.f32.mrb[0].mxu0
        %3885 = vmatprep.mubr.bf16.mxu0 %v3357
        %3886 = vmatmul.mubr.bf16.gmra.mrb[0].mxu0 %v3168
        %v3887 = vpop.f32.mrb[0].mxu0
        %v3888 = vadd.f32 0.0, %v3887
        %v3889 = vpop.f32.mrb[0].mxu0
        %v3890 = vpop.f32.mrb[0].mxu0
        %v3891 = vadd.f32 0.0, %v3890
        %v3892 = vpop.f32.mrb[0].mxu0
        %3893 = vmatprep.mubr.bf16.mxu0 %v3369
        %3894 = vmatmul.mubr.bf16.gmra.mrb[0].mxu0 %v3169
        %v3895 = vpop.f32.mrb[0].mxu0
        %v3896 = vadd.f32 0.0, %v3895
        %v3897 = vpop.f32.mrb[0].mxu0
        %v3898 = vpop.f32.mrb[0].mxu0
        %v3899 = vadd.f32 0.0, %v3898
        %v3900 = vpop.f32.mrb[0].mxu0
        %3901 = vmatprep.mubr.bf16.mxu0 %v3381
        %3902 = vmatmul.mubr.bf16.gmra.mrb[0].mxu0 %v3170
        %v3903 = vpop.f32.mrb[0].mxu0
        %v3904 = vadd.f32 0.0, %v3903
        %v3905 = vpop.f32.mrb[0].mxu0
        %v3906 = vpop.f32.mrb[0].mxu0
        %v3907 = vadd.f32 0.0, %v3906
        %v3908 = vpop.f32.mrb[0].mxu0
        %3909 = vmatprep.mubr.bf16.mxu0 %v3393
        %3910 = vmatmul.mubr.bf16.gmra.mrb[0].mxu0 %v3171
        %v3911 = vpop.f32.mrb[0].mxu0
        %v3912 = vadd.f32 0.0, %v3911
        %v3913 = vpop.f32.mrb[0].mxu0
        %v3914 = vpop.f32.mrb[0].mxu0
        %v3915 = vadd.f32 0.0, %v3914
        %v3916 = vpop.f32.mrb[0].mxu0
        %3917 = vmatprep.mubr.bf16.mxu0 %v3405
        %3918 = vmatmul.mubr.bf16.gmra.mrb[0].mxu0 %v3172
        %v3919 = vpop.f32.mrb[0].mxu0
        %v3920 = vadd.f32 0.0, %v3919
        %v3921 = vpop.f32.mrb[0].mxu0
        %v3922 = vpop.f32.mrb[0].mxu0
        %v3923 = vadd.f32 0.0, %v3922
        %v3924 = vpop.f32.mrb[0].mxu0
        %3925 = vmatprep.mubr.bf16.mxu0 %v3417
        %3926 = vmatmul.mubr.bf16.gmra.mrb[0].mxu0 %v3173
        %v3927 = vpop.f32.mrb[0].mxu0
        %v3928 = vadd.f32 0.0, %v3927
        %v3929 = vpop.f32.mrb[0].mxu0
        %v3930 = vpop.f32.mrb[0].mxu0
        %v3931 = vadd.f32 0.0, %v3930
        %v3932 = vpop.f32.mrb[0].mxu0
        %3933 = vmatprep.mubr.bf16.mxu0 %v3429
        %3934 = vmatmul.mubr.bf16.gmra.mrb[0].mxu0 %v3174
        %v3935 = vpop.f32.mrb[0].mxu0
        %v3936 = vadd.f32 0.0, %v3935
        %v3937 = vpop.f32.mrb[0].mxu0
        %v3938 = vpop.f32.mrb[0].mxu0
        %v3939 = vadd.f32 0.0, %v3938
        %v3940 = vpop.f32.mrb[0].mxu0
        %3941 = vmatprep.mubr.bf16.mxu0 %v3441
        %3942 = vmatmul.mubr.bf16.gmra.mrb[0].mxu0 %v3175
        %v3943 = vpop.f32.mrb[0].mxu0
        %v3944 = vadd.f32 0.0, %v3943
        %v3945 = vpop.f32.mrb[0].mxu0
        %v3946 = vpop.f32.mrb[0].mxu0
        %v3947 = vadd.f32 0.0, %v3946
        %v3948 = vpop.f32.mrb[0].mxu0
        %3949 = vmatprep.mubr.bf16.mxu0 %v3453
        %3950 = vmatmul.mubr.bf16.gmra.mrb[0].mxu0 %v3176
        %v3951 = vpop.f32.mrb[0].mxu0
        %v3952 = vadd.f32 0.0, %v3951
        %v3953 = vpop.f32.mrb[0].mxu0
        %v3954 = vpop.f32.mrb[0].mxu0
        %v3955 = vadd.f32 0.0, %v3954
        %v3956 = vpop.f32.mrb[0].mxu0
        %3957 = vdwg.mxu0
        %3958 = vmatprep.subr.bf16.mxu0 0
        %3959 = vmatpush1.bf16.msra.mxu0 %v3765
        %3960 = vmatprep.subr.bf16.mxu0 0
        %3961 = vmatpush1.bf16.msra.mxu0 %v3766
        %3962 = vmatprep.subr.bf16.mxu0 0
        %3963 = vmatpush1.bf16.msra.mxu0 %v3767
        %3964 = vmatprep.subr.bf16.mxu0 0
        %3965 = vmatpush1.bf16.msra.mxu0 %v3768
        %3966 = vmatprep.subr.bf16.mxu0 0
        %3967 = vmatpush1.bf16.msra.mxu0 %v3769
        %3968 = vmatprep.subr.bf16.mxu0 0
        %3969 = vmatpush1.bf16.msra.mxu0 %v3770
        %3970 = vmatprep.subr.bf16.mxu0 0
        %3971 = vmatpush1.bf16.msra.mxu0 %v3771
        %3972 = vmatprep.subr.bf16.mxu0 0
        %3973 = vmatpush1.bf16.msra.mxu0 %v3772
        %3974 = vmatprep.subr.bf16.mxu0 0
        %3975 = vmatpush1.bf16.msra.mxu0 0
        %3976 = vmatprep.subr.bf16.mxu0 0
        %3977 = vmatpush1.bf16.msra.mxu0 0
        %3978 = vmatprep.subr.bf16.mxu0 0
        %3979 = vmatpush1.bf16.msra.mxu0 0
        %3980 = vmatprep.subr.bf16.mxu0 0
        %3981 = vmatpush1.bf16.msra.mxu0 0
        %3982 = vmatprep.subr.bf16.mxu0 0
        %3983 = vmatpush1.bf16.msra.mxu0 0
        %3984 = vmatprep.subr.bf16.mxu0 0
        %3985 = vmatpush1.bf16.msra.mxu0 0
        %3986 = vmatprep.subr.bf16.mxu0 0
        %3987 = vmatpush1.bf16.msra.mxu0 0
        %3988 = vmatprep.subr.bf16.mxu0 0
        %3989 = vmatpush1.bf16.msra.mxu0 0
        %3990 = vmatprep.mubr.bf16.mxu0 0
        %3991 = vmatmul.mubr.bf16.gmra.mrb[0].mxu0 %v3489
        %v3992 = vpop.f32.mrb[0].mxu0
        %v3993 = vadd.f32 %v3832, %v3992
        %v3994 = vpop.f32.mrb[0].mxu0
        %v3995 = vpop.f32.mrb[0].mxu0
        %v3996 = vadd.f32 %v3835, %v3995
        %v3997 = vpop.f32.mrb[0].mxu0
        %3998 = vmatprep.mubr.bf16.mxu0 0
        %3999 = vmatmul.mubr.bf16.gmra.mrb[0].mxu0 %v3492
        %v4000 = vpop.f32.mrb[0].mxu0
        %v4001 = vadd.f32 %v3840, %v4000
        %v4002 = vpop.f32.mrb[0].mxu0
        %v4003 = vpop.f32.mrb[0].mxu0
        %v4004 = vadd.f32 %v3843, %v4003
        %v4005 = vpop.f32.mrb[0].mxu0
        %4006 = vmatprep.mubr.bf16.mxu0 0
        %4007 = vmatmul.mubr.bf16.gmra.mrb[0].mxu0 %v3495
        %v4008 = vpop.f32.mrb[0].mxu0
        %v4009 = vadd.f32 %v3848, %v4008
        %v4010 = vpop.f32.mrb[0].mxu0
        %v4011 = vpop.f32.mrb[0].mxu0
        %v4012 = vadd.f32 %v3851, %v4011
        %v4013 = vpop.f32.mrb[0].mxu0
        %4014 = vmatprep.mubr.bf16.mxu0 0
        %4015 = vmatmul.mubr.bf16.gmra.mrb[0].mxu0 %v3498
        %v4016 = vpop.f32.mrb[0].mxu0
        %v4017 = vadd.f32 %v3856, %v4016
        %v4018 = vpop.f32.mrb[0].mxu0
        %v4019 = vpop.f32.mrb[0].mxu0
        %v4020 = vadd.f32 %v3859, %v4019
        %v4021 = vpop.f32.mrb[0].mxu0
        %4022 = vmatprep.mubr.bf16.mxu0 0
        %4023 = vmatmul.mubr.bf16.gmra.mrb[0].mxu0 %v3501
        %v4024 = vpop.f32.mrb[0].mxu0
        %v4025 = vadd.f32 %v3864, %v4024
        %v4026 = vpop.f32.mrb[0].mxu0
        %v4027 = vpop.f32.mrb[0].mxu0
        %v4028 = vadd.f32 %v3867, %v4027
        %v4029 = vpop.f32.mrb[0].mxu0
        %4030 = vmatprep.mubr.bf16.mxu0 0
        %4031 = vmatmul.mubr.bf16.gmra.mrb[0].mxu0 %v3504
        %v4032 = vpop.f32.mrb[0].mxu0
        %v4033 = vadd.f32 %v3872, %v4032
        %v4034 = vpop.f32.mrb[0].mxu0
        %v4035 = vpop.f32.mrb[0].mxu0
        %v4036 = vadd.f32 %v3875, %v4035
        %v4037 = vpop.f32.mrb[0].mxu0
        %4038 = vmatprep.mubr.bf16.mxu0 0
        %4039 = vmatmul.mubr.bf16.gmra.mrb[0].mxu0 %v3507
        %v4040 = vpop.f32.mrb[0].mxu0
        %v4041 = vadd.f32 %v3880, %v4040
        %v4042 = vpop.f32.mrb[0].mxu0
        %v4043 = vpop.f32.mrb[0].mxu0
        %v4044 = vadd.f32 %v3883, %v4043
        %v4045 = vpop.f32.mrb[0].mxu0
        %4046 = vmatprep.mubr.bf16.mxu0 0
        %4047 = vmatmul.mubr.bf16.gmra.mrb[0].mxu0 %v3510
        %v4048 = vpop.f32.mrb[0].mxu0
        %v4049 = vadd.f32 %v3888, %v4048
        %v4050 = vpop.f32.mrb[0].mxu0
        %v4051 = vpop.f32.mrb[0].mxu0
        %v4052 = vadd.f32 %v3891, %v4051
        %v4053 = vpop.f32.mrb[0].mxu0
        %4054 = vmatprep.mubr.bf16.mxu0 0
        %4055 = vmatmul.mubr.bf16.gmra.mrb[0].mxu0 %v3513
        %v4056 = vpop.f32.mrb[0].mxu0
        %v4057 = vadd.f32 %v3896, %v4056
        %v4058 = vpop.f32.mrb[0].mxu0
        %v4059 = vpop.f32.mrb[0].mxu0
        %v4060 = vadd.f32 %v3899, %v4059
        %v4061 = vpop.f32.mrb[0].mxu0
        %4062 = vmatprep.mubr.bf16.mxu0 0
        %4063 = vmatmul.mubr.bf16.gmra.mrb[0].mxu0 %v3516
        %v4064 = vpop.f32.mrb[0].mxu0
        %v4065 = vadd.f32 %v3904, %v4064
        %v4066 = vpop.f32.mrb[0].mxu0
        %v4067 = vpop.f32.mrb[0].mxu0
        %v4068 = vadd.f32 %v3907, %v4067
        %v4069 = vpop.f32.mrb[0].mxu0
        %4070 = vmatprep.mubr.bf16.mxu0 0
        %4071 = vmatmul.mubr.bf16.gmra.mrb[0].mxu0 %v3519
        %v4072 = vpop.f32.mrb[0].mxu0
        %v4073 = vadd.f32 %v3912, %v4072
        %v4074 = vpop.f32.mrb[0].mxu0
        %v4075 = vpop.f32.mrb[0].mxu0
        %v4076 = vadd.f32 %v3915, %v4075
        %v4077 = vpop.f32.mrb[0].mxu0
        %4078 = vmatprep.mubr.bf16.mxu0 0
        %4079 = vmatmul.mubr.bf16.gmra.mrb[0].mxu0 %v3522
        %v4080 = vpop.f32.mrb[0].mxu0
        %v4081 = vadd.f32 %v3920, %v4080
        %v4082 = vpop.f32.mrb[0].mxu0
        %v4083 = vpop.f32.mrb[0].mxu0
        %v4084 = vadd.f32 %v3923, %v4083
        %v4085 = vpop.f32.mrb[0].mxu0
        %4086 = vmatprep.mubr.bf16.mxu0 0
        %4087 = vmatmul.mubr.bf16.gmra.mrb[0].mxu0 %v3525
        %v4088 = vpop.f32.mrb[0].mxu0
        %v4089 = vadd.f32 %v3928, %v4088
        %v4090 = vpop.f32.mrb[0].mxu0
        %v4091 = vpop.f32.mrb[0].mxu0
        %v4092 = vadd.f32 %v3931, %v4091
        %v4093 = vpop.f32.mrb[0].mxu0
        %4094 = vmatprep.mubr.bf16.mxu0 0
        %4095 = vmatmul.mubr.bf16.gmra.mrb[0].mxu0 %v3528
        %v4096 = vpop.f32.mrb[0].mxu0
        %v4097 = vadd.f32 %v3936, %v4096
        %v4098 = vpop.f32.mrb[0].mxu0
        %v4099 = vpop.f32.mrb[0].mxu0
        %v4100 = vadd.f32 %v3939, %v4099
        %v4101 = vpop.f32.mrb[0].mxu0
        %4102 = vmatprep.mubr.bf16.mxu0 0
        %4103 = vmatmul.mubr.bf16.gmra.mrb[0].mxu0 %v3531
        %v4104 = vpop.f32.mrb[0].mxu0
        %v4105 = vadd.f32 %v3944, %v4104
        %v4106 = vpop.f32.mrb[0].mxu0
        %v4107 = vpop.f32.mrb[0].mxu0
        %v4108 = vadd.f32 %v3947, %v4107
        %v4109 = vpop.f32.mrb[0].mxu0
        %4110 = vmatprep.mubr.bf16.mxu0 0
        %4111 = vmatmul.mubr.bf16.gmra.mrb[0].mxu0 %v3534
        %v4112 = vpop.f32.mrb[0].mxu0
        %v4113 = vadd.f32 %v3952, %v4112
        %v4114 = vpop.f32.mrb[0].mxu0
        %v4115 = vpop.f32.mrb[0].mxu0
        %v4116 = vadd.f32 %v3955, %v4115
        %v4117 = vpop.f32.mrb[0].mxu0
        %4118 = vdwg.mxu0
        %v4167 = vunpack.c.l.b16 %v3556
        %v4168 = vunpack.c.l.b16 %v3557
        %v4169 = vunpack.c.l.b16 %v3558
        %v4170 = vunpack.c.l.b16 %v3559
        %v4171 = vunpack.c.l.b16 %v3560
        %v4172 = vunpack.c.l.b16 %v3561
        %v4173 = vunpack.c.l.b16 %v3562
        %v4174 = vunpack.c.l.b16 %v3563
        %v4175 = vunpack.c.l.b16 %v3564
        %v4176 = vunpack.c.l.b16 %v3565
        %v4177 = vunpack.c.l.b16 %v3566
        %v4178 = vunpack.c.l.b16 %v3567
        %v4179 = vunpack.c.l.b16 %v3568
        %v4180 = vunpack.c.l.b16 %v3569
        %v4181 = vunpack.c.l.b16 %v3570
        %v4182 = vunpack.c.l.b16 %v3571
        %v4183 = vunpack.c.l.b16 %v3572
        %v4184 = vunpack.c.l.b16 %v3573
        %v4185 = vunpack.c.l.b16 %v3574
        %v4186 = vunpack.c.l.b16 %v3575
        %v4187 = vunpack.c.l.b16 %v3576
        %v4188 = vunpack.c.l.b16 %v3577
        %v4189 = vunpack.c.l.b16 %v3578
        %v4190 = vunpack.c.l.b16 %v3579
        %v4191 = vunpack.c.l.b16 %v3580
        %v4192 = vunpack.c.l.b16 %v3581
        %v4193 = vunpack.c.l.b16 %v3582
        %v4194 = vunpack.c.l.b16 %v3583
        %v4195 = vunpack.c.l.b16 %v3584
        %v4196 = vunpack.c.l.b16 %v3585
        %v4197 = vunpack.c.l.b16 %v3586
        %v4198 = vunpack.c.l.b16 %v3587
        %v4199 = vunpack.c.l.b16 %v3588
        %v4200 = vunpack.c.l.b16 %v3589
        %v4201 = vunpack.c.l.b16 %v3590
        %v4202 = vunpack.c.l.b16 %v3591
        %v4203 = vunpack.c.l.b16 %v3592
        %v4204 = vunpack.c.l.b16 %v3593
        %v4205 = vunpack.c.l.b16 %v3594
        %v4206 = vunpack.c.l.b16 %v3595
        %v4207 = vunpack.c.l.b16 %v3596
        %v4208 = vunpack.c.l.b16 %v3597
        %v4209 = vunpack.c.l.b16 %v3598
        %v4210 = vunpack.c.l.b16 %v3599
        %v4211 = vunpack.c.l.b16 %v3600
        %v4212 = vunpack.c.l.b16 %v3601
        %v4213 = vunpack.c.l.b16 %v3602
        %v4214 = vunpack.c.l.b16 %v3603
        %v4215 = vpack.c.b16 %v4168, %v4167
        %v4216 = vpack.c.b16 %v4170, %v4169
        %v4217 = vpack.c.b16 %v4172, %v4171
        %v4218 = vpack.c.b16 %v4174, %v4173
        %v4219 = vpack.c.b16 %v4176, %v4175
        %v4220 = vpack.c.b16 %v4178, %v4177
        %v4221 = vpack.c.b16 %v4180, %v4179
        %v4222 = vpack.c.b16 %v4182, %v4181
        %v4223 = vpack.c.b16 %v4184, %v4183
        %v4224 = vpack.c.b16 %v4186, %v4185
        %v4225 = vpack.c.b16 %v4188, %v4187
        %v4226 = vpack.c.b16 %v4190, %v4189
        %v4227 = vpack.c.b16 %v4192, %v4191
        %v4228 = vpack.c.b16 %v4194, %v4193
        %v4229 = vpack.c.b16 %v4196, %v4195
        %v4230 = vpack.c.b16 %v4198, %v4197
        %v4231 = vpack.c.b16 %v4200, %v4199
        %v4232 = vpack.c.b16 %v4202, %v4201
        %v4233 = vpack.c.b16 %v4204, %v4203
        %v4234 = vpack.c.b16 %v4206, %v4205
        %v4235 = vpack.c.b16 %v4208, %v4207
        %v4236 = vpack.c.b16 %v4210, %v4209
        %v4237 = vpack.c.b16 %v4212, %v4211
        %v4238 = vpack.c.b16 %v4214, %v4213
        %4263 = vmatprep.subr.bf16.mxu0 0
        %4264 = vmatpush1.bf16.msra.mxu0 %v4215
        %4265 = vmatprep.subr.bf16.mxu0 0
        %4266 = vmatpush1.bf16.msra.mxu0 %v4216
        %4267 = vmatprep.subr.bf16.mxu0 0
        %4268 = vmatpush1.bf16.msra.mxu0 %v4217
        %4269 = vmatprep.subr.bf16.mxu0 0
        %4270 = vmatpush1.bf16.msra.mxu0 %v4218
        %4271 = vmatprep.subr.bf16.mxu0 0
        %4272 = vmatpush1.bf16.msra.mxu0 %v4219
        %4273 = vmatprep.subr.bf16.mxu0 0
        %4274 = vmatpush1.bf16.msra.mxu0 %v4220
        %4275 = vmatprep.subr.bf16.mxu0 0
        %4276 = vmatpush1.bf16.msra.mxu0 %v4221
        %4277 = vmatprep.subr.bf16.mxu0 0
        %4278 = vmatpush1.bf16.msra.mxu0 %v4222
        %4279 = vmatprep.subr.bf16.mxu0 0
        %4280 = vmatpush1.bf16.msra.mxu0 %v4223
        %4281 = vmatprep.subr.bf16.mxu0 0
        %4282 = vmatpush1.bf16.msra.mxu0 %v4224
        %4283 = vmatprep.subr.bf16.mxu0 0
        %4284 = vmatpush1.bf16.msra.mxu0 %v4225
        %4285 = vmatprep.subr.bf16.mxu0 0
        %4286 = vmatpush1.bf16.msra.mxu0 %v4226
        %4287 = vmatprep.subr.bf16.mxu0 0
        %4288 = vmatpush1.bf16.msra.mxu0 %v4227
        %4289 = vmatprep.subr.bf16.mxu0 0
        %4290 = vmatpush1.bf16.msra.mxu0 %v4228
        %4291 = vmatprep.subr.bf16.mxu0 0
        %4292 = vmatpush1.bf16.msra.mxu0 %v4229
        %4293 = vmatprep.subr.bf16.mxu0 0
        %4294 = vmatpush1.bf16.msra.mxu0 %v4230
        %4295 = vmatprep.mubr.bf16.mxu0 %v3261
        %4296 = vmatmul.mubr.bf16.gmra.mrb[0].mxu0 %v3160
        %v4297 = vpop.f32.mrb[0].mxu0
        %v4298 = vadd.f32 %v3993, %v4297
        %v4299 = vpop.f32.mrb[0].mxu0
        %v4300 = vpop.f32.mrb[0].mxu0
        %v4301 = vadd.f32 %v3996, %v4300
        %v4302 = vpop.f32.mrb[0].mxu0
        %4303 = vmatprep.mubr.bf16.mxu0 %v3273
        %4304 = vmatmul.mubr.bf16.gmra.mrb[0].mxu0 %v3161
        %v4305 = vpop.f32.mrb[0].mxu0
        %v4306 = vadd.f32 %v4001, %v4305
        %v4307 = vpop.f32.mrb[0].mxu0
        %v4308 = vpop.f32.mrb[0].mxu0
        %v4309 = vadd.f32 %v4004, %v4308
        %v4310 = vpop.f32.mrb[0].mxu0
        %4311 = vmatprep.mubr.bf16.mxu0 %v3285
        %4312 = vmatmul.mubr.bf16.gmra.mrb[0].mxu0 %v3162
        %v4313 = vpop.f32.mrb[0].mxu0
        %v4314 = vadd.f32 %v4009, %v4313
        %v4315 = vpop.f32.mrb[0].mxu0
        %v4316 = vpop.f32.mrb[0].mxu0
        %v4317 = vadd.f32 %v4012, %v4316
        %v4318 = vpop.f32.mrb[0].mxu0
        %4319 = vmatprep.mubr.bf16.mxu0 %v3297
        %4320 = vmatmul.mubr.bf16.gmra.mrb[0].mxu0 %v3163
        %v4321 = vpop.f32.mrb[0].mxu0
        %v4322 = vadd.f32 %v4017, %v4321
        %v4323 = vpop.f32.mrb[0].mxu0
        %v4324 = vpop.f32.mrb[0].mxu0
        %v4325 = vadd.f32 %v4020, %v4324
        %v4326 = vpop.f32.mrb[0].mxu0
        %4327 = vmatprep.mubr.bf16.mxu0 %v3309
        %4328 = vmatmul.mubr.bf16.gmra.mrb[0].mxu0 %v3164
        %v4329 = vpop.f32.mrb[0].mxu0
        %v4330 = vadd.f32 %v4025, %v4329
        %v4331 = vpop.f32.mrb[0].mxu0
        %v4332 = vpop.f32.mrb[0].mxu0
        %v4333 = vadd.f32 %v4028, %v4332
        %v4334 = vpop.f32.mrb[0].mxu0
        %4335 = vmatprep.mubr.bf16.mxu0 %v3321
        %4336 = vmatmul.mubr.bf16.gmra.mrb[0].mxu0 %v3165
        %v4337 = vpop.f32.mrb[0].mxu0
        %v4338 = vadd.f32 %v4033, %v4337
        %v4339 = vpop.f32.mrb[0].mxu0
        %v4340 = vpop.f32.mrb[0].mxu0
        %v4341 = vadd.f32 %v4036, %v4340
        %v4342 = vpop.f32.mrb[0].mxu0
        %4343 = vmatprep.mubr.bf16.mxu0 %v3333
        %4344 = vmatmul.mubr.bf16.gmra.mrb[0].mxu0 %v3166
        %v4345 = vpop.f32.mrb[0].mxu0
        %v4346 = vadd.f32 %v4041, %v4345
        %v4347 = vpop.f32.mrb[0].mxu0
        %v4348 = vpop.f32.mrb[0].mxu0
        %v4349 = vadd.f32 %v4044, %v4348
        %v4350 = vpop.f32.mrb[0].mxu0
        %4351 = vmatprep.mubr.bf16.mxu0 %v3345
        %4352 = vmatmul.mubr.bf16.gmra.mrb[0].mxu0 %v3167
        %v4353 = vpop.f32.mrb[0].mxu0
        %v4354 = vadd.f32 %v4049, %v4353
        %v4355 = vpop.f32.mrb[0].mxu0
        %v4356 = vpop.f32.mrb[0].mxu0
        %v4357 = vadd.f32 %v4052, %v4356
        %v4358 = vpop.f32.mrb[0].mxu0
        %4359 = vmatprep.mubr.bf16.mxu0 %v3357
        %4360 = vmatmul.mubr.bf16.gmra.mrb[0].mxu0 %v3168
        %v4361 = vpop.f32.mrb[0].mxu0
        %v4362 = vadd.f32 %v4057, %v4361
        %v4363 = vpop.f32.mrb[0].mxu0
        %v4364 = vpop.f32.mrb[0].mxu0
        %v4365 = vadd.f32 %v4060, %v4364
        %v4366 = vpop.f32.mrb[0].mxu0
        %4367 = vmatprep.mubr.bf16.mxu0 %v3369
        %4368 = vmatmul.mubr.bf16.gmra.mrb[0].mxu0 %v3169
        %v4369 = vpop.f32.mrb[0].mxu0
        %v4370 = vadd.f32 %v4065, %v4369
        %v4371 = vpop.f32.mrb[0].mxu0
        %v4372 = vpop.f32.mrb[0].mxu0
        %v4373 = vadd.f32 %v4068, %v4372
        %v4374 = vpop.f32.mrb[0].mxu0
        %4375 = vmatprep.mubr.bf16.mxu0 %v3381
        %4376 = vmatmul.mubr.bf16.gmra.mrb[0].mxu0 %v3170
        %v4377 = vpop.f32.mrb[0].mxu0
        %v4378 = vadd.f32 %v4073, %v4377
        %v4379 = vpop.f32.mrb[0].mxu0
        %v4380 = vpop.f32.mrb[0].mxu0
        %v4381 = vadd.f32 %v4076, %v4380
        %v4382 = vpop.f32.mrb[0].mxu0
        %4383 = vmatprep.mubr.bf16.mxu0 %v3393
        %4384 = vmatmul.mubr.bf16.gmra.mrb[0].mxu0 %v3171
        %v4385 = vpop.f32.mrb[0].mxu0
        %v4386 = vadd.f32 %v4081, %v4385
        %v4387 = vpop.f32.mrb[0].mxu0
        %v4388 = vpop.f32.mrb[0].mxu0
        %v4389 = vadd.f32 %v4084, %v4388
        %v4390 = vpop.f32.mrb[0].mxu0
        %4391 = vmatprep.mubr.bf16.mxu0 %v3405
        %4392 = vmatmul.mubr.bf16.gmra.mrb[0].mxu0 %v3172
        %v4393 = vpop.f32.mrb[0].mxu0
        %v4394 = vadd.f32 %v4089, %v4393
        %v4395 = vpop.f32.mrb[0].mxu0
        %v4396 = vpop.f32.mrb[0].mxu0
        %v4397 = vadd.f32 %v4092, %v4396
        %v4398 = vpop.f32.mrb[0].mxu0
        %4399 = vmatprep.mubr.bf16.mxu0 %v3417
        %4400 = vmatmul.mubr.bf16.gmra.mrb[0].mxu0 %v3173
        %v4401 = vpop.f32.mrb[0].mxu0
        %v4402 = vadd.f32 %v4097, %v4401
        %v4403 = vpop.f32.mrb[0].mxu0
        %v4404 = vpop.f32.mrb[0].mxu0
        %v4405 = vadd.f32 %v4100, %v4404
        %v4406 = vpop.f32.mrb[0].mxu0
        %4407 = vmatprep.mubr.bf16.mxu0 %v3429
        %4408 = vmatmul.mubr.bf16.gmra.mrb[0].mxu0 %v3174
        %v4409 = vpop.f32.mrb[0].mxu0
        %v4410 = vadd.f32 %v4105, %v4409
        %v4411 = vpop.f32.mrb[0].mxu0
        %v4412 = vpop.f32.mrb[0].mxu0
        %v4413 = vadd.f32 %v4108, %v4412
        %v4414 = vpop.f32.mrb[0].mxu0
        %4415 = vmatprep.mubr.bf16.mxu0 %v3441
        %4416 = vmatmul.mubr.bf16.gmra.mrb[0].mxu0 %v3175
        %v4417 = vpop.f32.mrb[0].mxu0
        %v4418 = vadd.f32 %v4113, %v4417
        %v4419 = vpop.f32.mrb[0].mxu0
        %v4420 = vpop.f32.mrb[0].mxu0
        %v4421 = vadd.f32 %v4116, %v4420
        %v4422 = vpop.f32.mrb[0].mxu0
        %4423 = vdwg.mxu0
        %4424 = vmatprep.subr.bf16.mxu0 0
        %4425 = vmatpush1.bf16.msra.mxu0 %v4231
        %4426 = vmatprep.subr.bf16.mxu0 0
        %4427 = vmatpush1.bf16.msra.mxu0 %v4232
        %4428 = vmatprep.subr.bf16.mxu0 0
        %4429 = vmatpush1.bf16.msra.mxu0 %v4233
        %4430 = vmatprep.subr.bf16.mxu0 0
        %4431 = vmatpush1.bf16.msra.mxu0 %v4234
        %4432 = vmatprep.subr.bf16.mxu0 0
        %4433 = vmatpush1.bf16.msra.mxu0 %v4235
        %4434 = vmatprep.subr.bf16.mxu0 0
        %4435 = vmatpush1.bf16.msra.mxu0 %v4236
        %4436 = vmatprep.subr.bf16.mxu0 0
        %4437 = vmatpush1.bf16.msra.mxu0 %v4237
        %4438 = vmatprep.subr.bf16.mxu0 0
        %4439 = vmatpush1.bf16.msra.mxu0 %v4238
        %4440 = vmatprep.subr.bf16.mxu0 0
        %4441 = vmatpush1.bf16.msra.mxu0 0
        %4442 = vmatprep.subr.bf16.mxu0 0
        %4443 = vmatpush1.bf16.msra.mxu0 0
        %4444 = vmatprep.subr.bf16.mxu0 0
        %4445 = vmatpush1.bf16.msra.mxu0 0
        %4446 = vmatprep.subr.bf16.mxu0 0
        %4447 = vmatpush1.bf16.msra.mxu0 0
        %4448 = vmatprep.subr.bf16.mxu0 0
        %4449 = vmatpush1.bf16.msra.mxu0 0
        %4450 = vmatprep.subr.bf16.mxu0 0
        %4451 = vmatpush1.bf16.msra.mxu0 0
        %4452 = vmatprep.subr.bf16.mxu0 0
        %4453 = vmatpush1.bf16.msra.mxu0 0
        %4454 = vmatprep.subr.bf16.mxu0 0
        %4455 = vmatpush1.bf16.msra.mxu0 0
        %4456 = vmatprep.mubr.bf16.mxu0 0
        %4457 = vmatmul.mubr.bf16.gmra.mrb[0].mxu0 %v3486
        %v4458 = vpop.f32.mrb[0].mxu0
        %v4459 = vadd.f32 %v4298, %v4458
        %v4460 = vpop.f32.mrb[0].mxu0
        %v4461 = vpop.f32.mrb[0].mxu0
        %v4462 = vadd.f32 %v4301, %v4461
        %v4463 = vpop.f32.mrb[0].mxu0
        %4464 = vmatprep.mubr.bf16.mxu0 0
        %4465 = vmatmul.mubr.bf16.gmra.mrb[0].mxu0 %v3489
        %v4466 = vpop.f32.mrb[0].mxu0
        %v4467 = vadd.f32 %v4306, %v4466
        %v4468 = vpop.f32.mrb[0].mxu0
        %v4469 = vpop.f32.mrb[0].mxu0
        %v4470 = vadd.f32 %v4309, %v4469
        %v4471 = vpop.f32.mrb[0].mxu0
        %4472 = vmatprep.mubr.bf16.mxu0 0
        %4473 = vmatmul.mubr.bf16.gmra.mrb[0].mxu0 %v3492
        %v4474 = vpop.f32.mrb[0].mxu0
        %v4475 = vadd.f32 %v4314, %v4474
        %v4476 = vpop.f32.mrb[0].mxu0
        %v4477 = vpop.f32.mrb[0].mxu0
        %v4478 = vadd.f32 %v4317, %v4477
        %v4479 = vpop.f32.mrb[0].mxu0
        %4480 = vmatprep.mubr.bf16.mxu0 0
        %4481 = vmatmul.mubr.bf16.gmra.mrb[0].mxu0 %v3495
        %v4482 = vpop.f32.mrb[0].mxu0
        %v4483 = vadd.f32 %v4322, %v4482
        %v4484 = vpop.f32.mrb[0].mxu0
        %v4485 = vpop.f32.mrb[0].mxu0
        %v4486 = vadd.f32 %v4325, %v4485
        %v4487 = vpop.f32.mrb[0].mxu0
        %4488 = vmatprep.mubr.bf16.mxu0 0
        %4489 = vmatmul.mubr.bf16.gmra.mrb[0].mxu0 %v3498
        %v4490 = vpop.f32.mrb[0].mxu0
        %v4491 = vadd.f32 %v4330, %v4490
        %v4492 = vpop.f32.mrb[0].mxu0
        %v4493 = vpop.f32.mrb[0].mxu0
        %v4494 = vadd.f32 %v4333, %v4493
        %v4495 = vpop.f32.mrb[0].mxu0
        %4496 = vmatprep.mubr.bf16.mxu0 0
        %4497 = vmatmul.mubr.bf16.gmra.mrb[0].mxu0 %v3501
        %v4498 = vpop.f32.mrb[0].mxu0
        %v4499 = vadd.f32 %v4338, %v4498
        %v4500 = vpop.f32.mrb[0].mxu0
        %v4501 = vpop.f32.mrb[0].mxu0
        %v4502 = vadd.f32 %v4341, %v4501
        %v4503 = vpop.f32.mrb[0].mxu0
        %4504 = vmatprep.mubr.bf16.mxu0 0
        %4505 = vmatmul.mubr.bf16.gmra.mrb[0].mxu0 %v3504
        %v4506 = vpop.f32.mrb[0].mxu0
        %v4507 = vadd.f32 %v4346, %v4506
        %v4508 = vpop.f32.mrb[0].mxu0
        %v4509 = vpop.f32.mrb[0].mxu0
        %v4510 = vadd.f32 %v4349, %v4509
        %v4511 = vpop.f32.mrb[0].mxu0
        %4512 = vmatprep.mubr.bf16.mxu0 0
        %4513 = vmatmul.mubr.bf16.gmra.mrb[0].mxu0 %v3507
        %v4514 = vpop.f32.mrb[0].mxu0
        %v4515 = vadd.f32 %v4354, %v4514
        %v4516 = vpop.f32.mrb[0].mxu0
        %v4517 = vpop.f32.mrb[0].mxu0
        %v4518 = vadd.f32 %v4357, %v4517
        %v4519 = vpop.f32.mrb[0].mxu0
        %4520 = vmatprep.mubr.bf16.mxu0 0
        %4521 = vmatmul.mubr.bf16.gmra.mrb[0].mxu0 %v3510
        %v4522 = vpop.f32.mrb[0].mxu0
        %v4523 = vadd.f32 %v4362, %v4522
        %v4524 = vpop.f32.mrb[0].mxu0
        %v4525 = vpop.f32.mrb[0].mxu0
        %v4526 = vadd.f32 %v4365, %v4525
        %v4527 = vpop.f32.mrb[0].mxu0
        %4528 = vmatprep.mubr.bf16.mxu0 0
        %4529 = vmatmul.mubr.bf16.gmra.mrb[0].mxu0 %v3513
        %v4530 = vpop.f32.mrb[0].mxu0
        %v4531 = vadd.f32 %v4370, %v4530
        %v4532 = vpop.f32.mrb[0].mxu0
        %v4533 = vpop.f32.mrb[0].mxu0
        %v4534 = vadd.f32 %v4373, %v4533
        %v4535 = vpop.f32.mrb[0].mxu0
        %4536 = vmatprep.mubr.bf16.mxu0 0
        %4537 = vmatmul.mubr.bf16.gmra.mrb[0].mxu0 %v3516
        %v4538 = vpop.f32.mrb[0].mxu0
        %v4539 = vadd.f32 %v4378, %v4538
        %v4540 = vpop.f32.mrb[0].mxu0
        %v4541 = vpop.f32.mrb[0].mxu0
        %v4542 = vadd.f32 %v4381, %v4541
        %v4543 = vpop.f32.mrb[0].mxu0
        %4544 = vmatprep.mubr.bf16.mxu0 0
        %4545 = vmatmul.mubr.bf16.gmra.mrb[0].mxu0 %v3519
        %v4546 = vpop.f32.mrb[0].mxu0
        %v4547 = vadd.f32 %v4386, %v4546
        %v4548 = vpop.f32.mrb[0].mxu0
        %v4549 = vpop.f32.mrb[0].mxu0
        %v4550 = vadd.f32 %v4389, %v4549
        %v4551 = vpop.f32.mrb[0].mxu0
        %4552 = vmatprep.mubr.bf16.mxu0 0
        %4553 = vmatmul.mubr.bf16.gmra.mrb[0].mxu0 %v3522
        %v4554 = vpop.f32.mrb[0].mxu0
        %v4555 = vadd.f32 %v4394, %v4554
        %v4556 = vpop.f32.mrb[0].mxu0
        %v4557 = vpop.f32.mrb[0].mxu0
        %v4558 = vadd.f32 %v4397, %v4557
        %v4559 = vpop.f32.mrb[0].mxu0
        %4560 = vmatprep.mubr.bf16.mxu0 0
        %4561 = vmatmul.mubr.bf16.gmra.mrb[0].mxu0 %v3525
        %v4562 = vpop.f32.mrb[0].mxu0
        %v4563 = vadd.f32 %v4402, %v4562
        %v4564 = vpop.f32.mrb[0].mxu0
        %v4565 = vpop.f32.mrb[0].mxu0
        %v4566 = vadd.f32 %v4405, %v4565
        %v4567 = vpop.f32.mrb[0].mxu0
        %4568 = vmatprep.mubr.bf16.mxu0 0
        %4569 = vmatmul.mubr.bf16.gmra.mrb[0].mxu0 %v3528
        %v4570 = vpop.f32.mrb[0].mxu0
        %v4571 = vadd.f32 %v4410, %v4570
        %v4572 = vpop.f32.mrb[0].mxu0
        %v4573 = vpop.f32.mrb[0].mxu0
        %v4574 = vadd.f32 %v4413, %v4573
        %v4575 = vpop.f32.mrb[0].mxu0
        %4576 = vmatprep.mubr.bf16.mxu0 0
        %4577 = vmatmul.mubr.bf16.gmra.mrb[0].mxu0 %v3531
        %v4578 = vpop.f32.mrb[0].mxu0
        %v4579 = vadd.f32 %v4418, %v4578
        %v4580 = vpop.f32.mrb[0].mxu0
        %v4581 = vpop.f32.mrb[0].mxu0
        %v4582 = vadd.f32 %v4421, %v4581
        %v4583 = vpop.f32.mrb[0].mxu0
        %4584 = vdwg.mxu0
        %s4585 = scalar_lea.vmem [#allocation3], 384
        %v4586 = vld [vmem:[%s4585] sm:$0xf]
        %v4587 = vld [vmem:[%s4585 + $0x4] sm:$0xf]
        %v4588 = vld [vmem:[%s4585 + $0x8] sm:$0xf]
        %v4589 = vld [vmem:[%s4585 + $0xc] sm:$0xf]
        %v4590 = vld [vmem:[%s4585 + $0x10] sm:$0xf]
        %v4591 = vld [vmem:[%s4585 + $0x14] sm:$0xf]
        %v4592 = vld [vmem:[%s4585 + $0x18] sm:$0xf]
        %v4593 = vld [vmem:[%s4585 + $0x1c] sm:$0xf]
        %v4594 = vld [vmem:[%s4585 + $0x20] sm:$0xf]
        %v4595 = vld [vmem:[%s4585 + $0x24] sm:$0xf]
        %v4596 = vld [vmem:[%s4585 + $0x28] sm:$0xf]
        %v4597 = vld [vmem:[%s4585 + $0x2c] sm:$0xf]
        %v4598 = vld [vmem:[%s4585 + $0x30] sm:$0xf]
        %v4599 = vld [vmem:[%s4585 + $0x34] sm:$0xf]
        %v4600 = vld [vmem:[%s4585 + $0x38] sm:$0xf]
        %v4601 = vld [vmem:[%s4585 + $0x3c] sm:$0xf]
        %v4602 = vld [vmem:[%s4585 + $0x40] sm:$0xf]
        %v4603 = vld [vmem:[%s4585 + $0x44] sm:$0xf]
        %v4604 = vld [vmem:[%s4585 + $0x48] sm:$0xf]
        %v4605 = vld [vmem:[%s4585 + $0x4c] sm:$0xf]
        %v4606 = vld [vmem:[%s4585 + $0x50] sm:$0xf]
        %v4607 = vld [vmem:[%s4585 + $0x54] sm:$0xf]
        %v4608 = vld [vmem:[%s4585 + $0x58] sm:$0xf]
        %v4609 = vld [vmem:[%s4585 + $0x5c] sm:$0xf]
        %v4610 = vld [vmem:[%s4585 + $0x60] sm:$0xf]
        %v4611 = vld [vmem:[%s4585 + $0x64] sm:$0xf]
        %v4612 = vld [vmem:[%s4585 + $0x68] sm:$0xf]
        %v4613 = vld [vmem:[%s4585 + $0x6c] sm:$0xf]
        %v4614 = vld [vmem:[%s4585 + $0x70] sm:$0xf]
        %v4615 = vld [vmem:[%s4585 + $0x74] sm:$0xf]
        %v4616 = vld [vmem:[%s4585 + $0x78] sm:$0xf]
        %v4617 = vld [vmem:[%s4585 + $0x7c] sm:$0xf]
        %v4618 = vld [vmem:[%s4585 + $0x80] sm:$0xf]
        %v4619 = vld [vmem:[%s4585 + $0x84] sm:$0xf]
        %v4620 = vld [vmem:[%s4585 + $0x88] sm:$0xf]
        %v4621 = vld [vmem:[%s4585 + $0x8c] sm:$0xf]
        %v4622 = vld [vmem:[%s4585 + $0x90] sm:$0xf]
        %v4623 = vld [vmem:[%s4585 + $0x94] sm:$0xf]
        %v4624 = vld [vmem:[%s4585 + $0x98] sm:$0xf]
        %v4625 = vld [vmem:[%s4585 + $0x9c] sm:$0xf]
        %v4626 = vld [vmem:[%s4585 + $0xa0] sm:$0xf]
        %v4627 = vld [vmem:[%s4585 + $0xa4] sm:$0xf]
        %v4628 = vld [vmem:[%s4585 + $0xa8] sm:$0xf]
        %v4629 = vld [vmem:[%s4585 + $0xac] sm:$0xf]
        %v4630 = vld [vmem:[%s4585 + $0xb0] sm:$0xf]
        %v4631 = vld [vmem:[%s4585 + $0xb4] sm:$0xf]
        %v4632 = vld [vmem:[%s4585 + $0xb8] sm:$0xf]
        %v4633 = vld [vmem:[%s4585 + $0xbc] sm:$0xf]
        %v4682 = vunpack.c.l.b16 %v4586
        %v4683 = vunpack.c.l.b16 %v4587
        %v4684 = vunpack.c.l.b16 %v4588
        %v4685 = vunpack.c.l.b16 %v4589
        %v4686 = vunpack.c.l.b16 %v4590
        %v4687 = vunpack.c.l.b16 %v4591
        %v4688 = vunpack.c.l.b16 %v4592
        %v4689 = vunpack.c.l.b16 %v4593
        %v4690 = vunpack.c.l.b16 %v4594
        %v4691 = vunpack.c.l.b16 %v4595
        %v4692 = vunpack.c.l.b16 %v4596
        %v4693 = vunpack.c.l.b16 %v4597
        %v4694 = vunpack.c.l.b16 %v4598
        %v4695 = vunpack.c.l.b16 %v4599
        %v4696 = vunpack.c.l.b16 %v4600
        %v4697 = vunpack.c.l.b16 %v4601
        %v4698 = vunpack.c.l.b16 %v4602
        %v4699 = vunpack.c.l.b16 %v4603
        %v4700 = vunpack.c.l.b16 %v4604
        %v4701 = vunpack.c.l.b16 %v4605
        %v4702 = vunpack.c.l.b16 %v4606
        %v4703 = vunpack.c.l.b16 %v4607
        %v4704 = vunpack.c.l.b16 %v4608
        %v4705 = vunpack.c.l.b16 %v4609
        %v4706 = vunpack.c.l.b16 %v4610
        %v4707 = vunpack.c.l.b16 %v4611
        %v4708 = vunpack.c.l.b16 %v4612
        %v4709 = vunpack.c.l.b16 %v4613
        %v4710 = vunpack.c.l.b16 %v4614
        %v4711 = vunpack.c.l.b16 %v4615
        %v4712 = vunpack.c.l.b16 %v4616
        %v4713 = vunpack.c.l.b16 %v4617
        %v4714 = vunpack.c.l.b16 %v4618
        %v4715 = vunpack.c.l.b16 %v4619
        %v4716 = vunpack.c.l.b16 %v4620
        %v4717 = vunpack.c.l.b16 %v4621
        %v4718 = vunpack.c.l.b16 %v4622
        %v4719 = vunpack.c.l.b16 %v4623
        %v4720 = vunpack.c.l.b16 %v4624
        %v4721 = vunpack.c.l.b16 %v4625
        %v4722 = vunpack.c.l.b16 %v4626
        %v4723 = vunpack.c.l.b16 %v4627
        %v4724 = vunpack.c.l.b16 %v4628
        %v4725 = vunpack.c.l.b16 %v4629
        %v4726 = vunpack.c.l.b16 %v4630
        %v4727 = vunpack.c.l.b16 %v4631
        %v4728 = vunpack.c.l.b16 %v4632
        %v4729 = vunpack.c.l.b16 %v4633
        %v4730 = vpack.c.b16 %v4683, %v4682
        %v4731 = vpack.c.b16 %v4685, %v4684
        %v4732 = vpack.c.b16 %v4687, %v4686
        %v4733 = vpack.c.b16 %v4689, %v4688
        %v4734 = vpack.c.b16 %v4691, %v4690
        %v4735 = vpack.c.b16 %v4693, %v4692
        %v4736 = vpack.c.b16 %v4695, %v4694
        %v4737 = vpack.c.b16 %v4697, %v4696
        %v4738 = vpack.c.b16 %v4699, %v4698
        %v4739 = vpack.c.b16 %v4701, %v4700
        %v4740 = vpack.c.b16 %v4703, %v4702
        %v4741 = vpack.c.b16 %v4705, %v4704
        %v4742 = vpack.c.b16 %v4707, %v4706
        %v4743 = vpack.c.b16 %v4709, %v4708
        %v4744 = vpack.c.b16 %v4711, %v4710
        %v4745 = vpack.c.b16 %v4713, %v4712
        %v4746 = vpack.c.b16 %v4715, %v4714
        %v4747 = vpack.c.b16 %v4717, %v4716
        %v4748 = vpack.c.b16 %v4719, %v4718
        %v4749 = vpack.c.b16 %v4721, %v4720
        %v4750 = vpack.c.b16 %v4723, %v4722
        %v4751 = vpack.c.b16 %v4725, %v4724
        %v4752 = vpack.c.b16 %v4727, %v4726
        %v4753 = vpack.c.b16 %v4729, %v4728
        %4778 = vmatprep.subr.bf16.mxu0 0
        %4779 = vmatpush1.bf16.msra.mxu0 %v4730
        %4780 = vmatprep.subr.bf16.mxu0 0
        %4781 = vmatpush1.bf16.msra.mxu0 %v4731
        %4782 = vmatprep.subr.bf16.mxu0 0
        %4783 = vmatpush1.bf16.msra.mxu0 %v4732
        %4784 = vmatprep.subr.bf16.mxu0 0
        %4785 = vmatpush1.bf16.msra.mxu0 %v4733
        %4786 = vmatprep.subr.bf16.mxu0 0
        %4787 = vmatpush1.bf16.msra.mxu0 %v4734
        %4788 = vmatprep.subr.bf16.mxu0 0
        %4789 = vmatpush1.bf16.msra.mxu0 %v4735
        %4790 = vmatprep.subr.bf16.mxu0 0
        %4791 = vmatpush1.bf16.msra.mxu0 %v4736
        %4792 = vmatprep.subr.bf16.mxu0 0
        %4793 = vmatpush1.bf16.msra.mxu0 %v4737
        %4794 = vmatprep.subr.bf16.mxu0 0
        %4795 = vmatpush1.bf16.msra.mxu0 %v4738
        %4796 = vmatprep.subr.bf16.mxu0 0
        %4797 = vmatpush1.bf16.msra.mxu0 %v4739
        %4798 = vmatprep.subr.bf16.mxu0 0
        %4799 = vmatpush1.bf16.msra.mxu0 %v4740
        %4800 = vmatprep.subr.bf16.mxu0 0
        %4801 = vmatpush1.bf16.msra.mxu0 %v4741
        %4802 = vmatprep.subr.bf16.mxu0 0
        %4803 = vmatpush1.bf16.msra.mxu0 %v4742
        %4804 = vmatprep.subr.bf16.mxu0 0
        %4805 = vmatpush1.bf16.msra.mxu0 %v4743
        %4806 = vmatprep.subr.bf16.mxu0 0
        %4807 = vmatpush1.bf16.msra.mxu0 %v4744
        %4808 = vmatprep.subr.bf16.mxu0 0
        %4809 = vmatpush1.bf16.msra.mxu0 %v4745
        %4810 = vmatprep.mubr.bf16.mxu0 %v3285
        %4811 = vmatmul.mubr.bf16.gmra.mrb[0].mxu0 %v3162
        %v4812 = vpop.f32.mrb[0].mxu0
        %v4813 = vadd.f32 0.0, %v4812
        %v4814 = vpop.f32.mrb[0].mxu0
        %v4815 = vpop.f32.mrb[0].mxu0
        %v4816 = vadd.f32 0.0, %v4815
        %v4817 = vpop.f32.mrb[0].mxu0
        %4818 = vmatprep.mubr.bf16.mxu0 %v3297
        %4819 = vmatmul.mubr.bf16.gmra.mrb[0].mxu0 %v3163
        %v4820 = vpop.f32.mrb[0].mxu0
        %v4821 = vadd.f32 0.0, %v4820
        %v4822 = vpop.f32.mrb[0].mxu0
        %v4823 = vpop.f32.mrb[0].mxu0
        %v4824 = vadd.f32 0.0, %v4823
        %v4825 = vpop.f32.mrb[0].mxu0
        %4826 = vmatprep.mubr.bf16.mxu0 %v3309
        %4827 = vmatmul.mubr.bf16.gmra.mrb[0].mxu0 %v3164
        %v4828 = vpop.f32.mrb[0].mxu0
        %v4829 = vadd.f32 0.0, %v4828
        %v4830 = vpop.f32.mrb[0].mxu0
        %v4831 = vpop.f32.mrb[0].mxu0
        %v4832 = vadd.f32 0.0, %v4831
        %v4833 = vpop.f32.mrb[0].mxu0
        %4834 = vmatprep.mubr.bf16.mxu0 %v3321
        %4835 = vmatmul.mubr.bf16.gmra.mrb[0].mxu0 %v3165
        %v4836 = vpop.f32.mrb[0].mxu0
        %v4837 = vadd.f32 0.0, %v4836
        %v4838 = vpop.f32.mrb[0].mxu0
        %v4839 = vpop.f32.mrb[0].mxu0
        %v4840 = vadd.f32 0.0, %v4839
        %v4841 = vpop.f32.mrb[0].mxu0
        %4842 = vmatprep.mubr.bf16.mxu0 %v3333
        %4843 = vmatmul.mubr.bf16.gmra.mrb[0].mxu0 %v3166
        %v4844 = vpop.f32.mrb[0].mxu0
        %v4845 = vadd.f32 0.0, %v4844
        %v4846 = vpop.f32.mrb[0].mxu0
        %v4847 = vpop.f32.mrb[0].mxu0
        %v4848 = vadd.f32 0.0, %v4847
        %v4849 = vpop.f32.mrb[0].mxu0
        %4850 = vmatprep.mubr.bf16.mxu0 %v3345
        %4851 = vmatmul.mubr.bf16.gmra.mrb[0].mxu0 %v3167
        %v4852 = vpop.f32.mrb[0].mxu0
        %v4853 = vadd.f32 0.0, %v4852
        %v4854 = vpop.f32.mrb[0].mxu0
        %v4855 = vpop.f32.mrb[0].mxu0
        %v4856 = vadd.f32 0.0, %v4855
        %v4857 = vpop.f32.mrb[0].mxu0
        %4858 = vmatprep.mubr.bf16.mxu0 %v3357
        %4859 = vmatmul.mubr.bf16.gmra.mrb[0].mxu0 %v3168
        %v4860 = vpop.f32.mrb[0].mxu0
        %v4861 = vadd.f32 0.0, %v4860
        %v4862 = vpop.f32.mrb[0].mxu0
        %v4863 = vpop.f32.mrb[0].mxu0
        %v4864 = vadd.f32 0.0, %v4863
        %v4865 = vpop.f32.mrb[0].mxu0
        %4866 = vmatprep.mubr.bf16.mxu0 %v3369
        %4867 = vmatmul.mubr.bf16.gmra.mrb[0].mxu0 %v3169
        %v4868 = vpop.f32.mrb[0].mxu0
        %v4869 = vadd.f32 0.0, %v4868
        %v4870 = vpop.f32.mrb[0].mxu0
        %v4871 = vpop.f32.mrb[0].mxu0
        %v4872 = vadd.f32 0.0, %v4871
        %v4873 = vpop.f32.mrb[0].mxu0
        %4874 = vmatprep.mubr.bf16.mxu0 %v3381
        %4875 = vmatmul.mubr.bf16.gmra.mrb[0].mxu0 %v3170
        %v4876 = vpop.f32.mrb[0].mxu0
        %v4877 = vadd.f32 0.0, %v4876
        %v4878 = vpop.f32.mrb[0].mxu0
        %v4879 = vpop.f32.mrb[0].mxu0
        %v4880 = vadd.f32 0.0, %v4879
        %v4881 = vpop.f32.mrb[0].mxu0
        %4882 = vmatprep.mubr.bf16.mxu0 %v3393
        %4883 = vmatmul.mubr.bf16.gmra.mrb[0].mxu0 %v3171
        %v4884 = vpop.f32.mrb[0].mxu0
        %v4885 = vadd.f32 0.0, %v4884
        %v4886 = vpop.f32.mrb[0].mxu0
        %v4887 = vpop.f32.mrb[0].mxu0
        %v4888 = vadd.f32 0.0, %v4887
        %v4889 = vpop.f32.mrb[0].mxu0
        %4890 = vmatprep.mubr.bf16.mxu0 %v3405
        %4891 = vmatmul.mubr.bf16.gmra.mrb[0].mxu0 %v3172
        %v4892 = vpop.f32.mrb[0].mxu0
        %v4893 = vadd.f32 0.0, %v4892
        %v4894 = vpop.f32.mrb[0].mxu0
        %v4895 = vpop.f32.mrb[0].mxu0
        %v4896 = vadd.f32 0.0, %v4895
        %v4897 = vpop.f32.mrb[0].mxu0
        %4898 = vmatprep.mubr.bf16.mxu0 %v3417
        %4899 = vmatmul.mubr.bf16.gmra.mrb[0].mxu0 %v3173
        %v4900 = vpop.f32.mrb[0].mxu0
        %v4901 = vadd.f32 0.0, %v4900
        %v4902 = vpop.f32.mrb[0].mxu0
        %v4903 = vpop.f32.mrb[0].mxu0
        %v4904 = vadd.f32 0.0, %v4903
        %v4905 = vpop.f32.mrb[0].mxu0
        %4906 = vmatprep.mubr.bf16.mxu0 %v3429
        %4907 = vmatmul.mubr.bf16.gmra.mrb[0].mxu0 %v3174
        %v4908 = vpop.f32.mrb[0].mxu0
        %v4909 = vadd.f32 0.0, %v4908
        %v4910 = vpop.f32.mrb[0].mxu0
        %v4911 = vpop.f32.mrb[0].mxu0
        %v4912 = vadd.f32 0.0, %v4911
        %v4913 = vpop.f32.mrb[0].mxu0
        %4914 = vmatprep.mubr.bf16.mxu0 %v3441
        %4915 = vmatmul.mubr.bf16.gmra.mrb[0].mxu0 %v3175
        %v4916 = vpop.f32.mrb[0].mxu0
        %v4917 = vadd.f32 0.0, %v4916
        %v4918 = vpop.f32.mrb[0].mxu0
        %v4919 = vpop.f32.mrb[0].mxu0
        %v4920 = vadd.f32 0.0, %v4919
        %v4921 = vpop.f32.mrb[0].mxu0
        %4922 = vmatprep.mubr.bf16.mxu0 %v3453
        %4923 = vmatmul.mubr.bf16.gmra.mrb[0].mxu0 %v3176
        %v4924 = vpop.f32.mrb[0].mxu0
        %v4925 = vadd.f32 0.0, %v4924
        %v4926 = vpop.f32.mrb[0].mxu0
        %v4927 = vpop.f32.mrb[0].mxu0
        %v4928 = vadd.f32 0.0, %v4927
        %v4929 = vpop.f32.mrb[0].mxu0
        %4930 = vmatprep.mubr.bf16.mxu0 %v3465
        %4931 = vmatmul.mubr.bf16.gmra.mrb[0].mxu0 %v3177
        %v4932 = vpop.f32.mrb[0].mxu0
        %v4933 = vadd.f32 0.0, %v4932
        %v4934 = vpop.f32.mrb[0].mxu0
        %v4935 = vpop.f32.mrb[0].mxu0
        %v4936 = vadd.f32 0.0, %v4935
        %v4937 = vpop.f32.mrb[0].mxu0
        %4938 = vdwg.mxu0
        %4939 = vmatprep.subr.bf16.mxu0 0
        %4940 = vmatpush1.bf16.msra.mxu0 %v4746
        %4941 = vmatprep.subr.bf16.mxu0 0
        %4942 = vmatpush1.bf16.msra.mxu0 %v4747
        %4943 = vmatprep.subr.bf16.mxu0 0
        %4944 = vmatpush1.bf16.msra.mxu0 %v4748
        %4945 = vmatprep.subr.bf16.mxu0 0
        %4946 = vmatpush1.bf16.msra.mxu0 %v4749
        %4947 = vmatprep.subr.bf16.mxu0 0
        %4948 = vmatpush1.bf16.msra.mxu0 %v4750
        %4949 = vmatprep.subr.bf16.mxu0 0
        %4950 = vmatpush1.bf16.msra.mxu0 %v4751
        %4951 = vmatprep.subr.bf16.mxu0 0
        %4952 = vmatpush1.bf16.msra.mxu0 %v4752
        %4953 = vmatprep.subr.bf16.mxu0 0
        %4954 = vmatpush1.bf16.msra.mxu0 %v4753
        %4955 = vmatprep.subr.bf16.mxu0 0
        %4956 = vmatpush1.bf16.msra.mxu0 0
        %4957 = vmatprep.subr.bf16.mxu0 0
        %4958 = vmatpush1.bf16.msra.mxu0 0
        %4959 = vmatprep.subr.bf16.mxu0 0
        %4960 = vmatpush1.bf16.msra.mxu0 0
        %4961 = vmatprep.subr.bf16.mxu0 0
        %4962 = vmatpush1.bf16.msra.mxu0 0
        %4963 = vmatprep.subr.bf16.mxu0 0
        %4964 = vmatpush1.bf16.msra.mxu0 0
        %4965 = vmatprep.subr.bf16.mxu0 0
        %4966 = vmatpush1.bf16.msra.mxu0 0
        %4967 = vmatprep.subr.bf16.mxu0 0
        %4968 = vmatpush1.bf16.msra.mxu0 0
        %4969 = vmatprep.subr.bf16.mxu0 0
        %4970 = vmatpush1.bf16.msra.mxu0 0
        %4971 = vmatprep.mubr.bf16.mxu0 0
        %4972 = vmatmul.mubr.bf16.gmra.mrb[0].mxu0 %v3492
        %v4973 = vpop.f32.mrb[0].mxu0
        %v4974 = vadd.f32 %v4813, %v4973
        %v4975 = vpop.f32.mrb[0].mxu0
        %v4976 = vpop.f32.mrb[0].mxu0
        %v4977 = vadd.f32 %v4816, %v4976
        %v4978 = vpop.f32.mrb[0].mxu0
        %4979 = vmatprep.mubr.bf16.mxu0 0
        %4980 = vmatmul.mubr.bf16.gmra.mrb[0].mxu0 %v3495
        %v4981 = vpop.f32.mrb[0].mxu0
        %v4982 = vadd.f32 %v4821, %v4981
        %v4983 = vpop.f32.mrb[0].mxu0
        %v4984 = vpop.f32.mrb[0].mxu0
        %v4985 = vadd.f32 %v4824, %v4984
        %v4986 = vpop.f32.mrb[0].mxu0
        %4987 = vmatprep.mubr.bf16.mxu0 0
        %4988 = vmatmul.mubr.bf16.gmra.mrb[0].mxu0 %v3498
        %v4989 = vpop.f32.mrb[0].mxu0
        %v4990 = vadd.f32 %v4829, %v4989
        %v4991 = vpop.f32.mrb[0].mxu0
        %v4992 = vpop.f32.mrb[0].mxu0
        %v4993 = vadd.f32 %v4832, %v4992
        %v4994 = vpop.f32.mrb[0].mxu0
        %4995 = vmatprep.mubr.bf16.mxu0 0
        %4996 = vmatmul.mubr.bf16.gmra.mrb[0].mxu0 %v3501
        %v4997 = vpop.f32.mrb[0].mxu0
        %v4998 = vadd.f32 %v4837, %v4997
        %v4999 = vpop.f32.mrb[0].mxu0
        %v5000 = vpop.f32.mrb[0].mxu0
        %v5001 = vadd.f32 %v4840, %v5000
        %v5002 = vpop.f32.mrb[0].mxu0
        %5003 = vmatprep.mubr.bf16.mxu0 0
        %5004 = vmatmul.mubr.bf16.gmra.mrb[0].mxu0 %v3504
        %v5005 = vpop.f32.mrb[0].mxu0
        %v5006 = vadd.f32 %v4845, %v5005
        %v5007 = vpop.f32.mrb[0].mxu0
        %v5008 = vpop.f32.mrb[0].mxu0
        %v5009 = vadd.f32 %v4848, %v5008
        %v5010 = vpop.f32.mrb[0].mxu0
        %5011 = vmatprep.mubr.bf16.mxu0 0
        %5012 = vmatmul.mubr.bf16.gmra.mrb[0].mxu0 %v3507
        %v5013 = vpop.f32.mrb[0].mxu0
        %v5014 = vadd.f32 %v4853, %v5013
        %v5015 = vpop.f32.mrb[0].mxu0
        %v5016 = vpop.f32.mrb[0].mxu0
        %v5017 = vadd.f32 %v4856, %v5016
        %v5018 = vpop.f32.mrb[0].mxu0
        %5019 = vmatprep.mubr.bf16.mxu0 0
        %5020 = vmatmul.mubr.bf16.gmra.mrb[0].mxu0 %v3510
        %v5021 = vpop.f32.mrb[0].mxu0
        %v5022 = vadd.f32 %v4861, %v5021
        %v5023 = vpop.f32.mrb[0].mxu0
        %v5024 = vpop.f32.mrb[0].mxu0
        %v5025 = vadd.f32 %v4864, %v5024
        %v5026 = vpop.f32.mrb[0].mxu0
        %5027 = vmatprep.mubr.bf16.mxu0 0
        %5028 = vmatmul.mubr.bf16.gmra.mrb[0].mxu0 %v3513
        %v5029 = vpop.f32.mrb[0].mxu0
        %v5030 = vadd.f32 %v4869, %v5029
        %v5031 = vpop.f32.mrb[0].mxu0
        %v5032 = vpop.f32.mrb[0].mxu0
        %v5033 = vadd.f32 %v4872, %v5032
        %v5034 = vpop.f32.mrb[0].mxu0
        %5035 = vmatprep.mubr.bf16.mxu0 0
        %5036 = vmatmul.mubr.bf16.gmra.mrb[0].mxu0 %v3516
        %v5037 = vpop.f32.mrb[0].mxu0
        %v5038 = vadd.f32 %v4877, %v5037
        %v5039 = vpop.f32.mrb[0].mxu0
        %v5040 = vpop.f32.mrb[0].mxu0
        %v5041 = vadd.f32 %v4880, %v5040
        %v5042 = vpop.f32.mrb[0].mxu0
        %5043 = vmatprep.mubr.bf16.mxu0 0
        %5044 = vmatmul.mubr.bf16.gmra.mrb[0].mxu0 %v3519
        %v5045 = vpop.f32.mrb[0].mxu0
        %v5046 = vadd.f32 %v4885, %v5045
        %v5047 = vpop.f32.mrb[0].mxu0
        %v5048 = vpop.f32.mrb[0].mxu0
        %v5049 = vadd.f32 %v4888, %v5048
        %v5050 = vpop.f32.mrb[0].mxu0
        %5051 = vmatprep.mubr.bf16.mxu0 0
        %5052 = vmatmul.mubr.bf16.gmra.mrb[0].mxu0 %v3522
        %v5053 = vpop.f32.mrb[0].mxu0
        %v5054 = vadd.f32 %v4893, %v5053
        %v5055 = vpop.f32.mrb[0].mxu0
        %v5056 = vpop.f32.mrb[0].mxu0
        %v5057 = vadd.f32 %v4896, %v5056
        %v5058 = vpop.f32.mrb[0].mxu0
        %5059 = vmatprep.mubr.bf16.mxu0 0
        %5060 = vmatmul.mubr.bf16.gmra.mrb[0].mxu0 %v3525
        %v5061 = vpop.f32.mrb[0].mxu0
        %v5062 = vadd.f32 %v4901, %v5061
        %v5063 = vpop.f32.mrb[0].mxu0
        %v5064 = vpop.f32.mrb[0].mxu0
        %v5065 = vadd.f32 %v4904, %v5064
        %v5066 = vpop.f32.mrb[0].mxu0
        %5067 = vmatprep.mubr.bf16.mxu0 0
        %5068 = vmatmul.mubr.bf16.gmra.mrb[0].mxu0 %v3528
        %v5069 = vpop.f32.mrb[0].mxu0
        %v5070 = vadd.f32 %v4909, %v5069
        %v5071 = vpop.f32.mrb[0].mxu0
        %v5072 = vpop.f32.mrb[0].mxu0
        %v5073 = vadd.f32 %v4912, %v5072
        %v5074 = vpop.f32.mrb[0].mxu0
        %5075 = vmatprep.mubr.bf16.mxu0 0
        %5076 = vmatmul.mubr.bf16.gmra.mrb[0].mxu0 %v3531
        %v5077 = vpop.f32.mrb[0].mxu0
        %v5078 = vadd.f32 %v4917, %v5077
        %v5079 = vpop.f32.mrb[0].mxu0
        %v5080 = vpop.f32.mrb[0].mxu0
        %v5081 = vadd.f32 %v4920, %v5080
        %v5082 = vpop.f32.mrb[0].mxu0
        %5083 = vmatprep.mubr.bf16.mxu0 0
        %5084 = vmatmul.mubr.bf16.gmra.mrb[0].mxu0 %v3534
        %v5085 = vpop.f32.mrb[0].mxu0
        %v5086 = vadd.f32 %v4925, %v5085
        %v5087 = vpop.f32.mrb[0].mxu0
        %v5088 = vpop.f32.mrb[0].mxu0
        %v5089 = vadd.f32 %v4928, %v5088
        %v5090 = vpop.f32.mrb[0].mxu0
        %5091 = vmatprep.mubr.bf16.mxu0 0
        %5092 = vmatmul.mubr.bf16.gmra.mrb[0].mxu0 %v3537
        %v5093 = vpop.f32.mrb[0].mxu0
        %v5094 = vadd.f32 %v4933, %v5093
        %v5095 = vpop.f32.mrb[0].mxu0
        %v5096 = vpop.f32.mrb[0].mxu0
        %v5097 = vadd.f32 %v4936, %v5096
        %v5098 = vpop.f32.mrb[0].mxu0
        %5099 = vdwg.mxu0
        %v5100 = vadd.f32 %v4459, %v4974
        %v5101 = vadd.f32 %v4462, %v4977
        %v5102 = vadd.f32 %v4467, %v4982
        %v5103 = vadd.f32 %v4470, %v4985
        %v5104 = vadd.f32 %v4475, %v4990
        %v5105 = vadd.f32 %v4478, %v4993
        %v5106 = vadd.f32 %v4483, %v4998
        %v5107 = vadd.f32 %v4486, %v5001
        %v5108 = vadd.f32 %v4491, %v5006
        %v5109 = vadd.f32 %v4494, %v5009
        %v5110 = vadd.f32 %v4499, %v5014
        %v5111 = vadd.f32 %v4502, %v5017
        %v5112 = vadd.f32 %v4507, %v5022
        %v5113 = vadd.f32 %v4510, %v5025
        %v5114 = vadd.f32 %v4515, %v5030
        %v5115 = vadd.f32 %v4518, %v5033
        %v5116 = vadd.f32 %v4523, %v5038
        %v5117 = vadd.f32 %v4526, %v5041
        %v5118 = vadd.f32 %v4531, %v5046
        %v5119 = vadd.f32 %v4534, %v5049
        %v5120 = vadd.f32 %v4539, %v5054
        %v5121 = vadd.f32 %v4542, %v5057
        %v5122 = vadd.f32 %v4547, %v5062
        %v5123 = vadd.f32 %v4550, %v5065
        %v5124 = vadd.f32 %v4555, %v5070
        %v5125 = vadd.f32 %v4558, %v5073
        %v5126 = vadd.f32 %v4563, %v5078
        %v5127 = vadd.f32 %v4566, %v5081
        %v5128 = vadd.f32 %v4571, %v5086
        %v5129 = vadd.f32 %v4574, %v5089
        %v5130 = vadd.f32 %v4579, %v5094
        %v5131 = vadd.f32 %v4582, %v5097
        %v5132 = vld [vmem:[%s3 + $0x1] sm:$0x1]
        %v5133 = vlaneseq
        %v5134 = vshrl.u32 %v5133, 7
        %v5135 = vsub.s32 0, %v5134
        %v5136 = vrot.slane %v5132, %v5135
        %v5137 = vadd.f32 %v5100, %v5136
        %v5138 = vadd.f32 %v5101, %v5136
        %v5139 = vadd.f32 %v5102, %v5136
        %v5140 = vadd.f32 %v5103, %v5136
        %v5141 = vadd.f32 %v5104, %v5136
        %v5142 = vadd.f32 %v5105, %v5136
        %v5143 = vadd.f32 %v5106, %v5136
        %v5144 = vadd.f32 %v5107, %v5136
        %v5145 = vadd.f32 %v5108, %v5136
        %v5146 = vadd.f32 %v5109, %v5136
        %v5147 = vadd.f32 %v5110, %v5136
        %v5148 = vadd.f32 %v5111, %v5136
        %v5149 = vadd.f32 %v5112, %v5136
        %v5150 = vadd.f32 %v5113, %v5136
        %v5151 = vadd.f32 %v5114, %v5136
        %v5152 = vadd.f32 %v5115, %v5136
        %v5153 = vadd.f32 %v5116, %v5136
        %v5154 = vadd.f32 %v5117, %v5136
        %v5155 = vadd.f32 %v5118, %v5136
        %v5156 = vadd.f32 %v5119, %v5136
        %v5157 = vadd.f32 %v5120, %v5136
        %v5158 = vadd.f32 %v5121, %v5136
        %v5159 = vadd.f32 %v5122, %v5136
        %v5160 = vadd.f32 %v5123, %v5136
        %v5161 = vadd.f32 %v5124, %v5136
        %v5162 = vadd.f32 %v5125, %v5136
        %v5163 = vadd.f32 %v5126, %v5136
        %v5164 = vadd.f32 %v5127, %v5136
        %v5165 = vadd.f32 %v5128, %v5136
        %v5166 = vadd.f32 %v5129, %v5136
        %v5167 = vadd.f32 %v5130, %v5136
        %v5168 = vadd.f32 %v5131, %v5136
        %v5169 = vunpack.c.l.bf16 %v572
        %v5170 = vunpack.c.h.bf16 %v572
        %v5171 = vunpack.c.l.bf16 %v584
        %v5172 = vunpack.c.h.bf16 %v584
        %v5173 = vunpack.c.l.bf16 %v596
        %v5174 = vunpack.c.h.bf16 %v596
        %v5175 = vunpack.c.l.bf16 %v608
        %v5176 = vunpack.c.h.bf16 %v608
        %v5177 = vunpack.c.l.bf16 %v620
        %v5178 = vunpack.c.h.bf16 %v620
        %v5179 = vunpack.c.l.bf16 %v632
        %v5180 = vunpack.c.h.bf16 %v632
        %v5181 = vunpack.c.l.bf16 %v644
        %v5182 = vunpack.c.h.bf16 %v644
        %v5183 = vunpack.c.l.bf16 %v656
        %v5184 = vunpack.c.h.bf16 %v656
        %v5185 = vunpack.c.l.bf16 %v668
        %v5186 = vunpack.c.h.bf16 %v668
        %v5187 = vunpack.c.l.bf16 %v680
        %v5188 = vunpack.c.h.bf16 %v680
        %v5189 = vunpack.c.l.bf16 %v692
        %v5190 = vunpack.c.h.bf16 %v692
        %v5191 = vunpack.c.l.bf16 %v704
        %v5192 = vunpack.c.h.bf16 %v704
        %v5193 = vunpack.c.l.bf16 %v716
        %v5194 = vunpack.c.h.bf16 %v716
        %v5195 = vunpack.c.l.bf16 %v728
        %v5196 = vunpack.c.h.bf16 %v728
        %v5197 = vunpack.c.l.bf16 %v740
        %v5198 = vunpack.c.h.bf16 %v740
        %v5199 = vunpack.c.l.bf16 %v752
        %v5200 = vunpack.c.h.bf16 %v752
        %v5201 = vadd.f32 %v5137, %v5169
        %v5202 = vadd.f32 %v5138, %v5170
        %v5203 = vadd.f32 %v5139, %v5171
        %v5204 = vadd.f32 %v5140, %v5172
        %v5205 = vadd.f32 %v5141, %v5173
        %v5206 = vadd.f32 %v5142, %v5174
        %v5207 = vadd.f32 %v5143, %v5175
        %v5208 = vadd.f32 %v5144, %v5176
        %v5209 = vadd.f32 %v5145, %v5177
        %v5210 = vadd.f32 %v5146, %v5178
        %v5211 = vadd.f32 %v5147, %v5179
        %v5212 = vadd.f32 %v5148, %v5180
        %v5213 = vadd.f32 %v5149, %v5181
        %v5214 = vadd.f32 %v5150, %v5182
        %v5215 = vadd.f32 %v5151, %v5183
        %v5216 = vadd.f32 %v5152, %v5184
        %v5217 = vadd.f32 %v5153, %v5185
        %v5218 = vadd.f32 %v5154, %v5186
        %v5219 = vadd.f32 %v5155, %v5187
        %v5220 = vadd.f32 %v5156, %v5188
        %v5221 = vadd.f32 %v5157, %v5189
        %v5222 = vadd.f32 %v5158, %v5190
        %v5223 = vadd.f32 %v5159, %v5191
        %v5224 = vadd.f32 %v5160, %v5192
        %v5225 = vadd.f32 %v5161, %v5193
        %v5226 = vadd.f32 %v5162, %v5194
        %v5227 = vadd.f32 %v5163, %v5195
        %v5228 = vadd.f32 %v5164, %v5196
        %v5229 = vadd.f32 %v5165, %v5197
        %v5230 = vadd.f32 %v5166, %v5198
        %v5231 = vadd.f32 %v5167, %v5199
        %v5232 = vadd.f32 %v5168, %v5200
        %v5233 = vmax.f32 %v5201, 0.0
        %v5234 = vmax.f32 %v5202, 0.0
        %v5235 = vmax.f32 %v5203, 0.0
        %v5236 = vmax.f32 %v5204, 0.0
        %v5237 = vmax.f32 %v5205, 0.0
        %v5238 = vmax.f32 %v5206, 0.0
        %v5239 = vmax.f32 %v5207, 0.0
        %v5240 = vmax.f32 %v5208, 0.0
        %v5241 = vmax.f32 %v5209, 0.0
        %v5242 = vmax.f32 %v5210, 0.0
        %v5243 = vmax.f32 %v5211, 0.0
        %v5244 = vmax.f32 %v5212, 0.0
        %v5245 = vmax.f32 %v5213, 0.0
        %v5246 = vmax.f32 %v5214, 0.0
        %v5247 = vmax.f32 %v5215, 0.0
        %v5248 = vmax.f32 %v5216, 0.0
        %v5249 = vmax.f32 %v5217, 0.0
        %v5250 = vmax.f32 %v5218, 0.0
        %v5251 = vmax.f32 %v5219, 0.0
        %v5252 = vmax.f32 %v5220, 0.0
        %v5253 = vmax.f32 %v5221, 0.0
        %v5254 = vmax.f32 %v5222, 0.0
        %v5255 = vmax.f32 %v5223, 0.0
        %v5256 = vmax.f32 %v5224, 0.0
        %v5257 = vmax.f32 %v5225, 0.0
        %v5258 = vmax.f32 %v5226, 0.0
        %v5259 = vmax.f32 %v5227, 0.0
        %v5260 = vmax.f32 %v5228, 0.0
        %v5261 = vmax.f32 %v5229, 0.0
        %v5262 = vmax.f32 %v5230, 0.0
        %v5263 = vmax.f32 %v5231, 0.0
        %v5264 = vmax.f32 %v5232, 0.0
        %5265 = vst [vmem:[%s205] sm:$0xff] %v5233
        %5266 = vst [vmem:[%s205 + $0x8] sm:$0xff] %v5234
        %5267 = vst [vmem:[%s205 + $0x10] sm:$0xff] %v5235
        %5268 = vst [vmem:[%s205 + $0x18] sm:$0xff] %v5236
        %5269 = vst [vmem:[%s205 + $0x20] sm:$0xff] %v5237
        %5270 = vst [vmem:[%s205 + $0x28] sm:$0xff] %v5238
        %5271 = vst [vmem:[%s205 + $0x30] sm:$0xff] %v5239
        %5272 = vst [vmem:[%s205 + $0x38] sm:$0xff] %v5240
        %5273 = vst [vmem:[%s205 + $0x40] sm:$0xff] %v5241
        %5274 = vst [vmem:[%s205 + $0x48] sm:$0xff] %v5242
        %5275 = vst [vmem:[%s205 + $0x50] sm:$0xff] %v5243
        %5276 = vst [vmem:[%s205 + $0x58] sm:$0xff] %v5244
        %5277 = vst [vmem:[%s205 + $0x60] sm:$0xff] %v5245
        %5278 = vst [vmem:[%s205 + $0x68] sm:$0xff] %v5246
        %5279 = vst [vmem:[%s205 + $0x70] sm:$0xff] %v5247
        %5280 = vst [vmem:[%s205 + $0x78] sm:$0xff] %v5248
        %5281 = vst [vmem:[%s205 + $0x80] sm:$0xff] %v5249
        %5282 = vst [vmem:[%s205 + $0x88] sm:$0xff] %v5250
        %5283 = vst [vmem:[%s205 + $0x90] sm:$0xff] %v5251
        %5284 = vst [vmem:[%s205 + $0x98] sm:$0xff] %v5252
        %5285 = vst [vmem:[%s205 + $0xa0] sm:$0xff] %v5253
        %5286 = vst [vmem:[%s205 + $0xa8] sm:$0xff] %v5254
        %5287 = vst [vmem:[%s205 + $0xb0] sm:$0xff] %v5255
        %5288 = vst [vmem:[%s205 + $0xb8] sm:$0xff] %v5256
        %5289 = vst [vmem:[%s205 + $0xc0] sm:$0xff] %v5257
        %5290 = vst [vmem:[%s205 + $0xc8] sm:$0xff] %v5258
        %5291 = vst [vmem:[%s205 + $0xd0] sm:$0xff] %v5259
        %5292 = vst [vmem:[%s205 + $0xd8] sm:$0xff] %v5260
        %5293 = vst [vmem:[%s205 + $0xe0] sm:$0xff] %v5261
        %5294 = vst [vmem:[%s205 + $0xe8] sm:$0xff] %v5262
        %5295 = vst [vmem:[%s205 + $0xf0] sm:$0xff] %v5263
        %5296 = vst [vmem:[%s205 + $0xf8] sm:$0xff] %v5264
        %s5297 = sand.u32 %s116, 1
        %s5298 = scalar_lea.sflag [#allocation5], %s5297
        %s5299 = sand.u32 %s116, 1
        %s5300 = smul.addr %s5299, 256
        %s5301 = scalar_lea.vmem [#allocation6], %s5300
        // Predicated region
        $region41: #{tpu_custom_call.1} parent=35 // pred_check
          %p5302 = pneg %p126
        $region42: #{tpu_custom_call.1} parent=35 // pred_check_branch
          %5304 = sbr.rel (%p5302) target = $region44
        $region43: #{tpu_custom_call.1} parent=35 // pred_region
          %s5306 = ssub.s32 4096, 4096
          %5307 = vsyncadd %s5298, %s5306
          %s5308 = smul.addr %s19, 32
          %s5309 = smul.addr %s5308, 128
          %s5310 = scalar_lea.hbm %s4, %s5309
          %s5311 = sshll.u32 %s5301, 4
          %s5312 = int_to_ptr.vmem [resolvable:$true] %s5311
          %5317 = dma.vmem_to_hbm [thread:$0]  %s5312, 4096, %s5310, %s5298, 128, 128, 8
        $region44: #{tpu_custom_call.1} parent=35 // pred_fallthru
          _
      $region36: #{tpu_custom_call.1} parent=5 // pred_fallthru
        _
      %p5318 = scmp.le.s32.totalorder 2, %s14
      // Predicated region
      $region45: #{tpu_custom_call.1} parent=5 // pred_check
        %p5319 = pneg %p5318
      $region46: #{tpu_custom_call.1} parent=5 // pred_check_branch
        %5321 = sbr.rel (%p5319) target = $region48
      $region47: #{tpu_custom_call.1} parent=5 // pred_region
        %s5322 = ssub.s32 %s14, 2
        // Predicated region
        $region49: #{tpu_custom_call.1} parent=47 // pred_check
          %p5323 = pneg %p132
        $region50: #{tpu_custom_call.1} parent=47 // pred_check_branch
          %5325 = sbr.rel (%p5323) target = $region52
        $region51: #{tpu_custom_call.1} parent=47 // pred_region
          %s5326 = sand.u32 %s117, 1
          %s5327 = scalar_lea.sflag [#allocation5], %s5326
          %s5328 = sand.u32 %s117, 1
          %s5329 = smul.addr %s5328, 256
          %s5330 = scalar_lea.vmem [#allocation6], %s5329
          %5331 = dma.done %s5327, 4096
        $region52: #{tpu_custom_call.1} parent=47 // pred_fallthru
          _
      $region48: #{tpu_custom_call.1} parent=5 // pred_fallthru
        _
    $region6: #{tpu_custom_call.1} parent=1 // loop_footer
      %s18 = sadd.s32 1, %s14
    $region7: #{tpu_custom_call.1} parent=1 // loop_footer_branch
      %13 = sbr.rel target = $region3
    $region8: #{tpu_custom_call.1} parent=1 // loop_exit
      _
    %5332 = vsyncpa [#allocation4], 1
    %s5333 = scalar_lea.sflag [#allocation4], 1
    %5334 = vsyncpa %s5333, 1
    %5335 = vsyncpa [#allocation5], 1
    %s5336 = scalar_lea.sflag [#allocation5], 1
    %5337 = vsyncpa %s5336, 1

</llo_original>
